<compile_context>
chip_gen: v5e
topology: v5e:2x2
jax: 0.10.0
libtpu: 0.0.40
codegen_flags: <defaults>
</compile_context>

<pallas_src>
import jax
import jax.numpy as jnp
from jax import lax
from jax.experimental import pallas as pl
from jax.experimental.pallas import tpu as pltpu

BN_EPS = 1e-5
_LANES = 128


def _round_up(x, m):
    return (x + m - 1) // m * m


def _pick_row_tile(ho, wo, target_rows=512):
    """Largest TH with Ho % TH == 0, (TH*Wo) % 8 == 0 and TH*Wo <= target_rows."""
    legal = [th for th in range(1, ho + 1) if ho % th == 0 and (th * wo) % 8 == 0]
    assert legal, f"no legal row tile for Ho={ho}, Wo={wo}"
    fitting = [th for th in legal if th * wo <= target_rows]
    return max(fitting) if fitting else min(legal)


def _conv_stats_pass(x_pad, w_taps, *, n, ho, wo, th, kh, kw, cin, cpad):
    """Pass 1: implicit-GEMM conv -> y (M, Cpad) f32 plus per-tile (sum, sumsq) stats."""
    hp, wp = x_pad.shape[1], x_pad.shape[2]
    ht = ho // th
    rows = th * wo
    m = n * ho * wo
    g = n * ht
    itemsize = jnp.dtype(x_pad.dtype).itemsize

    def kernel(x_ref, w_ref, y_ref, stats_ref):
        r0 = pl.program_id(1) * th
        # Unrolled tap loop: accumulate the conv tile directly in the VMEM output block.
        for t in range(kh * kw):
            i, j = divmod(t, kw)
            lhs = x_ref[0, pl.ds(r0 + i, th), pl.ds(j, wo), :]      # (TH, Wo, Cin)
            lhs = lhs.reshape(rows, cin)
            contrib = jnp.dot(lhs, w_ref[t], preferred_element_type=jnp.float32)
            if t == 0:
                y_ref[...] = contrib
            else:
                y_ref[...] += contrib
        # Per-tile BN partial statistics (global reduction finished on the host).
        y = y_ref[...]
        stats_ref[0, 0:1, :] = jnp.sum(y, axis=0, keepdims=True)
        stats_ref[0, 1:2, :] = jnp.sum(y * y, axis=0, keepdims=True)

    # Explicit VMEM budget from the tile math (double-buffered blocks + slack).
    x_blk = hp * _round_up(wp, 8) * _round_up(cin, _LANES) * itemsize
    w_blk = kh * kw * _round_up(cin, 8) * cpad * itemsize
    y_blk = rows * cpad * 4
    est = 2 * (x_blk + w_blk + y_blk + 8 * cpad * 4) + 2 * y_blk
    vmem_limit = int(min(max(est + (8 << 20), 16 << 20), 64 << 20))

    return pl.pallas_call(
        kernel,
        out_shape=(
            jax.ShapeDtypeStruct((m, cpad), jnp.float32),
            jax.ShapeDtypeStruct((g, 2, cpad), jnp.float32),
        ),
        grid=(n, ht),
        in_specs=[
            # Whole padded image per batch element (re-fetched only when b changes).
            pl.BlockSpec((1, hp, wp, cin), lambda b, h: (b, 0, 0, 0)),
            # Weights resident across the whole grid.
            pl.BlockSpec((kh * kw, cin, cpad), lambda b, h: (0, 0, 0)),
        ],
        out_specs=(
            pl.BlockSpec((rows, cpad), lambda b, h: (b * ht + h, 0)),
            pl.BlockSpec((1, 2, cpad), lambda b, h: (b * ht + h, 0, 0)),
        ),
        compiler_params=pltpu.CompilerParams(
            dimension_semantics=("parallel", "parallel"),
            vmem_limit_bytes=vmem_limit),
    )(x_pad, w_taps)


def _bn_apply_pass(y_flat, scale, shift, *, relu):
    """Pass 2: out = y * scale + shift (+ ReLU), over lane-dense (TM, Cpad) tiles."""
    m, cpad = y_flat.shape
    tm = min(1024, m)

    def kernel(y_ref, s_ref, b_ref, o_ref):
        v = y_ref[...] * s_ref[...] + b_ref[...]
        if relu:
            v = jnp.maximum(v, 0.0)
        o_ref[...] = v

    vmem_limit = int(min(max(6 * tm * cpad * 4 + (4 << 20), 16 << 20), 64 << 20))
    return pl.pallas_call(
        kernel,
        out_shape=jax.ShapeDtypeStruct((m, cpad), jnp.float32),
        grid=(pl.cdiv(m, tm),),
        in_specs=[
            pl.BlockSpec((tm, cpad), lambda i: (i, 0)),
            pl.BlockSpec((1, cpad), lambda i: (0, 0)),
            pl.BlockSpec((1, cpad), lambda i: (0, 0)),
        ],
        out_specs=pl.BlockSpec((tm, cpad), lambda i: (i, 0)),
        compiler_params=pltpu.CompilerParams(
            dimension_semantics=("parallel",),
            vmem_limit_bytes=vmem_limit),
    )(y_flat, scale, shift)


def conv_bn_nhwc(x_nhwc, conv_w_oihw, bn_gamma, bn_beta, *, stride=1, padding=0,
                 relu=False, conv_bias=None, compute_dtype=jnp.bfloat16):
    """Conv2d(stride=1) + training-mode BatchNorm2d (+ optional ReLU); NHWC in / NHWC out."""
    # TODO(synk): stride>1 backbone convs, ConvTranspose2d (deconv_bn), MaxPool2d, the
    # Conv1d range head and Sigmoid of the full LaneDect graph are not lowered here.
    assert stride == 1, "Pallas conv_bn path covers the stride-1 LaneDect head convs."
    del conv_bias  # exactly cancelled by the BN mean subtraction (training-mode BN)

    n, h, w, cin = x_nhwc.shape
    cout, cin_w, kh, kw = conv_w_oihw.shape
    assert cin_w == cin
    ho = h + 2 * padding - kh + 1
    wo = w + 2 * padding - kw + 1
    cpad = _round_up(cout, _LANES)

    # NHWC activations, spatially pre-padded; weights as (tap, Cin, Cout_pad); bf16 operands.
    x_pad = jnp.pad(x_nhwc, ((0, 0), (padding, padding), (padding, padding), (0, 0)))
    x_pad = x_pad.astype(compute_dtype)
    w_taps = jnp.transpose(conv_w_oihw, (2, 3, 1, 0)).reshape(kh * kw, cin, cout)
    w_taps = jnp.pad(w_taps, ((0, 0), (0, 0), (0, cpad - cout))).astype(compute_dtype)

    th = _pick_row_tile(ho, wo)
    y_flat, stats = _conv_stats_pass(x_pad, w_taps, n=n, ho=ho, wo=wo, th=th,
                                     kh=kh, kw=kw, cin=cin, cpad=cpad)

    # Finish global BN statistics ((Cpad,)-sized math) and fold the affine transform.
    count = jnp.float32(n * ho * wo)
    mean = jnp.sum(stats[:, 0, :], axis=0) / count
    var = jnp.maximum(jnp.sum(stats[:, 1, :], axis=0) / count - mean * mean, 0.0)
    gamma_p = jnp.pad(bn_gamma.astype(jnp.float32), (0, cpad - cout))
    beta_p = jnp.pad(bn_beta.astype(jnp.float32), (0, cpad - cout))
    scale = gamma_p * lax.rsqrt(var + BN_EPS)
    shift = beta_p - mean * scale

    out_flat = _bn_apply_pass(y_flat, scale.reshape(1, cpad), shift.reshape(1, cpad),
                              relu=relu)
    return out_flat[:, :cout].reshape(n, ho, wo, cout)


def reference_conv_bn_nhwc(x_nhwc, conv_w_oihw, conv_b, bn_gamma, bn_beta, *,
                           stride, padding, relu, compute_dtype=jnp.bfloat16):
    """Pure-JAX reference (lax conv + training-mode BN [+ReLU]), same operand precision."""
    w_hwio = jnp.transpose(conv_w_oihw, (2, 3, 1, 0))
    y = lax.conv_general_dilated(
        x_nhwc.astype(compute_dtype), w_hwio.astype(compute_dtype),
        window_strides=(stride, stride),
        padding=[(padding, padding), (padding, padding)],
        dimension_numbers=("NHWC", "HWIO", "NHWC"),
        preferred_element_type=jnp.float32)
    y = y + conv_b.reshape(1, 1, 1, -1)
    mean = jnp.mean(y, axis=(0, 1, 2), keepdims=True)
    var = jnp.mean((y - mean) ** 2, axis=(0, 1, 2), keepdims=True)
    y = (y - mean) * lax.rsqrt(var + BN_EPS)
    y = y * bn_gamma.reshape(1, 1, 1, -1) + bn_beta.reshape(1, 1, 1, -1)
    return jnp.maximum(y, 0.0) if relu else y


if __name__ == "__main__":
    key = jax.random.PRNGKey(0)
    k1, k2, k3, k4, k5 = jax.random.split(key, 5)

    # Toy-scale shapes consistent with a LaneDect conv_bn(_relu) block.
    N, CIN, H, W = 2, 4, 16, 16
    COUT, KH, KW, PAD = 8, 3, 3, 1

    x_nchw = jax.random.normal(k1, (N, CIN, H, W), jnp.float32)   # PyTorch layout
    fan_in = CIN * KH * KW
    w1 = jax.random.uniform(k2, (COUT, CIN, KH, KW), jnp.float32,
                            -1.0 / fan_in ** 0.5, 1.0 / fan_in ** 0.5)
    b1 = jax.random.uniform(k3, (COUT,), jnp.float32,
                            -1.0 / fan_in ** 0.5, 1.0 / fan_in ** 0.5)
    g1 = jnp.ones((COUT,), jnp.float32)
    bt1 = jnp.zeros((COUT,), jnp.float32)

    # Single layout change at the model boundary; everything below stays NHWC.
    x_nhwc = jnp.transpose(x_nchw, (0, 2, 3, 1))

    # conv_bn: 3x3, stride 1, padding 1 (matches the previous kernel's scope).
    out1 = conv_bn_nhwc(x_nhwc, w1, g1, bt1, stride=1, padding=PAD,
                        relu=False, conv_bias=b1)
    out1 = jax.block_until_ready(out1)
    ref1 = reference_conv_bn_nhwc(x_nhwc, w1, b1, g1, bt1,
                                  stride=1, padding=PAD, relu=False)
    assert out1.shape == (N, H, W, COUT)
    err1 = float(jnp.max(jnp.abs(out1 - ref1)))
    assert jnp.allclose(out1, ref1, atol=1e-3, rtol=1e-3), err1

    # conv_bn_relu: 1x1, stride 1, padding 0 (FPN4x2 / FPN3x2 style), fused ReLU.
    COUT2 = 16
    w2 = jax.random.uniform(k4, (COUT2, COUT, 1, 1), jnp.float32,
                            -1.0 / COUT ** 0.5, 1.0 / COUT ** 0.5)
    b2 = jax.random.uniform(k5, (COUT2,), jnp.float32,
                            -1.0 / COUT ** 0.5, 1.0 / COUT ** 0.5)
    g2 = jnp.ones((COUT2,), jnp.float32)
    bt2 = jnp.zeros((COUT2,), jnp.float32)

    out2 = conv_bn_nhwc(out1, w2, g2, bt2, stride=1, padding=0,
                        relu=True, conv_bias=b2)
    out2 = jax.block_until_ready(out2)
    ref2 = reference_conv_bn_nhwc(out1, w2, b2, g2, bt2,
                                  stride=1, padding=0, relu=True)
    assert out2.shape == (N, H, W, COUT2)
    err2 = float(jnp.max(jnp.abs(out2 - ref2)))
    assert jnp.allclose(out2, ref2, atol=1e-3, rtol=1e-3), err2

    print("KERNEL_OK")
</pallas_src>

<mosaic_0001>
module attributes {stable_mosaic.version = 11 : i64} {
  func.func @kernel(%arg0: i32, %arg1: i32, %arg2: memref<1x18x18x4xbf16, #tpu.memory_space<vmem>>, %arg3: memref<9x4x128xbf16, #tpu.memory_space<vmem>>, %arg4: memref<256x128xf32, #tpu.memory_space<vmem>>, %arg5: memref<1x2x128xf32, #tpu.memory_space<vmem>>) attributes {dimension_semantics = [#tpu.dimension_semantics<parallel>, #tpu.dimension_semantics<parallel>], iteration_bounds = array<i64: 2, 1>, scalar_prefetch = 0 : i64, scratch_operands = 0 : i64, tpu.core_type = #tpu.core_type<tc>, window_params = [{transform_indices = @transform_0, window_bounds = array<i64: 1, 18, 18, 4>}, {pipeline_mode = #tpu.pipeline_mode<synchronous>, transform_indices = @transform_1, window_bounds = array<i64: 9, 4, 128>}, {transform_indices = @transform_2, window_bounds = array<i64: 256, 128>}, {transform_indices = @transform_3, window_bounds = array<i64: 1, 2, 128>}]} {
    %c16_i32 = arith.constant 16 : i32
    %0 = arith.muli %arg1, %c16_i32 : i32
    %c0_i32 = arith.constant 0 : i32
    %1 = arith.addi %0, %c0_i32 : i32
    %c0 = arith.constant 0 : index
    %2 = arith.index_cast %1 : i32 to index
    %c0_0 = arith.constant 0 : index
    %c0_1 = arith.constant 0 : index
    %3 = vector.load %arg2[%c0, %2, %c0_0, %c0_1] : memref<1x18x18x4xbf16, #tpu.memory_space<vmem>>, vector<1x16x16x4xbf16>
    %4 = vector.shape_cast %3 : vector<1x16x16x4xbf16> to vector<16x16x4xbf16>
    %5 = vector.shape_cast %4 : vector<16x16x4xbf16> to vector<256x4xbf16>
    %c0_2 = arith.constant 0 : index
    %c0_3 = arith.constant 0 : index
    %c0_4 = arith.constant 0 : index
    %6 = vector.load %arg3[%c0_2, %c0_3, %c0_4] : memref<9x4x128xbf16, #tpu.memory_space<vmem>>, vector<1x4x128xbf16>
    %7 = vector.shape_cast %6 : vector<1x4x128xbf16> to vector<4x128xbf16>
    %cst = arith.constant dense<0.000000e+00> : vector<256x128xf32>
    %8 = tpu.matmul %5, %7, %cst {dimension_numbers = #tpu.dot_dimension_numbers<[1], [0], [0], [1], [0, 0, 1, 1], [], []>} : vector<256x4xbf16>, vector<4x128xbf16>, vector<256x128xf32> -> vector<256x128xf32>
    %c0_5 = arith.constant 0 : index
    %c0_6 = arith.constant 0 : index
    %9 = vector.load %arg4[%c0_5, %c0_6] : memref<256x128xf32, #tpu.memory_space<vmem>>, vector<256x128xf32>
    tpu.vector_store %arg4[%c0_5, %c0_6], %8 {strides = array<i32>} : memref<256x128xf32, #tpu.memory_space<vmem>>, vector<256x128xf32>,
    %c0_i32_7 = arith.constant 0 : i32
    %10 = arith.addi %0, %c0_i32_7 : i32
    %c0_8 = arith.constant 0 : index
    %11 = arith.index_cast %10 : i32 to index
    %c1 = arith.constant 1 : index
    %c0_9 = arith.constant 0 : index
    %12 = vector.load %arg2[%c0_8, %11, %c1, %c0_9] : memref<1x18x18x4xbf16, #tpu.memory_space<vmem>>, vector<1x16x16x4xbf16>
    %13 = vector.shape_cast %12 : vector<1x16x16x4xbf16> to vector<16x16x4xbf16>
    %14 = vector.shape_cast %13 : vector<16x16x4xbf16> to vector<256x4xbf16>
    %c1_10 = arith.constant 1 : index
    %c0_11 = arith.constant 0 : index
    %c0_12 = arith.constant 0 : index
    %15 = vector.load %arg3[%c1_10, %c0_11, %c0_12] : memref<9x4x128xbf16, #tpu.memory_space<vmem>>, vector<1x4x128xbf16>
    %16 = vector.shape_cast %15 : vector<1x4x128xbf16> to vector<4x128xbf16>
    %cst_13 = arith.constant dense<0.000000e+00> : vector<256x128xf32>
    %17 = tpu.matmul %14, %16, %cst_13 {dimension_numbers = #tpu.dot_dimension_numbers<[1], [0], [0], [1], [0, 0, 1, 1], [], []>} : vector<256x4xbf16>, vector<4x128xbf16>, vector<256x128xf32> -> vector<256x128xf32>
    %c0_14 = arith.constant 0 : index
    %c0_15 = arith.constant 0 : index
    %18 = vector.load %arg4[%c0_14, %c0_15] : memref<256x128xf32, #tpu.memory_space<vmem>>, vector<256x128xf32>
    %19 = arith.addf %18, %17 : vector<256x128xf32>
    %c0_16 = arith.constant 0 : index
    %c0_17 = arith.constant 0 : index
    %20 = vector.load %arg4[%c0_16, %c0_17] : memref<256x128xf32, #tpu.memory_space<vmem>>, vector<256x128xf32>
    tpu.vector_store %arg4[%c0_16, %c0_17], %19 {strides = array<i32>} : memref<256x128xf32, #tpu.memory_space<vmem>>, vector<256x128xf32>,
    %c0_i32_18 = arith.constant 0 : i32
    %21 = arith.addi %0, %c0_i32_18 : i32
    %c0_19 = arith.constant 0 : index
    %22 = arith.index_cast %21 : i32 to index
    %c2 = arith.constant 2 : index
    %c0_20 = arith.constant 0 : index
    %23 = vector.load %arg2[%c0_19, %22, %c2, %c0_20] : memref<1x18x18x4xbf16, #tpu.memory_space<vmem>>, vector<1x16x16x4xbf16>
    %24 = vector.shape_cast %23 : vector<1x16x16x4xbf16> to vector<16x16x4xbf16>
    %25 = vector.shape_cast %24 : vector<16x16x4xbf16> to vector<256x4xbf16>
    %c2_21 = arith.constant 2 : index
    %c0_22 = arith.constant 0 : index
    %c0_23 = arith.constant 0 : index
    %26 = vector.load %arg3[%c2_21, %c0_22, %c0_23] : memref<9x4x128xbf16, #tpu.memory_space<vmem>>, vector<1x4x128xbf16>
    %27 = vector.shape_cast %26 : vector<1x4x128xbf16> to vector<4x128xbf16>
    %cst_24 = arith.constant dense<0.000000e+00> : vector<256x128xf32>
    %28 = tpu.matmul %25, %27, %cst_24 {dimension_numbers = #tpu.dot_dimension_numbers<[1], [0], [0], [1], [0, 0, 1, 1], [], []>} : vector<256x4xbf16>, vector<4x128xbf16>, vector<256x128xf32> -> vector<256x128xf32>
    %c0_25 = arith.constant 0 : index
    %c0_26 = arith.constant 0 : index
    %29 = vector.load %arg4[%c0_25, %c0_26] : memref<256x128xf32, #tpu.memory_space<vmem>>, vector<256x128xf32>
    %30 = arith.addf %29, %28 : vector<256x128xf32>
    %c0_27 = arith.constant 0 : index
    %c0_28 = arith.constant 0 : index
    %31 = vector.load %arg4[%c0_27, %c0_28] : memref<256x128xf32, #tpu.memory_space<vmem>>, vector<256x128xf32>
    tpu.vector_store %arg4[%c0_27, %c0_28], %30 {strides = array<i32>} : memref<256x128xf32, #tpu.memory_space<vmem>>, vector<256x128xf32>,
    %c1_i32 = arith.constant 1 : i32
    %32 = arith.addi %0, %c1_i32 : i32
    %c0_29 = arith.constant 0 : index
    %33 = arith.index_cast %32 : i32 to index
    %c0_30 = arith.constant 0 : index
    %c0_31 = arith.constant 0 : index
    %34 = vector.load %arg2[%c0_29, %33, %c0_30, %c0_31] : memref<1x18x18x4xbf16, #tpu.memory_space<vmem>>, vector<1x16x16x4xbf16>
    %35 = vector.shape_cast %34 : vector<1x16x16x4xbf16> to vector<16x16x4xbf16>
    %36 = vector.shape_cast %35 : vector<16x16x4xbf16> to vector<256x4xbf16>
    %c3 = arith.constant 3 : index
    %c0_32 = arith.constant 0 : index
    %c0_33 = arith.constant 0 : index
    %37 = vector.load %arg3[%c3, %c0_32, %c0_33] : memref<9x4x128xbf16, #tpu.memory_space<vmem>>, vector<1x4x128xbf16>
    %38 = vector.shape_cast %37 : vector<1x4x128xbf16> to vector<4x128xbf16>
    %cst_34 = arith.constant dense<0.000000e+00> : vector<256x128xf32>
    %39 = tpu.matmul %36, %38, %cst_34 {dimension_numbers = #tpu.dot_dimension_numbers<[1], [0], [0], [1], [0, 0, 1, 1], [], []>} : vector<256x4xbf16>, vector<4x128xbf16>, vector<256x128xf32> -> vector<256x128xf32>
    %c0_35 = arith.constant 0 : index
    %c0_36 = arith.constant 0 : index
    %40 = vector.load %arg4[%c0_35, %c0_36] : memref<256x128xf32, #tpu.memory_space<vmem>>, vector<256x128xf32>
    %41 = arith.addf %40, %39 : vector<256x128xf32>
    %c0_37 = arith.constant 0 : index
    %c0_38 = arith.constant 0 : index
    %42 = vector.load %arg4[%c0_37, %c0_38] : memref<256x128xf32, #tpu.memory_space<vmem>>, vector<256x128xf32>
    tpu.vector_store %arg4[%c0_37, %c0_38], %41 {strides = array<i32>} : memref<256x128xf32, #tpu.memory_space<vmem>>, vector<256x128xf32>,
    %c1_i32_39 = arith.constant 1 : i32
    %43 = arith.addi %0, %c1_i32_39 : i32
    %c0_40 = arith.constant 0 : index
    %44 = arith.index_cast %43 : i32 to index
    %c1_41 = arith.constant 1 : index
    %c0_42 = arith.constant 0 : index
    %45 = vector.load %arg2[%c0_40, %44, %c1_41, %c0_42] : memref<1x18x18x4xbf16, #tpu.memory_space<vmem>>, vector<1x16x16x4xbf16>
    %46 = vector.shape_cast %45 : vector<1x16x16x4xbf16> to vector<16x16x4xbf16>
    %47 = vector.shape_cast %46 : vector<16x16x4xbf16> to vector<256x4xbf16>
    %c4 = arith.constant 4 : index
    %c0_43 = arith.constant 0 : index
    %c0_44 = arith.constant 0 : index
    %48 = vector.load %arg3[%c4, %c0_43, %c0_44] : memref<9x4x128xbf16, #tpu.memory_space<vmem>>, vector<1x4x128xbf16>
    %49 = vector.shape_cast %48 : vector<1x4x128xbf16> to vector<4x128xbf16>
    %cst_45 = arith.constant dense<0.000000e+00> : vector<256x128xf32>
    %50 = tpu.matmul %47, %49, %cst_45 {dimension_numbers = #tpu.dot_dimension_numbers<[1], [0], [0], [1], [0, 0, 1, 1], [], []>} : vector<256x4xbf16>, vector<4x128xbf16>, vector<256x128xf32> -> vector<256x128xf32>
    %c0_46 = arith.constant 0 : index
    %c0_47 = arith.constant 0 : index
    %51 = vector.load %arg4[%c0_46, %c0_47] : memref<256x128xf32, #tpu.memory_space<vmem>>, vector<256x128xf32>
    %52 = arith.addf %51, %50 : vector<256x128xf32>
    %c0_48 = arith.constant 0 : index
    %c0_49 = arith.constant 0 : index
    %53 = vector.load %arg4[%c0_48, %c0_49] : memref<256x128xf32, #tpu.memory_space<vmem>>, vector<256x128xf32>
    tpu.vector_store %arg4[%c0_48, %c0_49], %52 {strides = array<i32>} : memref<256x128xf32, #tpu.memory_space<vmem>>, vector<256x128xf32>,
    %c1_i32_50 = arith.constant 1 : i32
    %54 = arith.addi %0, %c1_i32_50 : i32
    %c0_51 = arith.constant 0 : index
    %55 = arith.index_cast %54 : i32 to index
    %c2_52 = arith.constant 2 : index
    %c0_53 = arith.constant 0 : index
    %56 = vector.load %arg2[%c0_51, %55, %c2_52, %c0_53] : memref<1x18x18x4xbf16, #tpu.memory_space<vmem>>, vector<1x16x16x4xbf16>
    %57 = vector.shape_cast %56 : vector<1x16x16x4xbf16> to vector<16x16x4xbf16>
    %58 = vector.shape_cast %57 : vector<16x16x4xbf16> to vector<256x4xbf16>
    %c5 = arith.constant 5 : index
    %c0_54 = arith.constant 0 : index
    %c0_55 = arith.constant 0 : index
    %59 = vector.load %arg3[%c5, %c0_54, %c0_55] : memref<9x4x128xbf16, #tpu.memory_space<vmem>>, vector<1x4x128xbf16>
    %60 = vector.shape_cast %59 : vector<1x4x128xbf16> to vector<4x128xbf16>
    %cst_56 = arith.constant dense<0.000000e+00> : vector<256x128xf32>
    %61 = tpu.matmul %58, %60, %cst_56 {dimension_numbers = #tpu.dot_dimension_numbers<[1], [0], [0], [1], [0, 0, 1, 1], [], []>} : vector<256x4xbf16>, vector<4x128xbf16>, vector<256x128xf32> -> vector<256x128xf32>
    %c0_57 = arith.constant 0 : index
    %c0_58 = arith.constant 0 : index
    %62 = vector.load %arg4[%c0_57, %c0_58] : memref<256x128xf32, #tpu.memory_space<vmem>>, vector<256x128xf32>
    %63 = arith.addf %62, %61 : vector<256x128xf32>
    %c0_59 = arith.constant 0 : index
    %c0_60 = arith.constant 0 : index
    %64 = vector.load %arg4[%c0_59, %c0_60] : memref<256x128xf32, #tpu.memory_space<vmem>>, vector<256x128xf32>
    tpu.vector_store %arg4[%c0_59, %c0_60], %63 {strides = array<i32>} : memref<256x128xf32, #tpu.memory_space<vmem>>, vector<256x128xf32>,
    %c2_i32 = arith.constant 2 : i32
    %65 = arith.addi %0, %c2_i32 : i32
    %c0_61 = arith.constant 0 : index
    %66 = arith.index_cast %65 : i32 to index
    %c0_62 = arith.constant 0 : index
    %c0_63 = arith.constant 0 : index
    %67 = vector.load %arg2[%c0_61, %66, %c0_62, %c0_63] : memref<1x18x18x4xbf16, #tpu.memory_space<vmem>>, vector<1x16x16x4xbf16>
    %68 = vector.shape_cast %67 : vector<1x16x16x4xbf16> to vector<16x16x4xbf16>
    %69 = vector.shape_cast %68 : vector<16x16x4xbf16> to vector<256x4xbf16>
    %c6 = arith.constant 6 : index
    %c0_64 = arith.constant 0 : index
    %c0_65 = arith.constant 0 : index
    %70 = vector.load %arg3[%c6, %c0_64, %c0_65] : memref<9x4x128xbf16, #tpu.memory_space<vmem>>, vector<1x4x128xbf16>
    %71 = vector.shape_cast %70 : vector<1x4x128xbf16> to vector<4x128xbf16>
    %cst_66 = arith.constant dense<0.000000e+00> : vector<256x128xf32>
    %72 = tpu.matmul %69, %71, %cst_66 {dimension_numbers = #tpu.dot_dimension_numbers<[1], [0], [0], [1], [0, 0, 1, 1], [], []>} : vector<256x4xbf16>, vector<4x128xbf16>, vector<256x128xf32> -> vector<256x128xf32>
    %c0_67 = arith.constant 0 : index
    %c0_68 = arith.constant 0 : index
    %73 = vector.load %arg4[%c0_67, %c0_68] : memref<256x128xf32, #tpu.memory_space<vmem>>, vector<256x128xf32>
    %74 = arith.addf %73, %72 : vector<256x128xf32>
    %c0_69 = arith.constant 0 : index
    %c0_70 = arith.constant 0 : index
    %75 = vector.load %arg4[%c0_69, %c0_70] : memref<256x128xf32, #tpu.memory_space<vmem>>, vector<256x128xf32>
    tpu.vector_store %arg4[%c0_69, %c0_70], %74 {strides = array<i32>} : memref<256x128xf32, #tpu.memory_space<vmem>>, vector<256x128xf32>,
    %c2_i32_71 = arith.constant 2 : i32
    %76 = arith.addi %0, %c2_i32_71 : i32
    %c0_72 = arith.constant 0 : index
    %77 = arith.index_cast %76 : i32 to index
    %c1_73 = arith.constant 1 : index
    %c0_74 = arith.constant 0 : index
    %78 = vector.load %arg2[%c0_72, %77, %c1_73, %c0_74] : memref<1x18x18x4xbf16, #tpu.memory_space<vmem>>, vector<1x16x16x4xbf16>
    %79 = vector.shape_cast %78 : vector<1x16x16x4xbf16> to vector<16x16x4xbf16>
    %80 = vector.shape_cast %79 : vector<16x16x4xbf16> to vector<256x4xbf16>
    %c7 = arith.constant 7 : index
    %c0_75 = arith.constant 0 : index
    %c0_76 = arith.constant 0 : index
    %81 = vector.load %arg3[%c7, %c0_75, %c0_76] : memref<9x4x128xbf16, #tpu.memory_space<vmem>>, vector<1x4x128xbf16>
    %82 = vector.shape_cast %81 : vector<1x4x128xbf16> to vector<4x128xbf16>
    %cst_77 = arith.constant dense<0.000000e+00> : vector<256x128xf32>
    %83 = tpu.matmul %80, %82, %cst_77 {dimension_numbers = #tpu.dot_dimension_numbers<[1], [0], [0], [1], [0, 0, 1, 1], [], []>} : vector<256x4xbf16>, vector<4x128xbf16>, vector<256x128xf32> -> vector<256x128xf32>
    %c0_78 = arith.constant 0 : index
    %c0_79 = arith.constant 0 : index
    %84 = vector.load %arg4[%c0_78, %c0_79] : memref<256x128xf32, #tpu.memory_space<vmem>>, vector<256x128xf32>
    %85 = arith.addf %84, %83 : vector<256x128xf32>
    %c0_80 = arith.constant 0 : index
    %c0_81 = arith.constant 0 : index
    %86 = vector.load %arg4[%c0_80, %c0_81] : memref<256x128xf32, #tpu.memory_space<vmem>>, vector<256x128xf32>
    tpu.vector_store %arg4[%c0_80, %c0_81], %85 {strides = array<i32>} : memref<256x128xf32, #tpu.memory_space<vmem>>, vector<256x128xf32>,
    %c2_i32_82 = arith.constant 2 : i32
    %87 = arith.addi %0, %c2_i32_82 : i32
    %c0_83 = arith.constant 0 : index
    %88 = arith.index_cast %87 : i32 to index
    %c2_84 = arith.constant 2 : index
    %c0_85 = arith.constant 0 : index
    %89 = vector.load %arg2[%c0_83, %88, %c2_84, %c0_85] : memref<1x18x18x4xbf16, #tpu.memory_space<vmem>>, vector<1x16x16x4xbf16>
    %90 = vector.shape_cast %89 : vector<1x16x16x4xbf16> to vector<16x16x4xbf16>
    %91 = vector.shape_cast %90 : vector<16x16x4xbf16> to vector<256x4xbf16>
    %c8 = arith.constant 8 : index
    %c0_86 = arith.constant 0 : index
    %c0_87 = arith.constant 0 : index
    %92 = vector.load %arg3[%c8, %c0_86, %c0_87] : memref<9x4x128xbf16, #tpu.memory_space<vmem>>, vector<1x4x128xbf16>
    %93 = vector.shape_cast %92 : vector<1x4x128xbf16> to vector<4x128xbf16>
    %cst_88 = arith.constant dense<0.000000e+00> : vector<256x128xf32>
    %94 = tpu.matmul %91, %93, %cst_88 {dimension_numbers = #tpu.dot_dimension_numbers<[1], [0], [0], [1], [0, 0, 1, 1], [], []>} : vector<256x4xbf16>, vector<4x128xbf16>, vector<256x128xf32> -> vector<256x128xf32>
    %c0_89 = arith.constant 0 : index
    %c0_90 = arith.constant 0 : index
    %95 = vector.load %arg4[%c0_89, %c0_90] : memref<256x128xf32, #tpu.memory_space<vmem>>, vector<256x128xf32>
    %96 = arith.addf %95, %94 : vector<256x128xf32>
    %c0_91 = arith.constant 0 : index
    %c0_92 = arith.constant 0 : index
    %97 = vector.load %arg4[%c0_91, %c0_92] : memref<256x128xf32, #tpu.memory_space<vmem>>, vector<256x128xf32>
    tpu.vector_store %arg4[%c0_91, %c0_92], %96 {strides = array<i32>} : memref<256x128xf32, #tpu.memory_space<vmem>>, vector<256x128xf32>,
    %c0_93 = arith.constant 0 : index
    %c0_94 = arith.constant 0 : index
    %98 = vector.load %arg4[%c0_93, %c0_94] : memref<256x128xf32, #tpu.memory_space<vmem>>, vector<256x128xf32>
    %cst_95 = arith.constant dense<0.000000e+00> : vector<128xf32>
    %99 = vector.multi_reduction <add>, %98, %cst_95 [0] : vector<256x128xf32> to vector<128xf32>
    %100 = vector.shape_cast %99 : vector<128xf32> to vector<1x128xf32>
    %c0_96 = arith.constant 0 : index
    %c0_97 = arith.constant 0 : index
    %c0_98 = arith.constant 0 : index
    %101 = vector.load %arg5[%c0_96, %c0_97, %c0_98] : memref<1x2x128xf32, #tpu.memory_space<vmem>>, vector<1x1x128xf32>
    %102 = vector.shape_cast %101 : vector<1x1x128xf32> to vector<1x128xf32>
    %103 = vector.shape_cast %100 : vector<1x128xf32> to vector<1x1x128xf32>
    tpu.vector_store %arg5[%c0_96, %c0_97, %c0_98], %103 {strides = array<i32>} : memref<1x2x128xf32, #tpu.memory_space<vmem>>, vector<1x1x128xf32>,
    %104 = arith.mulf %98, %98 : vector<256x128xf32>
    %cst_99 = arith.constant dense<0.000000e+00> : vector<128xf32>
    %105 = vector.multi_reduction <add>, %104, %cst_99 [0] : vector<256x128xf32> to vector<128xf32>
    %106 = vector.shape_cast %105 : vector<128xf32> to vector<1x128xf32>
    %c0_100 = arith.constant 0 : index
    %c1_101 = arith.constant 1 : index
    %c0_102 = arith.constant 0 : index
    %107 = vector.load %arg5[%c0_100, %c1_101, %c0_102] : memref<1x2x128xf32, #tpu.memory_space<vmem>>, vector<1x1x128xf32>
    %108 = vector.shape_cast %107 : vector<1x1x128xf32> to vector<1x128xf32>
    %109 = vector.shape_cast %106 : vector<1x128xf32> to vector<1x1x128xf32>
    tpu.vector_store %arg5[%c0_100, %c1_101, %c0_102], %109 {strides = array<i32>} : memref<1x2x128xf32, #tpu.memory_space<vmem>>, vector<1x1x128xf32>,
    return
  }
  func.func @transform_0(%arg0: i32, %arg1: i32) -> (i32, i32, i32, i32) {
    %c0_i32 = arith.constant 0 : i32
    %c0_i32_0 = arith.constant 0 : i32
    %c0_i32_1 = arith.constant 0 : i32
    %c0_i32_2 = arith.constant 0 : i32
    return %arg0, %c0_i32, %c0_i32_0, %c0_i32_1 : i32, i32, i32, i32
  }
  func.func @transform_1(%arg0: i32, %arg1: i32) -> (i32, i32, i32) {
    %c0_i32 = arith.constant 0 : i32
    %c0_i32_0 = arith.constant 0 : i32
    %c0_i32_1 = arith.constant 0 : i32
    %c0_i32_2 = arith.constant 0 : i32
    return %c0_i32, %c0_i32_0, %c0_i32_1 : i32, i32, i32
  }
  func.func @transform_2(%arg0: i32, %arg1: i32) -> (i32, i32) {
    %c1_i32 = arith.constant 1 : i32
    %0 = arith.muli %arg0, %c1_i32 : i32
    %1 = arith.addi %0, %arg1 : i32
    %c0_i32 = arith.constant 0 : i32
    %c0_i32_0 = arith.constant 0 : i32
    return %1, %c0_i32 : i32, i32
  }
  func.func @transform_3(%arg0: i32, %arg1: i32) -> (i32, i32, i32) {
    %c1_i32 = arith.constant 1 : i32
    %0 = arith.muli %arg0, %c1_i32 : i32
    %1 = arith.addi %0, %arg1 : i32
    %c0_i32 = arith.constant 0 : i32
    %c0_i32_0 = arith.constant 0 : i32
    %c0_i32_1 = arith.constant 0 : i32
    return %1, %c0_i32, %c0_i32_0 : i32, i32, i32
  }
}

</mosaic_0001>

<llo_original>
// kernel: tpu_custom_call.1
$region0: #{tpu_custom_call.1}
  #allocation0 [shape = 'u32[]', space=smem, size = 0x4, offset = 0x4, fixed_abs, tag = 'smem constant byte address 0x4 - core index']
  #allocation1 [shape = 'u32[72,128]{1,0:T(1,128)}', space=vmem, size = 0x9000, scoped, tag = 'internal scratch']
  %s0 = inlined_call_operand.vmem [shape: bf16[2,18,18,4], index: 0, kind: input, shape index: {}]
  %s1 = inlined_call_operand.vmem [shape: bf16[9,4,128], index: 1, kind: input, shape index: {}]
  %s2 = inlined_call_operand.hbm [shape: f32[512,128], index: 2, kind: output, shape index: {0}]
  %s3 = inlined_call_operand.hbm [shape: f32[2,2,128], index: 3, kind: output, shape index: {1}]
  %4 = xla_tuple %s2, %s3
  %s5 = sld [smem:[#allocation0]]
  $region49: #{tpu_custom_call.1} parent=0
    _
  %s7 = ssub.s32 1, %s5
  %s8 = scalar_select 0, %s7, %s5
  $region1: #{tpu_custom_call.1} parent=0
    #allocation2 [shape = 'u8[262144]{0}', space=vmem, size = 0x40000, scoped, tag = 'output window, operand 0']
    #allocation3 [shape = 's32[2]{0}', space=sflag, size = 0x8, scoped, tag = 'scoped memory for tpu_custom_call.1']
    #allocation4 [shape = 'u8[2048]{0}', space=vmem, size = 0x800, scoped, tag = 'output window, operand 1']
    #allocation5 [shape = 's32[2]{0}', space=sflag, size = 0x8, scoped, tag = 'scoped memory for tpu_custom_call.1']
    %9 = vsyncpa [#allocation3], 0
    %s10 = scalar_lea.sflag [#allocation3], 1
    %11 = vsyncpa %s10, 0
    %12 = vsyncpa [#allocation5], 0
    %s13 = scalar_lea.sflag [#allocation5], 1
    %14 = vsyncpa %s13, 0
    loop: start=0, step=1, limit=4
    $region2: #{tpu_custom_call.1} parent=1 // loop_pre_header
      _
    $region3: #{tpu_custom_call.1} parent=1 // loop_header
      %s16 = sphi 0, %s20
      %p17 = scmp.ge.s32.totalorder %s16, 4
      %s23 = sphi 0, %s35
      %s24 = sphi 0, %s31
      %s25 = sphi 0, %s23
      %s26 = sphi 0, %s24
      %s27 = sphi 0, %s25
      %s28 = sphi 0, %s26
      %s38 = sphi 0, %s40
      %s41 = sphi 0, %s38
      %s42 = sphi 0, %s41
      %s58 = sphi 0, %s42
      %s62 = sphi 0, %s62
      %s64 = sphi 0, %s62
      %s65 = sphi 0, %s64
      %s79 = sphi 0, %s65
      %s87 = sphi 0, %s89
      %s90 = sphi 0, %s87
      %s91 = sphi 0, %s90
      %s107 = sphi 0, %s91
      %s115 = sphi 0, %s117
      %s118 = sphi 0, %s115
      %s119 = sphi 0, %s118
      %s135 = sphi 0, %s119
    $region4: #{tpu_custom_call.1} parent=1 // loop_header_branch
      %19 = sbr.rel (%p17) target = $region8
    $region5: #{tpu_custom_call.1} parent=1 // loop_body
      %s21 = ssub.s32 %s16, 1
      %s22 = ssub.s32 %s16, 2
      %s29 = sadd.s32 1, %s24
      %p30 = scmp.ge.s32.totalorder %s29, 1
      %s31 = scalar_select %p30, 0, %s29
      %s32 = sadd.s32 1, %s23
      %s33 = scalar_select %p30, %s32, %s23
      %p34 = scmp.ge.s32.totalorder %s33, 2
      %s35 = scalar_select %p34, 0, %s33
      %s36 = ssub.s32 %s23, %s35
      %p37 = scmp.eq.s32.totalorder %s36, 0
      %s39 = sadd.s32 %s38, 1
      %s40 = scalar_select %p37, %s38, %s39
      %p43 = pneg %p37
      %p44 = scmp.eq.s32.totalorder %s16, 1
      %p45 = por %p43, %p44
      %p46 = scmp.ne.s32.totalorder %s38, %s41
      %p47 = scmp.eq.s32.totalorder %s16, 0
      %p48 = por %p46, %p47
      %p49 = scmp.ne.s32.totalorder %s38, %s41
      %p50 = scmp.eq.s32.totalorder %s21, 1
      %p51 = por %p49, %p50
      %p52 = scmp.ne.s32.totalorder %s41, %s42
      %p53 = scmp.eq.s32.totalorder %s21, 0
      %p54 = por %p52, %p53
      %p55 = scmp.ne.s32.totalorder %s41, %s42
      %p56 = scmp.eq.s32.totalorder %s22, 1
      %p57 = por %p55, %p56
      %p59 = scmp.ne.s32.totalorder %s42, %s58
      %p60 = scmp.eq.s32.totalorder %s22, 0
      %p61 = por %p59, %p60
      %s63 = sadd.s32 %s62, 1
      %p66 = scmp.eq.s32.totalorder %s16, 1
      %p67 = scmp.ne.s32.totalorder %s62, %s64
      %p68 = scmp.eq.s32.totalorder %s16, 0
      %p69 = por %p67, %p68
      %p70 = scmp.ne.s32.totalorder %s62, %s64
      %p71 = scmp.eq.s32.totalorder %s21, 1
      %p72 = por %p70, %p71
      %p73 = scmp.ne.s32.totalorder %s64, %s65
      %p74 = scmp.eq.s32.totalorder %s21, 0
      %p75 = por %p73, %p74
      %p76 = scmp.ne.s32.totalorder %s64, %s65
      %p77 = scmp.eq.s32.totalorder %s22, 1
      %p78 = por %p76, %p77
      %p80 = scmp.ne.s32.totalorder %s65, %s79
      %p81 = scmp.eq.s32.totalorder %s22, 0
      %p82 = por %p80, %p81
      %s83 = sadd.s32 %s23, %s24
      %s84 = sadd.s32 %s35, %s31
      %s85 = ssub.s32 %s83, %s84
      %p86 = scmp.eq.s32.totalorder %s85, 0
      %s88 = sadd.s32 %s87, 1
      %s89 = scalar_select %p86, %s87, %s88
      %p92 = pneg %p86
      %p93 = scmp.eq.s32.totalorder %s16, 1
      %p94 = por %p92, %p93
      %p95 = scmp.ne.s32.totalorder %s87, %s90
      %p96 = scmp.eq.s32.totalorder %s16, 0
      %p97 = por %p95, %p96
      %p98 = scmp.ne.s32.totalorder %s87, %s90
      %p99 = scmp.eq.s32.totalorder %s21, 1
      %p100 = por %p98, %p99
      %p101 = scmp.ne.s32.totalorder %s90, %s91
      %p102 = scmp.eq.s32.totalorder %s21, 0
      %p103 = por %p101, %p102
      %p104 = scmp.ne.s32.totalorder %s90, %s91
      %p105 = scmp.eq.s32.totalorder %s22, 1
      %p106 = por %p104, %p105
      %p108 = scmp.ne.s32.totalorder %s91, %s107
      %p109 = scmp.eq.s32.totalorder %s22, 0
      %p110 = por %p108, %p109
      %s111 = sadd.s32 %s23, %s24
      %s112 = sadd.s32 %s35, %s31
      %s113 = ssub.s32 %s111, %s112
      %p114 = scmp.eq.s32.totalorder %s113, 0
      %s116 = sadd.s32 %s115, 1
      %s117 = scalar_select %p114, %s115, %s116
      %p120 = pneg %p114
      %p121 = scmp.eq.s32.totalorder %s16, 1
      %p122 = por %p120, %p121
      %p123 = scmp.ne.s32.totalorder %s115, %s118
      %p124 = scmp.eq.s32.totalorder %s16, 0
      %p125 = por %p123, %p124
      %p126 = scmp.ne.s32.totalorder %s115, %s118
      %p127 = scmp.eq.s32.totalorder %s21, 1
      %p128 = por %p126, %p127
      %p129 = scmp.ne.s32.totalorder %s118, %s119
      %p130 = scmp.eq.s32.totalorder %s21, 0
      %p131 = por %p129, %p130
      %p132 = scmp.ne.s32.totalorder %s118, %s119
      %p133 = scmp.eq.s32.totalorder %s22, 1
      %p134 = por %p132, %p133
      %p136 = scmp.ne.s32.totalorder %s119, %s135
      %p137 = scmp.eq.s32.totalorder %s22, 0
      %p138 = por %p136, %p137
      %p139 = scmp.le.s32.totalorder 1, %s16
      %p140 = scmp.lt.s32.totalorder %s16, 3
      %p141 = pnand %p139, %p140
      %p142 = pneg %p141
      // Predicated region
      $region9: #{tpu_custom_call.1} parent=5 // pred_check
        _
      $region10: #{tpu_custom_call.1} parent=5 // pred_check_branch
        %144 = sbr.rel (%p141) target = $region12
      $region11: #{tpu_custom_call.1} parent=5 // pred_region
        %s145 = ssub.s32 %s16, 1
        // Predicated region
        $region13: #{tpu_custom_call.1} parent=11 // pred_check
          %p146 = pneg %p75
        $region14: #{tpu_custom_call.1} parent=11 // pred_check_branch
          %148 = sbr.rel (%p146) target = $region16
        $region15: #{tpu_custom_call.1} parent=11 // pred_region
          _
        $region16: #{tpu_custom_call.1} parent=11 // pred_fallthru
          _
      $region12: #{tpu_custom_call.1} parent=5 // pred_fallthru
        _
      %p149 = scmp.lt.s32.totalorder %s16, 2
      // Predicated region
      $region17: #{tpu_custom_call.1} parent=5 // pred_check
        %p150 = pneg %p149
      $region18: #{tpu_custom_call.1} parent=5 // pred_check_branch
        %152 = sbr.rel (%p150) target = $region20
      $region19: #{tpu_custom_call.1} parent=5 // pred_region
        // Predicated region
        $region21: #{tpu_custom_call.1} parent=19 // pred_check
          %p153 = pneg %p48
        $region22: #{tpu_custom_call.1} parent=19 // pred_check_branch
          %155 = sbr.rel (%p153) target = $region24
        $region23: #{tpu_custom_call.1} parent=19 // pred_region
          %p156 = scmp.lt.s32.totalorder %s23, 1
          %s157 = scalar_select %p156, %s23, 1
          %s158 = smul.addr %s157, 54
          %s159 = smul.addr %s158, 4
          %s160 = scalar_lea.vmem %s0, %s159
        $region24: #{tpu_custom_call.1} parent=19 // pred_fallthru
          _
      $region20: #{tpu_custom_call.1} parent=5 // pred_fallthru
        _
      %p161 = scmp.le.s32.totalorder 1, %s16
      %p162 = scmp.lt.s32.totalorder %s16, 3
      %p163 = pnand %p161, %p162
      %p164 = pneg %p163
      // Predicated region
      $region25: #{tpu_custom_call.1} parent=5 // pred_check
        _
      $region26: #{tpu_custom_call.1} parent=5 // pred_check_branch
        %166 = sbr.rel (%p163) target = $region28
      $region27: #{tpu_custom_call.1} parent=5 // pred_region
        %s167 = ssub.s32 %s16, 1
        %p168 = scmp.lt.s32.totalorder %s25, 1
        %s169 = scalar_select %p168, %s25, 1
        %s170 = smul.addr %s169, 54
        %s171 = smul.addr %s170, 4
        %s172 = scalar_lea.vmem %s0, %s171
        %p173 = pneg %p54
        %p174 = pneg %p51
        %p175 = pneg %p75
        %p176 = pneg %p72
        %p177 = pneg %p103
        %p178 = pneg %p100
        %s179 = sand.u32 %s90, 1
        %s180 = scalar_lea.sflag [#allocation3], %s179
        %s181 = sand.u32 %s90, 1
        %s182 = smul.addr %s181, 256
        %s183 = scalar_lea.vmem [#allocation2], %s182
        %p184 = pneg %p131
        %p185 = pneg %p128
        %s186 = sand.u32 %s118, 1
        %s187 = scalar_lea.sflag [#allocation5], %s186
        %s188 = sand.u32 %s118, 1
        %s189 = smul.addr %s188, 2
        %s190 = scalar_lea.vmem [#allocation4], %s189
        %p191 = scmp.lt.s32.totalorder %s25, 1
        %s192 = scalar_select %p191, %s25, 1
        %s193 = smul.addr %s192, 54
        %s194 = smul.addr %s193, 4
        %s195 = scalar_lea.vmem %s0, %s194
        %s196 = sadd.s32 %s25, %s26
        %s197 = smul.u32 32, %s196
        %s198 = sadd.s32 %s25, %s26
        %s200 = smul.u32 %s26, 16
        %s201 = smul.u32 %s200, 3
        %s202 = smul.addr %s201, 4
        %s203 = scalar_lea.vmem %s195, %s202
        %v204 = vld [vmem:[%s203] sm:$0xf]
        %v205 = vld [vmem:[%s203 + $0x4] sm:$0xf]
        %v206 = vld [vmem:[%s203 + $0xc] sm:$0xf]
        %v207 = vld [vmem:[%s203 + $0x10] sm:$0xf]
        %v208 = vld [vmem:[%s203 + $0x18] sm:$0xf]
        %v209 = vld [vmem:[%s203 + $0x1c] sm:$0xf]
        %v210 = vld [vmem:[%s203 + $0x24] sm:$0xf]
        %v211 = vld [vmem:[%s203 + $0x28] sm:$0xf]
        %v212 = vld [vmem:[%s203 + $0x30] sm:$0xf]
        %v213 = vld [vmem:[%s203 + $0x34] sm:$0xf]
        %v214 = vld [vmem:[%s203 + $0x3c] sm:$0xf]
        %v215 = vld [vmem:[%s203 + $0x40] sm:$0xf]
        %v216 = vld [vmem:[%s203 + $0x48] sm:$0xf]
        %v217 = vld [vmem:[%s203 + $0x4c] sm:$0xf]
        %v218 = vld [vmem:[%s203 + $0x54] sm:$0xf]
        %v219 = vld [vmem:[%s203 + $0x58] sm:$0xf]
        %v220 = vld [vmem:[%s203 + $0x60] sm:$0xf]
        %v221 = vld [vmem:[%s203 + $0x64] sm:$0xf]
        %v222 = vld [vmem:[%s203 + $0x6c] sm:$0xf]
        %v223 = vld [vmem:[%s203 + $0x70] sm:$0xf]
        %v224 = vld [vmem:[%s203 + $0x78] sm:$0xf]
        %v225 = vld [vmem:[%s203 + $0x7c] sm:$0xf]
        %v226 = vld [vmem:[%s203 + $0x84] sm:$0xf]
        %v227 = vld [vmem:[%s203 + $0x88] sm:$0xf]
        %v228 = vld [vmem:[%s203 + $0x90] sm:$0xf]
        %v229 = vld [vmem:[%s203 + $0x94] sm:$0xf]
        %v230 = vld [vmem:[%s203 + $0x9c] sm:$0xf]
        %v231 = vld [vmem:[%s203 + $0xa0] sm:$0xf]
        %v232 = vld [vmem:[%s203 + $0xa8] sm:$0xf]
        %v233 = vld [vmem:[%s203 + $0xac] sm:$0xf]
        %v234 = vld [vmem:[%s203 + $0xb4] sm:$0xf]
        %v235 = vld [vmem:[%s203 + $0xb8] sm:$0xf]
        %v236 = vld [vmem:[%s1] sm:$0x3]
        %v269 = vunpack.c.l.b16 %v204
        %v270 = vunpack.c.l.b16 %v205
        %v271 = vunpack.c.l.b16 %v206
        %v272 = vunpack.c.l.b16 %v207
        %v273 = vunpack.c.l.b16 %v208
        %v274 = vunpack.c.l.b16 %v209
        %v275 = vunpack.c.l.b16 %v210
        %v276 = vunpack.c.l.b16 %v211
        %v277 = vunpack.c.l.b16 %v212
        %v278 = vunpack.c.l.b16 %v213
        %v279 = vunpack.c.l.b16 %v214
        %v280 = vunpack.c.l.b16 %v215
        %v281 = vunpack.c.l.b16 %v216
        %v282 = vunpack.c.l.b16 %v217
        %v283 = vunpack.c.l.b16 %v218
        %v284 = vunpack.c.l.b16 %v219
        %v285 = vunpack.c.l.b16 %v220
        %v286 = vunpack.c.l.b16 %v221
        %v287 = vunpack.c.l.b16 %v222
        %v288 = vunpack.c.l.b16 %v223
        %v289 = vunpack.c.l.b16 %v224
        %v290 = vunpack.c.l.b16 %v225
        %v291 = vunpack.c.l.b16 %v226
        %v292 = vunpack.c.l.b16 %v227
        %v293 = vunpack.c.l.b16 %v228
        %v294 = vunpack.c.l.b16 %v229
        %v295 = vunpack.c.l.b16 %v230
        %v296 = vunpack.c.l.b16 %v231
        %v297 = vunpack.c.l.b16 %v232
        %v298 = vunpack.c.l.b16 %v233
        %v299 = vunpack.c.l.b16 %v234
        %v300 = vunpack.c.l.b16 %v235
        %v301 = vpack.c.b16 %v270, %v269
        %v302 = vpack.c.b16 %v272, %v271
        %v303 = vpack.c.b16 %v274, %v273
        %v304 = vpack.c.b16 %v276, %v275
        %v305 = vpack.c.b16 %v278, %v277
        %v306 = vpack.c.b16 %v280, %v279
        %v307 = vpack.c.b16 %v282, %v281
        %v308 = vpack.c.b16 %v284, %v283
        %v309 = vpack.c.b16 %v286, %v285
        %v310 = vpack.c.b16 %v288, %v287
        %v311 = vpack.c.b16 %v290, %v289
        %v312 = vpack.c.b16 %v292, %v291
        %v313 = vpack.c.b16 %v294, %v293
        %v314 = vpack.c.b16 %v296, %v295
        %v315 = vpack.c.b16 %v298, %v297
        %v316 = vpack.c.b16 %v300, %v299
        %vm317 = vcmask 31744
        %v319 = vsel %vm317, %v301, 0
        %v322 = vsel %vm317, %v302, 0
        %v325 = vsel %vm317, %v303, 0
        %v328 = vsel %vm317, %v304, 0
        %v331 = vsel %vm317, %v305, 0
        %v334 = vsel %vm317, %v306, 0
        %v337 = vsel %vm317, %v307, 0
        %v340 = vsel %vm317, %v308, 0
        %v343 = vsel %vm317, %v309, 0
        %v346 = vsel %vm317, %v310, 0
        %v349 = vsel %vm317, %v311, 0
        %v352 = vsel %vm317, %v312, 0
        %v355 = vsel %vm317, %v313, 0
        %v358 = vsel %vm317, %v314, 0
        %v361 = vsel %vm317, %v315, 0
        %v364 = vsel %vm317, %v316, 0
        %vm366 = vcmask 1041408
        %v368 = vsel %vm366, %v236, 0
        %370 = vmatpush.bf16.msra.mxu0 0
        %371 = vmatpush.bf16.msra.mxu0 0
        %372 = vmatpush.bf16.msra.mxu0 0
        %373 = vmatpush.bf16.msra.mxu0 0
        %374 = vmatpush.bf16.msra.mxu0 0
        %375 = vmatpush.bf16.msra.mxu0 0
        %376 = vmatpush.bf16.msra.mxu0 0
        %377 = vmatpush.bf16.msra.mxu0 %v368
        %378 = vmatmul.bf16.gmra.mxu0 %v319
        %v379 = vpop.f32.mrf.mxu0
        %v380 = vadd.f32 0.0, %v379
        %v381 = vpop.f32.mrf.mxu0
        %v382 = vadd.f32 0.0, %v381
        %383 = vmatmul.bf16.gmra.mxu0 %v322
        %v384 = vpop.f32.mrf.mxu0
        %v385 = vadd.f32 0.0, %v384
        %v386 = vpop.f32.mrf.mxu0
        %v387 = vadd.f32 0.0, %v386
        %388 = vmatmul.bf16.gmra.mxu0 %v325
        %v389 = vpop.f32.mrf.mxu0
        %v390 = vadd.f32 0.0, %v389
        %v391 = vpop.f32.mrf.mxu0
        %v392 = vadd.f32 0.0, %v391
        %393 = vmatmul.bf16.gmra.mxu0 %v328
        %v394 = vpop.f32.mrf.mxu0
        %v395 = vadd.f32 0.0, %v394
        %v396 = vpop.f32.mrf.mxu0
        %v397 = vadd.f32 0.0, %v396
        %398 = vmatmul.bf16.gmra.mxu0 %v331
        %v399 = vpop.f32.mrf.mxu0
        %v400 = vadd.f32 0.0, %v399
        %v401 = vpop.f32.mrf.mxu0
        %v402 = vadd.f32 0.0, %v401
        %403 = vmatmul.bf16.gmra.mxu0 %v334
        %v404 = vpop.f32.mrf.mxu0
        %v405 = vadd.f32 0.0, %v404
        %v406 = vpop.f32.mrf.mxu0
        %v407 = vadd.f32 0.0, %v406
        %408 = vmatmul.bf16.gmra.mxu0 %v337
        %v409 = vpop.f32.mrf.mxu0
        %v410 = vadd.f32 0.0, %v409
        %v411 = vpop.f32.mrf.mxu0
        %v412 = vadd.f32 0.0, %v411
        %413 = vmatmul.bf16.gmra.mxu0 %v340
        %v414 = vpop.f32.mrf.mxu0
        %v415 = vadd.f32 0.0, %v414
        %v416 = vpop.f32.mrf.mxu0
        %v417 = vadd.f32 0.0, %v416
        %418 = vmatmul.bf16.gmra.mxu0 %v343
        %v419 = vpop.f32.mrf.mxu0
        %v420 = vadd.f32 0.0, %v419
        %v421 = vpop.f32.mrf.mxu0
        %v422 = vadd.f32 0.0, %v421
        %423 = vmatmul.bf16.gmra.mxu0 %v346
        %v424 = vpop.f32.mrf.mxu0
        %v425 = vadd.f32 0.0, %v424
        %v426 = vpop.f32.mrf.mxu0
        %v427 = vadd.f32 0.0, %v426
        %428 = vmatmul.bf16.gmra.mxu0 %v349
        %v429 = vpop.f32.mrf.mxu0
        %v430 = vadd.f32 0.0, %v429
        %v431 = vpop.f32.mrf.mxu0
        %v432 = vadd.f32 0.0, %v431
        %433 = vmatmul.bf16.gmra.mxu0 %v352
        %v434 = vpop.f32.mrf.mxu0
        %v435 = vadd.f32 0.0, %v434
        %v436 = vpop.f32.mrf.mxu0
        %v437 = vadd.f32 0.0, %v436
        %438 = vmatmul.bf16.gmra.mxu0 %v355
        %v439 = vpop.f32.mrf.mxu0
        %v440 = vadd.f32 0.0, %v439
        %v441 = vpop.f32.mrf.mxu0
        %v442 = vadd.f32 0.0, %v441
        %443 = vmatmul.bf16.gmra.mxu0 %v358
        %v444 = vpop.f32.mrf.mxu0
        %v445 = vadd.f32 0.0, %v444
        %v446 = vpop.f32.mrf.mxu0
        %v447 = vadd.f32 0.0, %v446
        %448 = vmatmul.bf16.gmra.mxu0 %v361
        %v449 = vpop.f32.mrf.mxu0
        %v450 = vadd.f32 0.0, %v449
        %v451 = vpop.f32.mrf.mxu0
        %v452 = vadd.f32 0.0, %v451
        %453 = vmatmul.bf16.gmra.mxu0 %v364
        %v454 = vpop.f32.mrf.mxu0
        %v455 = vadd.f32 0.0, %v454
        %v456 = vpop.f32.mrf.mxu0
        %v457 = vadd.f32 0.0, %v456
        %458 = vdwg.mxu0
        %459 = vst [vmem:[%s183] sm:$0xff] %v380
        %460 = vst [vmem:[%s183 + $0x8] sm:$0xff] %v382
        %461 = vst [vmem:[%s183 + $0x10] sm:$0xff] %v385
        %462 = vst [vmem:[%s183 + $0x18] sm:$0xff] %v387
        %463 = vst [vmem:[%s183 + $0x20] sm:$0xff] %v390
        %464 = vst [vmem:[%s183 + $0x28] sm:$0xff] %v392
        %465 = vst [vmem:[%s183 + $0x30] sm:$0xff] %v395
        %466 = vst [vmem:[%s183 + $0x38] sm:$0xff] %v397
        %467 = vst [vmem:[%s183 + $0x40] sm:$0xff] %v400
        %468 = vst [vmem:[%s183 + $0x48] sm:$0xff] %v402
        %469 = vst [vmem:[%s183 + $0x50] sm:$0xff] %v405
        %470 = vst [vmem:[%s183 + $0x58] sm:$0xff] %v407
        %471 = vst [vmem:[%s183 + $0x60] sm:$0xff] %v410
        %472 = vst [vmem:[%s183 + $0x68] sm:$0xff] %v412
        %473 = vst [vmem:[%s183 + $0x70] sm:$0xff] %v415
        %474 = vst [vmem:[%s183 + $0x78] sm:$0xff] %v417
        %475 = vst [vmem:[%s183 + $0x80] sm:$0xff] %v420
        %476 = vst [vmem:[%s183 + $0x88] sm:$0xff] %v422
        %477 = vst [vmem:[%s183 + $0x90] sm:$0xff] %v425
        %478 = vst [vmem:[%s183 + $0x98] sm:$0xff] %v427
        %479 = vst [vmem:[%s183 + $0xa0] sm:$0xff] %v430
        %480 = vst [vmem:[%s183 + $0xa8] sm:$0xff] %v432
        %481 = vst [vmem:[%s183 + $0xb0] sm:$0xff] %v435
        %482 = vst [vmem:[%s183 + $0xb8] sm:$0xff] %v437
        %483 = vst [vmem:[%s183 + $0xc0] sm:$0xff] %v440
        %484 = vst [vmem:[%s183 + $0xc8] sm:$0xff] %v442
        %485 = vst [vmem:[%s183 + $0xd0] sm:$0xff] %v445
        %486 = vst [vmem:[%s183 + $0xd8] sm:$0xff] %v447
        %487 = vst [vmem:[%s183 + $0xe0] sm:$0xff] %v450
        %488 = vst [vmem:[%s183 + $0xe8] sm:$0xff] %v452
        %489 = vst [vmem:[%s183 + $0xf0] sm:$0xff] %v455
        %490 = vst [vmem:[%s183 + $0xf8] sm:$0xff] %v457
        %v491 = vld [vmem:[%s203] sm:$0xf]
        %v492 = vld [vmem:[%s203 + $0x4] sm:$0xf]
        %v493 = vld [vmem:[%s203 + $0x8] sm:$0x1]
        %v494 = vld [vmem:[%s203 + $0xc] sm:$0xf]
        %v495 = vld [vmem:[%s203 + $0x10] sm:$0xf]
        %v496 = vld [vmem:[%s203 + $0x14] sm:$0x1]
        %v497 = vld [vmem:[%s203 + $0x18] sm:$0xf]
        %v498 = vld [vmem:[%s203 + $0x1c] sm:$0xf]
        %v499 = vld [vmem:[%s203 + $0x20] sm:$0x1]
        %v500 = vld [vmem:[%s203 + $0x24] sm:$0xf]
        %v501 = vld [vmem:[%s203 + $0x28] sm:$0xf]
        %v502 = vld [vmem:[%s203 + $0x2c] sm:$0x1]
        %v503 = vld [vmem:[%s203 + $0x30] sm:$0xf]
        %v504 = vld [vmem:[%s203 + $0x34] sm:$0xf]
        %v505 = vld [vmem:[%s203 + $0x38] sm:$0x1]
        %v506 = vld [vmem:[%s203 + $0x3c] sm:$0xf]
        %v507 = vld [vmem:[%s203 + $0x40] sm:$0xf]
        %v508 = vld [vmem:[%s203 + $0x44] sm:$0x1]
        %v509 = vld [vmem:[%s203 + $0x48] sm:$0xf]
        %v510 = vld [vmem:[%s203 + $0x4c] sm:$0xf]
        %v511 = vld [vmem:[%s203 + $0x50] sm:$0x1]
        %v512 = vld [vmem:[%s203 + $0x54] sm:$0xf]
        %v513 = vld [vmem:[%s203 + $0x58] sm:$0xf]
        %v514 = vld [vmem:[%s203 + $0x5c] sm:$0x1]
        %v515 = vld [vmem:[%s203 + $0x60] sm:$0xf]
        %v516 = vld [vmem:[%s203 + $0x64] sm:$0xf]
        %v517 = vld [vmem:[%s203 + $0x68] sm:$0x1]
        %v518 = vld [vmem:[%s203 + $0x6c] sm:$0xf]
        %v519 = vld [vmem:[%s203 + $0x70] sm:$0xf]
        %v520 = vld [vmem:[%s203 + $0x74] sm:$0x1]
        %v521 = vld [vmem:[%s203 + $0x78] sm:$0xf]
        %v522 = vld [vmem:[%s203 + $0x7c] sm:$0xf]
        %v523 = vld [vmem:[%s203 + $0x80] sm:$0x1]
        %v524 = vld [vmem:[%s203 + $0x84] sm:$0xf]
        %v525 = vld [vmem:[%s203 + $0x88] sm:$0xf]
        %v526 = vld [vmem:[%s203 + $0x8c] sm:$0x1]
        %v527 = vld [vmem:[%s203 + $0x90] sm:$0xf]
        %v528 = vld [vmem:[%s203 + $0x94] sm:$0xf]
        %v529 = vld [vmem:[%s203 + $0x98] sm:$0x1]
        %v530 = vld [vmem:[%s203 + $0x9c] sm:$0xf]
        %v531 = vld [vmem:[%s203 + $0xa0] sm:$0xf]
        %v532 = vld [vmem:[%s203 + $0xa4] sm:$0x1]
        %v533 = vld [vmem:[%s203 + $0xa8] sm:$0xf]
        %v534 = vld [vmem:[%s203 + $0xac] sm:$0xf]
        %v535 = vld [vmem:[%s203 + $0xb0] sm:$0x1]
        %v536 = vld [vmem:[%s203 + $0xb4] sm:$0xf]
        %v537 = vld [vmem:[%s203 + $0xb8] sm:$0xf]
        %v538 = vld [vmem:[%s203 + $0xbc] sm:$0x1]
        %vm539 = vsmask.f32 3328
        %vm540 = vsmask.f32 7440
        %vm541 = vmor %vm539, %vm540
        %v543 = vshrl.u32 %v491, 16
        %v545 = vrot.slane %v543, 4
        %v546 = vshll.u32 %v491, 16
        %v548 = vrot.slane %v546, 5
        %v549 = vor.u32 %v545, %v548
        %v550 = vrot.slane %v549, 4
        %v552 = vshll.u32 %v492, 16
        %v554 = vrot.slane %v552, 5
        %v555 = vsel %vm541, %v550, %v554
        %v556 = vshrl.u32 %v492, 16
        %v558 = vrot.slane %v556, 4
        %v559 = vor.u32 %v558, %v554
        %v560 = vrot.slane %v559, 4
        %v562 = vshll.u32 %v493, 16
        %v564 = vrot.slane %v562, 5
        %v565 = vsel %vm541, %v560, %v564
        %v567 = vshrl.u32 %v494, 16
        %v569 = vrot.slane %v567, 4
        %v570 = vshll.u32 %v494, 16
        %v572 = vrot.slane %v570, 5
        %v573 = vor.u32 %v569, %v572
        %v574 = vrot.slane %v573, 4
        %v576 = vshll.u32 %v495, 16
        %v578 = vrot.slane %v576, 5
        %v579 = vsel %vm541, %v574, %v578
        %v580 = vshrl.u32 %v495, 16
        %v582 = vrot.slane %v580, 4
        %v583 = vor.u32 %v582, %v578
        %v584 = vrot.slane %v583, 4
        %v586 = vshll.u32 %v496, 16
        %v588 = vrot.slane %v586, 5
        %v589 = vsel %vm541, %v584, %v588
        %v591 = vshrl.u32 %v497, 16
        %v593 = vrot.slane %v591, 4
        %v594 = vshll.u32 %v497, 16
        %v596 = vrot.slane %v594, 5
        %v597 = vor.u32 %v593, %v596
        %v598 = vrot.slane %v597, 4
        %v600 = vshll.u32 %v498, 16
        %v602 = vrot.slane %v600, 5
        %v603 = vsel %vm541, %v598, %v602
        %v604 = vshrl.u32 %v498, 16
        %v606 = vrot.slane %v604, 4
        %v607 = vor.u32 %v606, %v602
        %v608 = vrot.slane %v607, 4
        %v610 = vshll.u32 %v499, 16
        %v612 = vrot.slane %v610, 5
        %v613 = vsel %vm541, %v608, %v612
        %v615 = vshrl.u32 %v500, 16
        %v617 = vrot.slane %v615, 4
        %v618 = vshll.u32 %v500, 16
        %v620 = vrot.slane %v618, 5
        %v621 = vor.u32 %v617, %v620
        %v622 = vrot.slane %v621, 4
        %v624 = vshll.u32 %v501, 16
        %v626 = vrot.slane %v624, 5
        %v627 = vsel %vm541, %v622, %v626
        %v628 = vshrl.u32 %v501, 16
        %v630 = vrot.slane %v628, 4
        %v631 = vor.u32 %v630, %v626
        %v632 = vrot.slane %v631, 4
        %v634 = vshll.u32 %v502, 16
        %v636 = vrot.slane %v634, 5
        %v637 = vsel %vm541, %v632, %v636
        %v639 = vshrl.u32 %v503, 16
        %v641 = vrot.slane %v639, 4
        %v642 = vshll.u32 %v503, 16
        %v644 = vrot.slane %v642, 5
        %v645 = vor.u32 %v641, %v644
        %v646 = vrot.slane %v645, 4
        %v648 = vshll.u32 %v504, 16
        %v650 = vrot.slane %v648, 5
        %v651 = vsel %vm541, %v646, %v650
        %v652 = vshrl.u32 %v504, 16
        %v654 = vrot.slane %v652, 4
        %v655 = vor.u32 %v654, %v650
        %v656 = vrot.slane %v655, 4
        %v658 = vshll.u32 %v505, 16
        %v660 = vrot.slane %v658, 5
        %v661 = vsel %vm541, %v656, %v660
        %v663 = vshrl.u32 %v506, 16
        %v665 = vrot.slane %v663, 4
        %v666 = vshll.u32 %v506, 16
        %v668 = vrot.slane %v666, 5
        %v669 = vor.u32 %v665, %v668
        %v670 = vrot.slane %v669, 4
        %v672 = vshll.u32 %v507, 16
        %v674 = vrot.slane %v672, 5
        %v675 = vsel %vm541, %v670, %v674
        %v676 = vshrl.u32 %v507, 16
        %v678 = vrot.slane %v676, 4
        %v679 = vor.u32 %v678, %v674
        %v680 = vrot.slane %v679, 4
        %v682 = vshll.u32 %v508, 16
        %v684 = vrot.slane %v682, 5
        %v685 = vsel %vm541, %v680, %v684
        %v687 = vshrl.u32 %v509, 16
        %v689 = vrot.slane %v687, 4
        %v690 = vshll.u32 %v509, 16
        %v692 = vrot.slane %v690, 5
        %v693 = vor.u32 %v689, %v692
        %v694 = vrot.slane %v693, 4
        %v696 = vshll.u32 %v510, 16
        %v698 = vrot.slane %v696, 5
        %v699 = vsel %vm541, %v694, %v698
        %v700 = vshrl.u32 %v510, 16
        %v702 = vrot.slane %v700, 4
        %v703 = vor.u32 %v702, %v698
        %v704 = vrot.slane %v703, 4
        %v706 = vshll.u32 %v511, 16
        %v708 = vrot.slane %v706, 5
        %v709 = vsel %vm541, %v704, %v708
        %v711 = vshrl.u32 %v512, 16
        %v713 = vrot.slane %v711, 4
        %v714 = vshll.u32 %v512, 16
        %v716 = vrot.slane %v714, 5
        %v717 = vor.u32 %v713, %v716
        %v718 = vrot.slane %v717, 4
        %v720 = vshll.u32 %v513, 16
        %v722 = vrot.slane %v720, 5
        %v723 = vsel %vm541, %v718, %v722
        %v724 = vshrl.u32 %v513, 16
        %v726 = vrot.slane %v724, 4
        %v727 = vor.u32 %v726, %v722
        %v728 = vrot.slane %v727, 4
        %v730 = vshll.u32 %v514, 16
        %v732 = vrot.slane %v730, 5
        %v733 = vsel %vm541, %v728, %v732
        %v735 = vshrl.u32 %v515, 16
        %v737 = vrot.slane %v735, 4
        %v738 = vshll.u32 %v515, 16
        %v740 = vrot.slane %v738, 5
        %v741 = vor.u32 %v737, %v740
        %v742 = vrot.slane %v741, 4
        %v744 = vshll.u32 %v516, 16
        %v746 = vrot.slane %v744, 5
        %v747 = vsel %vm541, %v742, %v746
        %v748 = vshrl.u32 %v516, 16
        %v750 = vrot.slane %v748, 4
        %v751 = vor.u32 %v750, %v746
        %v752 = vrot.slane %v751, 4
        %v754 = vshll.u32 %v517, 16
        %v756 = vrot.slane %v754, 5
        %v757 = vsel %vm541, %v752, %v756
        %v759 = vshrl.u32 %v518, 16
        %v761 = vrot.slane %v759, 4
        %v762 = vshll.u32 %v518, 16
        %v764 = vrot.slane %v762, 5
        %v765 = vor.u32 %v761, %v764
        %v766 = vrot.slane %v765, 4
        %v768 = vshll.u32 %v519, 16
        %v770 = vrot.slane %v768, 5
        %v771 = vsel %vm541, %v766, %v770
        %v772 = vshrl.u32 %v519, 16
        %v774 = vrot.slane %v772, 4
        %v775 = vor.u32 %v774, %v770
        %v776 = vrot.slane %v775, 4
        %v778 = vshll.u32 %v520, 16
        %v780 = vrot.slane %v778, 5
        %v781 = vsel %vm541, %v776, %v780
        %v783 = vshrl.u32 %v521, 16
        %v785 = vrot.slane %v783, 4
        %v786 = vshll.u32 %v521, 16
        %v788 = vrot.slane %v786, 5
        %v789 = vor.u32 %v785, %v788
        %v790 = vrot.slane %v789, 4
        %v792 = vshll.u32 %v522, 16
        %v794 = vrot.slane %v792, 5
        %v795 = vsel %vm541, %v790, %v794
        %v796 = vshrl.u32 %v522, 16
        %v798 = vrot.slane %v796, 4
        %v799 = vor.u32 %v798, %v794
        %v800 = vrot.slane %v799, 4
        %v802 = vshll.u32 %v523, 16
        %v804 = vrot.slane %v802, 5
        %v805 = vsel %vm541, %v800, %v804
        %v807 = vshrl.u32 %v524, 16
        %v809 = vrot.slane %v807, 4
        %v810 = vshll.u32 %v524, 16
        %v812 = vrot.slane %v810, 5
        %v813 = vor.u32 %v809, %v812
        %v814 = vrot.slane %v813, 4
        %v816 = vshll.u32 %v525, 16
        %v818 = vrot.slane %v816, 5
        %v819 = vsel %vm541, %v814, %v818
        %v820 = vshrl.u32 %v525, 16
        %v822 = vrot.slane %v820, 4
        %v823 = vor.u32 %v822, %v818
        %v824 = vrot.slane %v823, 4
        %v826 = vshll.u32 %v526, 16
        %v828 = vrot.slane %v826, 5
        %v829 = vsel %vm541, %v824, %v828
        %v831 = vshrl.u32 %v527, 16
        %v833 = vrot.slane %v831, 4
        %v834 = vshll.u32 %v527, 16
        %v836 = vrot.slane %v834, 5
        %v837 = vor.u32 %v833, %v836
        %v838 = vrot.slane %v837, 4
        %v840 = vshll.u32 %v528, 16
        %v842 = vrot.slane %v840, 5
        %v843 = vsel %vm541, %v838, %v842
        %v844 = vshrl.u32 %v528, 16
        %v846 = vrot.slane %v844, 4
        %v847 = vor.u32 %v846, %v842
        %v848 = vrot.slane %v847, 4
        %v850 = vshll.u32 %v529, 16
        %v852 = vrot.slane %v850, 5
        %v853 = vsel %vm541, %v848, %v852
        %v855 = vshrl.u32 %v530, 16
        %v857 = vrot.slane %v855, 4
        %v858 = vshll.u32 %v530, 16
        %v860 = vrot.slane %v858, 5
        %v861 = vor.u32 %v857, %v860
        %v862 = vrot.slane %v861, 4
        %v864 = vshll.u32 %v531, 16
        %v866 = vrot.slane %v864, 5
        %v867 = vsel %vm541, %v862, %v866
        %v868 = vshrl.u32 %v531, 16
        %v870 = vrot.slane %v868, 4
        %v871 = vor.u32 %v870, %v866
        %v872 = vrot.slane %v871, 4
        %v874 = vshll.u32 %v532, 16
        %v876 = vrot.slane %v874, 5
        %v877 = vsel %vm541, %v872, %v876
        %v879 = vshrl.u32 %v533, 16
        %v881 = vrot.slane %v879, 4
        %v882 = vshll.u32 %v533, 16
        %v884 = vrot.slane %v882, 5
        %v885 = vor.u32 %v881, %v884
        %v886 = vrot.slane %v885, 4
        %v888 = vshll.u32 %v534, 16
        %v890 = vrot.slane %v888, 5
        %v891 = vsel %vm541, %v886, %v890
        %v892 = vshrl.u32 %v534, 16
        %v894 = vrot.slane %v892, 4
        %v895 = vor.u32 %v894, %v890
        %v896 = vrot.slane %v895, 4
        %v898 = vshll.u32 %v535, 16
        %v900 = vrot.slane %v898, 5
        %v901 = vsel %vm541, %v896, %v900
        %v903 = vshrl.u32 %v536, 16
        %v905 = vrot.slane %v903, 4
        %v906 = vshll.u32 %v536, 16
        %v908 = vrot.slane %v906, 5
        %v909 = vor.u32 %v905, %v908
        %v910 = vrot.slane %v909, 4
        %v912 = vshll.u32 %v537, 16
        %v914 = vrot.slane %v912, 5
        %v915 = vsel %vm541, %v910, %v914
        %v916 = vshrl.u32 %v537, 16
        %v918 = vrot.slane %v916, 4
        %v919 = vor.u32 %v918, %v914
        %v920 = vrot.slane %v919, 4
        %v922 = vshll.u32 %v538, 16
        %v924 = vrot.slane %v922, 5
        %v925 = vsel %vm541, %v920, %v924
        %s926 = scalar_lea.vmem %s1, 2
        %v927 = vld [vmem:[%s926] sm:$0x3]
        %v928 = vunpack.c.l.b16 %v555
        %v929 = vunpack.c.l.b16 %v565
        %v930 = vunpack.c.l.b16 %v579
        %v931 = vunpack.c.l.b16 %v589
        %v932 = vunpack.c.l.b16 %v603
        %v933 = vunpack.c.l.b16 %v613
        %v934 = vunpack.c.l.b16 %v627
        %v935 = vunpack.c.l.b16 %v637
        %v936 = vunpack.c.l.b16 %v651
        %v937 = vunpack.c.l.b16 %v661
        %v938 = vunpack.c.l.b16 %v675
        %v939 = vunpack.c.l.b16 %v685
        %v940 = vunpack.c.l.b16 %v699
        %v941 = vunpack.c.l.b16 %v709
        %v942 = vunpack.c.l.b16 %v723
        %v943 = vunpack.c.l.b16 %v733
        %v944 = vunpack.c.l.b16 %v747
        %v945 = vunpack.c.l.b16 %v757
        %v946 = vunpack.c.l.b16 %v771
        %v947 = vunpack.c.l.b16 %v781
        %v948 = vunpack.c.l.b16 %v795
        %v949 = vunpack.c.l.b16 %v805
        %v950 = vunpack.c.l.b16 %v819
        %v951 = vunpack.c.l.b16 %v829
        %v952 = vunpack.c.l.b16 %v843
        %v953 = vunpack.c.l.b16 %v853
        %v954 = vunpack.c.l.b16 %v867
        %v955 = vunpack.c.l.b16 %v877
        %v956 = vunpack.c.l.b16 %v891
        %v957 = vunpack.c.l.b16 %v901
        %v958 = vunpack.c.l.b16 %v915
        %v959 = vunpack.c.l.b16 %v925
        %v960 = vpack.c.b16 %v929, %v928
        %v961 = vpack.c.b16 %v931, %v930
        %v962 = vpack.c.b16 %v933, %v932
        %v963 = vpack.c.b16 %v935, %v934
        %v964 = vpack.c.b16 %v937, %v936
        %v965 = vpack.c.b16 %v939, %v938
        %v966 = vpack.c.b16 %v941, %v940
        %v967 = vpack.c.b16 %v943, %v942
        %v968 = vpack.c.b16 %v945, %v944
        %v969 = vpack.c.b16 %v947, %v946
        %v970 = vpack.c.b16 %v949, %v948
        %v971 = vpack.c.b16 %v951, %v950
        %v972 = vpack.c.b16 %v953, %v952
        %v973 = vpack.c.b16 %v955, %v954
        %v974 = vpack.c.b16 %v957, %v956
        %v975 = vpack.c.b16 %v959, %v958
        %v977 = vsel %vm317, %v960, 0
        %v980 = vsel %vm317, %v961, 0
        %v983 = vsel %vm317, %v962, 0
        %v986 = vsel %vm317, %v963, 0
        %v989 = vsel %vm317, %v964, 0
        %v992 = vsel %vm317, %v965, 0
        %v995 = vsel %vm317, %v966, 0
        %v998 = vsel %vm317, %v967, 0
        %v1001 = vsel %vm317, %v968, 0
        %v1004 = vsel %vm317, %v969, 0
        %v1007 = vsel %vm317, %v970, 0
        %v1010 = vsel %vm317, %v971, 0
        %v1013 = vsel %vm317, %v972, 0
        %v1016 = vsel %vm317, %v973, 0
        %v1019 = vsel %vm317, %v974, 0
        %v1022 = vsel %vm317, %v975, 0
        %v1025 = vsel %vm366, %v927, 0
        %1027 = vmatpush.bf16.msra.mxu0 0
        %1028 = vmatpush.bf16.msra.mxu0 0
        %1029 = vmatpush.bf16.msra.mxu0 0
        %1030 = vmatpush.bf16.msra.mxu0 0
        %1031 = vmatpush.bf16.msra.mxu0 0
        %1032 = vmatpush.bf16.msra.mxu0 0
        %1033 = vmatpush.bf16.msra.mxu0 0
        %1034 = vmatpush.bf16.msra.mxu0 %v1025
        %1035 = vmatmul.bf16.gmra.mxu0 %v977
        %v1036 = vpop.f32.mrf.mxu0
        %v1037 = vadd.f32 0.0, %v1036
        %v1038 = vpop.f32.mrf.mxu0
        %v1039 = vadd.f32 0.0, %v1038
        %1040 = vmatmul.bf16.gmra.mxu0 %v980
        %v1041 = vpop.f32.mrf.mxu0
        %v1042 = vadd.f32 0.0, %v1041
        %v1043 = vpop.f32.mrf.mxu0
        %v1044 = vadd.f32 0.0, %v1043
        %1045 = vmatmul.bf16.gmra.mxu0 %v983
        %v1046 = vpop.f32.mrf.mxu0
        %v1047 = vadd.f32 0.0, %v1046
        %v1048 = vpop.f32.mrf.mxu0
        %v1049 = vadd.f32 0.0, %v1048
        %1050 = vmatmul.bf16.gmra.mxu0 %v986
        %v1051 = vpop.f32.mrf.mxu0
        %v1052 = vadd.f32 0.0, %v1051
        %v1053 = vpop.f32.mrf.mxu0
        %v1054 = vadd.f32 0.0, %v1053
        %1055 = vmatmul.bf16.gmra.mxu0 %v989
        %v1056 = vpop.f32.mrf.mxu0
        %v1057 = vadd.f32 0.0, %v1056
        %v1058 = vpop.f32.mrf.mxu0
        %v1059 = vadd.f32 0.0, %v1058
        %1060 = vmatmul.bf16.gmra.mxu0 %v992
        %v1061 = vpop.f32.mrf.mxu0
        %v1062 = vadd.f32 0.0, %v1061
        %v1063 = vpop.f32.mrf.mxu0
        %v1064 = vadd.f32 0.0, %v1063
        %1065 = vmatmul.bf16.gmra.mxu0 %v995
        %v1066 = vpop.f32.mrf.mxu0
        %v1067 = vadd.f32 0.0, %v1066
        %v1068 = vpop.f32.mrf.mxu0
        %v1069 = vadd.f32 0.0, %v1068
        %1070 = vmatmul.bf16.gmra.mxu0 %v998
        %v1071 = vpop.f32.mrf.mxu0
        %v1072 = vadd.f32 0.0, %v1071
        %v1073 = vpop.f32.mrf.mxu0
        %v1074 = vadd.f32 0.0, %v1073
        %1075 = vmatmul.bf16.gmra.mxu0 %v1001
        %v1076 = vpop.f32.mrf.mxu0
        %v1077 = vadd.f32 0.0, %v1076
        %v1078 = vpop.f32.mrf.mxu0
        %v1079 = vadd.f32 0.0, %v1078
        %1080 = vmatmul.bf16.gmra.mxu0 %v1004
        %v1081 = vpop.f32.mrf.mxu0
        %v1082 = vadd.f32 0.0, %v1081
        %v1083 = vpop.f32.mrf.mxu0
        %v1084 = vadd.f32 0.0, %v1083
        %1085 = vmatmul.bf16.gmra.mxu0 %v1007
        %v1086 = vpop.f32.mrf.mxu0
        %v1087 = vadd.f32 0.0, %v1086
        %v1088 = vpop.f32.mrf.mxu0
        %v1089 = vadd.f32 0.0, %v1088
        %1090 = vmatmul.bf16.gmra.mxu0 %v1010
        %v1091 = vpop.f32.mrf.mxu0
        %v1092 = vadd.f32 0.0, %v1091
        %v1093 = vpop.f32.mrf.mxu0
        %v1094 = vadd.f32 0.0, %v1093
        %1095 = vmatmul.bf16.gmra.mxu0 %v1013
        %v1096 = vpop.f32.mrf.mxu0
        %v1097 = vadd.f32 0.0, %v1096
        %v1098 = vpop.f32.mrf.mxu0
        %v1099 = vadd.f32 0.0, %v1098
        %1100 = vmatmul.bf16.gmra.mxu0 %v1016
        %v1101 = vpop.f32.mrf.mxu0
        %v1102 = vadd.f32 0.0, %v1101
        %v1103 = vpop.f32.mrf.mxu0
        %v1104 = vadd.f32 0.0, %v1103
        %1105 = vmatmul.bf16.gmra.mxu0 %v1019
        %v1106 = vpop.f32.mrf.mxu0
        %v1107 = vadd.f32 0.0, %v1106
        %v1108 = vpop.f32.mrf.mxu0
        %v1109 = vadd.f32 0.0, %v1108
        %1110 = vmatmul.bf16.gmra.mxu0 %v1022
        %v1111 = vpop.f32.mrf.mxu0
        %v1112 = vadd.f32 0.0, %v1111
        %v1113 = vpop.f32.mrf.mxu0
        %v1114 = vadd.f32 0.0, %v1113
        %1115 = vdwg.mxu0
        %v1116 = vld [vmem:[%s183] sm:$0xff]
        %v1117 = vld [vmem:[%s183 + $0x8] sm:$0xff]
        %v1118 = vld [vmem:[%s183 + $0x10] sm:$0xff]
        %v1119 = vld [vmem:[%s183 + $0x18] sm:$0xff]
        %v1120 = vld [vmem:[%s183 + $0x20] sm:$0xff]
        %v1121 = vld [vmem:[%s183 + $0x28] sm:$0xff]
        %v1122 = vld [vmem:[%s183 + $0x30] sm:$0xff]
        %v1123 = vld [vmem:[%s183 + $0x38] sm:$0xff]
        %v1124 = vld [vmem:[%s183 + $0x40] sm:$0xff]
        %v1125 = vld [vmem:[%s183 + $0x48] sm:$0xff]
        %v1126 = vld [vmem:[%s183 + $0x50] sm:$0xff]
        %v1127 = vld [vmem:[%s183 + $0x58] sm:$0xff]
        %v1128 = vld [vmem:[%s183 + $0x60] sm:$0xff]
        %v1129 = vld [vmem:[%s183 + $0x68] sm:$0xff]
        %v1130 = vld [vmem:[%s183 + $0x70] sm:$0xff]
        %v1131 = vld [vmem:[%s183 + $0x78] sm:$0xff]
        %v1132 = vld [vmem:[%s183 + $0x80] sm:$0xff]
        %v1133 = vld [vmem:[%s183 + $0x88] sm:$0xff]
        %v1134 = vld [vmem:[%s183 + $0x90] sm:$0xff]
        %v1135 = vld [vmem:[%s183 + $0x98] sm:$0xff]
        %v1136 = vld [vmem:[%s183 + $0xa0] sm:$0xff]
        %v1137 = vld [vmem:[%s183 + $0xa8] sm:$0xff]
        %v1138 = vld [vmem:[%s183 + $0xb0] sm:$0xff]
        %v1139 = vld [vmem:[%s183 + $0xb8] sm:$0xff]
        %v1140 = vld [vmem:[%s183 + $0xc0] sm:$0xff]
        %v1141 = vld [vmem:[%s183 + $0xc8] sm:$0xff]
        %v1142 = vld [vmem:[%s183 + $0xd0] sm:$0xff]
        %v1143 = vld [vmem:[%s183 + $0xd8] sm:$0xff]
        %v1144 = vld [vmem:[%s183 + $0xe0] sm:$0xff]
        %v1145 = vld [vmem:[%s183 + $0xe8] sm:$0xff]
        %v1146 = vld [vmem:[%s183 + $0xf0] sm:$0xff]
        %v1147 = vld [vmem:[%s183 + $0xf8] sm:$0xff]
        %v1148 = vadd.f32 %v1116, %v1037
        %v1149 = vadd.f32 %v1117, %v1039
        %v1150 = vadd.f32 %v1118, %v1042
        %v1151 = vadd.f32 %v1119, %v1044
        %v1152 = vadd.f32 %v1120, %v1047
        %v1153 = vadd.f32 %v1121, %v1049
        %v1154 = vadd.f32 %v1122, %v1052
        %v1155 = vadd.f32 %v1123, %v1054
        %v1156 = vadd.f32 %v1124, %v1057
        %v1157 = vadd.f32 %v1125, %v1059
        %v1158 = vadd.f32 %v1126, %v1062
        %v1159 = vadd.f32 %v1127, %v1064
        %v1160 = vadd.f32 %v1128, %v1067
        %v1161 = vadd.f32 %v1129, %v1069
        %v1162 = vadd.f32 %v1130, %v1072
        %v1163 = vadd.f32 %v1131, %v1074
        %v1164 = vadd.f32 %v1132, %v1077
        %v1165 = vadd.f32 %v1133, %v1079
        %v1166 = vadd.f32 %v1134, %v1082
        %v1167 = vadd.f32 %v1135, %v1084
        %v1168 = vadd.f32 %v1136, %v1087
        %v1169 = vadd.f32 %v1137, %v1089
        %v1170 = vadd.f32 %v1138, %v1092
        %v1171 = vadd.f32 %v1139, %v1094
        %v1172 = vadd.f32 %v1140, %v1097
        %v1173 = vadd.f32 %v1141, %v1099
        %v1174 = vadd.f32 %v1142, %v1102
        %v1175 = vadd.f32 %v1143, %v1104
        %v1176 = vadd.f32 %v1144, %v1107
        %v1177 = vadd.f32 %v1145, %v1109
        %v1178 = vadd.f32 %v1146, %v1112
        %v1179 = vadd.f32 %v1147, %v1114
        %1180 = vst [vmem:[%s183] sm:$0xff] %v1148
        %1181 = vst [vmem:[%s183 + $0x8] sm:$0xff] %v1149
        %1182 = vst [vmem:[%s183 + $0x10] sm:$0xff] %v1150
        %1183 = vst [vmem:[%s183 + $0x18] sm:$0xff] %v1151
        %1184 = vst [vmem:[%s183 + $0x20] sm:$0xff] %v1152
        %1185 = vst [vmem:[%s183 + $0x28] sm:$0xff] %v1153
        %1186 = vst [vmem:[%s183 + $0x30] sm:$0xff] %v1154
        %1187 = vst [vmem:[%s183 + $0x38] sm:$0xff] %v1155
        %1188 = vst [vmem:[%s183 + $0x40] sm:$0xff] %v1156
        %1189 = vst [vmem:[%s183 + $0x48] sm:$0xff] %v1157
        %1190 = vst [vmem:[%s183 + $0x50] sm:$0xff] %v1158
        %1191 = vst [vmem:[%s183 + $0x58] sm:$0xff] %v1159
        %1192 = vst [vmem:[%s183 + $0x60] sm:$0xff] %v1160
        %1193 = vst [vmem:[%s183 + $0x68] sm:$0xff] %v1161
        %1194 = vst [vmem:[%s183 + $0x70] sm:$0xff] %v1162
        %1195 = vst [vmem:[%s183 + $0x78] sm:$0xff] %v1163
        %1196 = vst [vmem:[%s183 + $0x80] sm:$0xff] %v1164
        %1197 = vst [vmem:[%s183 + $0x88] sm:$0xff] %v1165
        %1198 = vst [vmem:[%s183 + $0x90] sm:$0xff] %v1166
        %1199 = vst [vmem:[%s183 + $0x98] sm:$0xff] %v1167
        %1200 = vst [vmem:[%s183 + $0xa0] sm:$0xff] %v1168
        %1201 = vst [vmem:[%s183 + $0xa8] sm:$0xff] %v1169
        %1202 = vst [vmem:[%s183 + $0xb0] sm:$0xff] %v1170
        %1203 = vst [vmem:[%s183 + $0xb8] sm:$0xff] %v1171
        %1204 = vst [vmem:[%s183 + $0xc0] sm:$0xff] %v1172
        %1205 = vst [vmem:[%s183 + $0xc8] sm:$0xff] %v1173
        %1206 = vst [vmem:[%s183 + $0xd0] sm:$0xff] %v1174
        %1207 = vst [vmem:[%s183 + $0xd8] sm:$0xff] %v1175
        %1208 = vst [vmem:[%s183 + $0xe0] sm:$0xff] %v1176
        %1209 = vst [vmem:[%s183 + $0xe8] sm:$0xff] %v1177
        %1210 = vst [vmem:[%s183 + $0xf0] sm:$0xff] %v1178
        %1211 = vst [vmem:[%s183 + $0xf8] sm:$0xff] %v1179
        %v1212 = vld [vmem:[%s203] sm:$0xe]
        %v1213 = vld [vmem:[%s203 + $0x4] sm:$0xf]
        %v1214 = vld [vmem:[%s203 + $0x8] sm:$0x1]
        %v1215 = vld [vmem:[%s203 + $0xc] sm:$0xe]
        %v1216 = vld [vmem:[%s203 + $0x10] sm:$0xf]
        %v1217 = vld [vmem:[%s203 + $0x14] sm:$0x1]
        %v1218 = vld [vmem:[%s203 + $0x18] sm:$0xe]
        %v1219 = vld [vmem:[%s203 + $0x1c] sm:$0xf]
        %v1220 = vld [vmem:[%s203 + $0x20] sm:$0x1]
        %v1221 = vld [vmem:[%s203 + $0x24] sm:$0xe]
        %v1222 = vld [vmem:[%s203 + $0x28] sm:$0xf]
        %v1223 = vld [vmem:[%s203 + $0x2c] sm:$0x1]
        %v1224 = vld [vmem:[%s203 + $0x30] sm:$0xe]
        %v1225 = vld [vmem:[%s203 + $0x34] sm:$0xf]
        %v1226 = vld [vmem:[%s203 + $0x38] sm:$0x1]
        %v1227 = vld [vmem:[%s203 + $0x3c] sm:$0xe]
        %v1228 = vld [vmem:[%s203 + $0x40] sm:$0xf]
        %v1229 = vld [vmem:[%s203 + $0x44] sm:$0x1]
        %v1230 = vld [vmem:[%s203 + $0x48] sm:$0xe]
        %v1231 = vld [vmem:[%s203 + $0x4c] sm:$0xf]
        %v1232 = vld [vmem:[%s203 + $0x50] sm:$0x1]
        %v1233 = vld [vmem:[%s203 + $0x54] sm:$0xe]
        %v1234 = vld [vmem:[%s203 + $0x58] sm:$0xf]
        %v1235 = vld [vmem:[%s203 + $0x5c] sm:$0x1]
        %v1236 = vld [vmem:[%s203 + $0x60] sm:$0xe]
        %v1237 = vld [vmem:[%s203 + $0x64] sm:$0xf]
        %v1238 = vld [vmem:[%s203 + $0x68] sm:$0x1]
        %v1239 = vld [vmem:[%s203 + $0x6c] sm:$0xe]
        %v1240 = vld [vmem:[%s203 + $0x70] sm:$0xf]
        %v1241 = vld [vmem:[%s203 + $0x74] sm:$0x1]
        %v1242 = vld [vmem:[%s203 + $0x78] sm:$0xe]
        %v1243 = vld [vmem:[%s203 + $0x7c] sm:$0xf]
        %v1244 = vld [vmem:[%s203 + $0x80] sm:$0x1]
        %v1245 = vld [vmem:[%s203 + $0x84] sm:$0xe]
        %v1246 = vld [vmem:[%s203 + $0x88] sm:$0xf]
        %v1247 = vld [vmem:[%s203 + $0x8c] sm:$0x1]
        %v1248 = vld [vmem:[%s203 + $0x90] sm:$0xe]
        %v1249 = vld [vmem:[%s203 + $0x94] sm:$0xf]
        %v1250 = vld [vmem:[%s203 + $0x98] sm:$0x1]
        %v1251 = vld [vmem:[%s203 + $0x9c] sm:$0xe]
        %v1252 = vld [vmem:[%s203 + $0xa0] sm:$0xf]
        %v1253 = vld [vmem:[%s203 + $0xa4] sm:$0x1]
        %v1254 = vld [vmem:[%s203 + $0xa8] sm:$0xe]
        %v1255 = vld [vmem:[%s203 + $0xac] sm:$0xf]
        %v1256 = vld [vmem:[%s203 + $0xb0] sm:$0x1]
        %v1257 = vld [vmem:[%s203 + $0xb4] sm:$0xe]
        %v1258 = vld [vmem:[%s203 + $0xb8] sm:$0xf]
        %v1259 = vld [vmem:[%s203 + $0xbc] sm:$0x1]
        %vm1308 = vcmask 1042432
        %vm1309 = vcmask 1046532
        %vm1310 = vmor %vm1308, %vm1309
        %v1311 = vrot.slane %v1212, 5
        %v1312 = vrot.slane %v1311, 4
        %v1313 = vrot.slane %v1213, 5
        %v1314 = vsel %vm1310, %v1312, %v1313
        %v1315 = vrot.slane %v1313, 4
        %v1316 = vrot.slane %v1214, 5
        %v1317 = vsel %vm1310, %v1315, %v1316
        %v1318 = vrot.slane %v1215, 5
        %v1319 = vrot.slane %v1318, 4
        %v1320 = vrot.slane %v1216, 5
        %v1321 = vsel %vm1310, %v1319, %v1320
        %v1322 = vrot.slane %v1320, 4
        %v1323 = vrot.slane %v1217, 5
        %v1324 = vsel %vm1310, %v1322, %v1323
        %v1325 = vrot.slane %v1218, 5
        %v1326 = vrot.slane %v1325, 4
        %v1327 = vrot.slane %v1219, 5
        %v1328 = vsel %vm1310, %v1326, %v1327
        %v1329 = vrot.slane %v1327, 4
        %v1330 = vrot.slane %v1220, 5
        %v1331 = vsel %vm1310, %v1329, %v1330
        %v1332 = vrot.slane %v1221, 5
        %v1333 = vrot.slane %v1332, 4
        %v1334 = vrot.slane %v1222, 5
        %v1335 = vsel %vm1310, %v1333, %v1334
        %v1336 = vrot.slane %v1334, 4
        %v1337 = vrot.slane %v1223, 5
        %v1338 = vsel %vm1310, %v1336, %v1337
        %v1339 = vrot.slane %v1224, 5
        %v1340 = vrot.slane %v1339, 4
        %v1341 = vrot.slane %v1225, 5
        %v1342 = vsel %vm1310, %v1340, %v1341
        %v1343 = vrot.slane %v1341, 4
        %v1344 = vrot.slane %v1226, 5
        %v1345 = vsel %vm1310, %v1343, %v1344
        %v1346 = vrot.slane %v1227, 5
        %v1347 = vrot.slane %v1346, 4
        %v1348 = vrot.slane %v1228, 5
        %v1349 = vsel %vm1310, %v1347, %v1348
        %v1350 = vrot.slane %v1348, 4
        %v1351 = vrot.slane %v1229, 5
        %v1352 = vsel %vm1310, %v1350, %v1351
        %v1353 = vrot.slane %v1230, 5
        %v1354 = vrot.slane %v1353, 4
        %v1355 = vrot.slane %v1231, 5
        %v1356 = vsel %vm1310, %v1354, %v1355
        %v1357 = vrot.slane %v1355, 4
        %v1358 = vrot.slane %v1232, 5
        %v1359 = vsel %vm1310, %v1357, %v1358
        %v1360 = vrot.slane %v1233, 5
        %v1361 = vrot.slane %v1360, 4
        %v1362 = vrot.slane %v1234, 5
        %v1363 = vsel %vm1310, %v1361, %v1362
        %v1364 = vrot.slane %v1362, 4
        %v1365 = vrot.slane %v1235, 5
        %v1366 = vsel %vm1310, %v1364, %v1365
        %v1367 = vrot.slane %v1236, 5
        %v1368 = vrot.slane %v1367, 4
        %v1369 = vrot.slane %v1237, 5
        %v1370 = vsel %vm1310, %v1368, %v1369
        %v1371 = vrot.slane %v1369, 4
        %v1372 = vrot.slane %v1238, 5
        %v1373 = vsel %vm1310, %v1371, %v1372
        %v1374 = vrot.slane %v1239, 5
        %v1375 = vrot.slane %v1374, 4
        %v1376 = vrot.slane %v1240, 5
        %v1377 = vsel %vm1310, %v1375, %v1376
        %v1378 = vrot.slane %v1376, 4
        %v1379 = vrot.slane %v1241, 5
        %v1380 = vsel %vm1310, %v1378, %v1379
        %v1381 = vrot.slane %v1242, 5
        %v1382 = vrot.slane %v1381, 4
        %v1383 = vrot.slane %v1243, 5
        %v1384 = vsel %vm1310, %v1382, %v1383
        %v1385 = vrot.slane %v1383, 4
        %v1386 = vrot.slane %v1244, 5
        %v1387 = vsel %vm1310, %v1385, %v1386
        %v1388 = vrot.slane %v1245, 5
        %v1389 = vrot.slane %v1388, 4
        %v1390 = vrot.slane %v1246, 5
        %v1391 = vsel %vm1310, %v1389, %v1390
        %v1392 = vrot.slane %v1390, 4
        %v1393 = vrot.slane %v1247, 5
        %v1394 = vsel %vm1310, %v1392, %v1393
        %v1395 = vrot.slane %v1248, 5
        %v1396 = vrot.slane %v1395, 4
        %v1397 = vrot.slane %v1249, 5
        %v1398 = vsel %vm1310, %v1396, %v1397
        %v1399 = vrot.slane %v1397, 4
        %v1400 = vrot.slane %v1250, 5
        %v1401 = vsel %vm1310, %v1399, %v1400
        %v1402 = vrot.slane %v1251, 5
        %v1403 = vrot.slane %v1402, 4
        %v1404 = vrot.slane %v1252, 5
        %v1405 = vsel %vm1310, %v1403, %v1404
        %v1406 = vrot.slane %v1404, 4
        %v1407 = vrot.slane %v1253, 5
        %v1408 = vsel %vm1310, %v1406, %v1407
        %v1409 = vrot.slane %v1254, 5
        %v1410 = vrot.slane %v1409, 4
        %v1411 = vrot.slane %v1255, 5
        %v1412 = vsel %vm1310, %v1410, %v1411
        %v1413 = vrot.slane %v1411, 4
        %v1414 = vrot.slane %v1256, 5
        %v1415 = vsel %vm1310, %v1413, %v1414
        %v1416 = vrot.slane %v1257, 5
        %v1417 = vrot.slane %v1416, 4
        %v1418 = vrot.slane %v1258, 5
        %v1419 = vsel %vm1310, %v1417, %v1418
        %v1420 = vrot.slane %v1418, 4
        %v1421 = vrot.slane %v1259, 5
        %v1422 = vsel %vm1310, %v1420, %v1421
        %s1423 = scalar_lea.vmem %s1, 4
        %v1424 = vld [vmem:[%s1423] sm:$0x3]
        %v1425 = vunpack.c.l.b16 %v1314
        %v1426 = vunpack.c.l.b16 %v1317
        %v1427 = vunpack.c.l.b16 %v1321
        %v1428 = vunpack.c.l.b16 %v1324
        %v1429 = vunpack.c.l.b16 %v1328
        %v1430 = vunpack.c.l.b16 %v1331
        %v1431 = vunpack.c.l.b16 %v1335
        %v1432 = vunpack.c.l.b16 %v1338
        %v1433 = vunpack.c.l.b16 %v1342
        %v1434 = vunpack.c.l.b16 %v1345
        %v1435 = vunpack.c.l.b16 %v1349
        %v1436 = vunpack.c.l.b16 %v1352
        %v1437 = vunpack.c.l.b16 %v1356
        %v1438 = vunpack.c.l.b16 %v1359
        %v1439 = vunpack.c.l.b16 %v1363
        %v1440 = vunpack.c.l.b16 %v1366
        %v1441 = vunpack.c.l.b16 %v1370
        %v1442 = vunpack.c.l.b16 %v1373
        %v1443 = vunpack.c.l.b16 %v1377
        %v1444 = vunpack.c.l.b16 %v1380
        %v1445 = vunpack.c.l.b16 %v1384
        %v1446 = vunpack.c.l.b16 %v1387
        %v1447 = vunpack.c.l.b16 %v1391
        %v1448 = vunpack.c.l.b16 %v1394
        %v1449 = vunpack.c.l.b16 %v1398
        %v1450 = vunpack.c.l.b16 %v1401
        %v1451 = vunpack.c.l.b16 %v1405
        %v1452 = vunpack.c.l.b16 %v1408
        %v1453 = vunpack.c.l.b16 %v1412
        %v1454 = vunpack.c.l.b16 %v1415
        %v1455 = vunpack.c.l.b16 %v1419
        %v1456 = vunpack.c.l.b16 %v1422
        %v1457 = vpack.c.b16 %v1426, %v1425
        %v1458 = vpack.c.b16 %v1428, %v1427
        %v1459 = vpack.c.b16 %v1430, %v1429
        %v1460 = vpack.c.b16 %v1432, %v1431
        %v1461 = vpack.c.b16 %v1434, %v1433
        %v1462 = vpack.c.b16 %v1436, %v1435
        %v1463 = vpack.c.b16 %v1438, %v1437
        %v1464 = vpack.c.b16 %v1440, %v1439
        %v1465 = vpack.c.b16 %v1442, %v1441
        %v1466 = vpack.c.b16 %v1444, %v1443
        %v1467 = vpack.c.b16 %v1446, %v1445
        %v1468 = vpack.c.b16 %v1448, %v1447
        %v1469 = vpack.c.b16 %v1450, %v1449
        %v1470 = vpack.c.b16 %v1452, %v1451
        %v1471 = vpack.c.b16 %v1454, %v1453
        %v1472 = vpack.c.b16 %v1456, %v1455
        %v1474 = vsel %vm317, %v1457, 0
        %v1477 = vsel %vm317, %v1458, 0
        %v1480 = vsel %vm317, %v1459, 0
        %v1483 = vsel %vm317, %v1460, 0
        %v1486 = vsel %vm317, %v1461, 0
        %v1489 = vsel %vm317, %v1462, 0
        %v1492 = vsel %vm317, %v1463, 0
        %v1495 = vsel %vm317, %v1464, 0
        %v1498 = vsel %vm317, %v1465, 0
        %v1501 = vsel %vm317, %v1466, 0
        %v1504 = vsel %vm317, %v1467, 0
        %v1507 = vsel %vm317, %v1468, 0
        %v1510 = vsel %vm317, %v1469, 0
        %v1513 = vsel %vm317, %v1470, 0
        %v1516 = vsel %vm317, %v1471, 0
        %v1519 = vsel %vm317, %v1472, 0
        %v1522 = vsel %vm366, %v1424, 0
        %1524 = vmatpush.bf16.msra.mxu0 0
        %1525 = vmatpush.bf16.msra.mxu0 0
        %1526 = vmatpush.bf16.msra.mxu0 0
        %1527 = vmatpush.bf16.msra.mxu0 0
        %1528 = vmatpush.bf16.msra.mxu0 0
        %1529 = vmatpush.bf16.msra.mxu0 0
        %1530 = vmatpush.bf16.msra.mxu0 0
        %1531 = vmatpush.bf16.msra.mxu0 %v1522
        %1532 = vmatmul.bf16.gmra.mxu0 %v1474
        %v1533 = vpop.f32.mrf.mxu0
        %v1534 = vadd.f32 0.0, %v1533
        %v1535 = vpop.f32.mrf.mxu0
        %v1536 = vadd.f32 0.0, %v1535
        %1537 = vmatmul.bf16.gmra.mxu0 %v1477
        %v1538 = vpop.f32.mrf.mxu0
        %v1539 = vadd.f32 0.0, %v1538
        %v1540 = vpop.f32.mrf.mxu0
        %v1541 = vadd.f32 0.0, %v1540
        %1542 = vmatmul.bf16.gmra.mxu0 %v1480
        %v1543 = vpop.f32.mrf.mxu0
        %v1544 = vadd.f32 0.0, %v1543
        %v1545 = vpop.f32.mrf.mxu0
        %v1546 = vadd.f32 0.0, %v1545
        %1547 = vmatmul.bf16.gmra.mxu0 %v1483
        %v1548 = vpop.f32.mrf.mxu0
        %v1549 = vadd.f32 0.0, %v1548
        %v1550 = vpop.f32.mrf.mxu0
        %v1551 = vadd.f32 0.0, %v1550
        %1552 = vmatmul.bf16.gmra.mxu0 %v1486
        %v1553 = vpop.f32.mrf.mxu0
        %v1554 = vadd.f32 0.0, %v1553
        %v1555 = vpop.f32.mrf.mxu0
        %v1556 = vadd.f32 0.0, %v1555
        %1557 = vmatmul.bf16.gmra.mxu0 %v1489
        %v1558 = vpop.f32.mrf.mxu0
        %v1559 = vadd.f32 0.0, %v1558
        %v1560 = vpop.f32.mrf.mxu0
        %v1561 = vadd.f32 0.0, %v1560
        %1562 = vmatmul.bf16.gmra.mxu0 %v1492
        %v1563 = vpop.f32.mrf.mxu0
        %v1564 = vadd.f32 0.0, %v1563
        %v1565 = vpop.f32.mrf.mxu0
        %v1566 = vadd.f32 0.0, %v1565
        %1567 = vmatmul.bf16.gmra.mxu0 %v1495
        %v1568 = vpop.f32.mrf.mxu0
        %v1569 = vadd.f32 0.0, %v1568
        %v1570 = vpop.f32.mrf.mxu0
        %v1571 = vadd.f32 0.0, %v1570
        %1572 = vmatmul.bf16.gmra.mxu0 %v1498
        %v1573 = vpop.f32.mrf.mxu0
        %v1574 = vadd.f32 0.0, %v1573
        %v1575 = vpop.f32.mrf.mxu0
        %v1576 = vadd.f32 0.0, %v1575
        %1577 = vmatmul.bf16.gmra.mxu0 %v1501
        %v1578 = vpop.f32.mrf.mxu0
        %v1579 = vadd.f32 0.0, %v1578
        %v1580 = vpop.f32.mrf.mxu0
        %v1581 = vadd.f32 0.0, %v1580
        %1582 = vmatmul.bf16.gmra.mxu0 %v1504
        %v1583 = vpop.f32.mrf.mxu0
        %v1584 = vadd.f32 0.0, %v1583
        %v1585 = vpop.f32.mrf.mxu0
        %v1586 = vadd.f32 0.0, %v1585
        %1587 = vmatmul.bf16.gmra.mxu0 %v1507
        %v1588 = vpop.f32.mrf.mxu0
        %v1589 = vadd.f32 0.0, %v1588
        %v1590 = vpop.f32.mrf.mxu0
        %v1591 = vadd.f32 0.0, %v1590
        %1592 = vmatmul.bf16.gmra.mxu0 %v1510
        %v1593 = vpop.f32.mrf.mxu0
        %v1594 = vadd.f32 0.0, %v1593
        %v1595 = vpop.f32.mrf.mxu0
        %v1596 = vadd.f32 0.0, %v1595
        %1597 = vmatmul.bf16.gmra.mxu0 %v1513
        %v1598 = vpop.f32.mrf.mxu0
        %v1599 = vadd.f32 0.0, %v1598
        %v1600 = vpop.f32.mrf.mxu0
        %v1601 = vadd.f32 0.0, %v1600
        %1602 = vmatmul.bf16.gmra.mxu0 %v1516
        %v1603 = vpop.f32.mrf.mxu0
        %v1604 = vadd.f32 0.0, %v1603
        %v1605 = vpop.f32.mrf.mxu0
        %v1606 = vadd.f32 0.0, %v1605
        %1607 = vmatmul.bf16.gmra.mxu0 %v1519
        %v1608 = vpop.f32.mrf.mxu0
        %v1609 = vadd.f32 0.0, %v1608
        %v1610 = vpop.f32.mrf.mxu0
        %v1611 = vadd.f32 0.0, %v1610
        %1612 = vdwg.mxu0
        %v1613 = vld [vmem:[%s183] sm:$0xff]
        %v1614 = vld [vmem:[%s183 + $0x8] sm:$0xff]
        %v1615 = vld [vmem:[%s183 + $0x10] sm:$0xff]
        %v1616 = vld [vmem:[%s183 + $0x18] sm:$0xff]
        %v1617 = vld [vmem:[%s183 + $0x20] sm:$0xff]
        %v1618 = vld [vmem:[%s183 + $0x28] sm:$0xff]
        %v1619 = vld [vmem:[%s183 + $0x30] sm:$0xff]
        %v1620 = vld [vmem:[%s183 + $0x38] sm:$0xff]
        %v1621 = vld [vmem:[%s183 + $0x40] sm:$0xff]
        %v1622 = vld [vmem:[%s183 + $0x48] sm:$0xff]
        %v1623 = vld [vmem:[%s183 + $0x50] sm:$0xff]
        %v1624 = vld [vmem:[%s183 + $0x58] sm:$0xff]
        %v1625 = vld [vmem:[%s183 + $0x60] sm:$0xff]
        %v1626 = vld [vmem:[%s183 + $0x68] sm:$0xff]
        %v1627 = vld [vmem:[%s183 + $0x70] sm:$0xff]
        %v1628 = vld [vmem:[%s183 + $0x78] sm:$0xff]
        %v1629 = vld [vmem:[%s183 + $0x80] sm:$0xff]
        %v1630 = vld [vmem:[%s183 + $0x88] sm:$0xff]
        %v1631 = vld [vmem:[%s183 + $0x90] sm:$0xff]
        %v1632 = vld [vmem:[%s183 + $0x98] sm:$0xff]
        %v1633 = vld [vmem:[%s183 + $0xa0] sm:$0xff]
        %v1634 = vld [vmem:[%s183 + $0xa8] sm:$0xff]
        %v1635 = vld [vmem:[%s183 + $0xb0] sm:$0xff]
        %v1636 = vld [vmem:[%s183 + $0xb8] sm:$0xff]
        %v1637 = vld [vmem:[%s183 + $0xc0] sm:$0xff]
        %v1638 = vld [vmem:[%s183 + $0xc8] sm:$0xff]
        %v1639 = vld [vmem:[%s183 + $0xd0] sm:$0xff]
        %v1640 = vld [vmem:[%s183 + $0xd8] sm:$0xff]
        %v1641 = vld [vmem:[%s183 + $0xe0] sm:$0xff]
        %v1642 = vld [vmem:[%s183 + $0xe8] sm:$0xff]
        %v1643 = vld [vmem:[%s183 + $0xf0] sm:$0xff]
        %v1644 = vld [vmem:[%s183 + $0xf8] sm:$0xff]
        %v1645 = vadd.f32 %v1613, %v1534
        %v1646 = vadd.f32 %v1614, %v1536
        %v1647 = vadd.f32 %v1615, %v1539
        %v1648 = vadd.f32 %v1616, %v1541
        %v1649 = vadd.f32 %v1617, %v1544
        %v1650 = vadd.f32 %v1618, %v1546
        %v1651 = vadd.f32 %v1619, %v1549
        %v1652 = vadd.f32 %v1620, %v1551
        %v1653 = vadd.f32 %v1621, %v1554
        %v1654 = vadd.f32 %v1622, %v1556
        %v1655 = vadd.f32 %v1623, %v1559
        %v1656 = vadd.f32 %v1624, %v1561
        %v1657 = vadd.f32 %v1625, %v1564
        %v1658 = vadd.f32 %v1626, %v1566
        %v1659 = vadd.f32 %v1627, %v1569
        %v1660 = vadd.f32 %v1628, %v1571
        %v1661 = vadd.f32 %v1629, %v1574
        %v1662 = vadd.f32 %v1630, %v1576
        %v1663 = vadd.f32 %v1631, %v1579
        %v1664 = vadd.f32 %v1632, %v1581
        %v1665 = vadd.f32 %v1633, %v1584
        %v1666 = vadd.f32 %v1634, %v1586
        %v1667 = vadd.f32 %v1635, %v1589
        %v1668 = vadd.f32 %v1636, %v1591
        %v1669 = vadd.f32 %v1637, %v1594
        %v1670 = vadd.f32 %v1638, %v1596
        %v1671 = vadd.f32 %v1639, %v1599
        %v1672 = vadd.f32 %v1640, %v1601
        %v1673 = vadd.f32 %v1641, %v1604
        %v1674 = vadd.f32 %v1642, %v1606
        %v1675 = vadd.f32 %v1643, %v1609
        %v1676 = vadd.f32 %v1644, %v1611
        %1677 = vst [vmem:[%s183] sm:$0xff] %v1645
        %1678 = vst [vmem:[%s183 + $0x8] sm:$0xff] %v1646
        %1679 = vst [vmem:[%s183 + $0x10] sm:$0xff] %v1647
        %1680 = vst [vmem:[%s183 + $0x18] sm:$0xff] %v1648
        %1681 = vst [vmem:[%s183 + $0x20] sm:$0xff] %v1649
        %1682 = vst [vmem:[%s183 + $0x28] sm:$0xff] %v1650
        %1683 = vst [vmem:[%s183 + $0x30] sm:$0xff] %v1651
        %1684 = vst [vmem:[%s183 + $0x38] sm:$0xff] %v1652
        %1685 = vst [vmem:[%s183 + $0x40] sm:$0xff] %v1653
        %1686 = vst [vmem:[%s183 + $0x48] sm:$0xff] %v1654
        %1687 = vst [vmem:[%s183 + $0x50] sm:$0xff] %v1655
        %1688 = vst [vmem:[%s183 + $0x58] sm:$0xff] %v1656
        %1689 = vst [vmem:[%s183 + $0x60] sm:$0xff] %v1657
        %1690 = vst [vmem:[%s183 + $0x68] sm:$0xff] %v1658
        %1691 = vst [vmem:[%s183 + $0x70] sm:$0xff] %v1659
        %1692 = vst [vmem:[%s183 + $0x78] sm:$0xff] %v1660
        %1693 = vst [vmem:[%s183 + $0x80] sm:$0xff] %v1661
        %1694 = vst [vmem:[%s183 + $0x88] sm:$0xff] %v1662
        %1695 = vst [vmem:[%s183 + $0x90] sm:$0xff] %v1663
        %1696 = vst [vmem:[%s183 + $0x98] sm:$0xff] %v1664
        %1697 = vst [vmem:[%s183 + $0xa0] sm:$0xff] %v1665
        %1698 = vst [vmem:[%s183 + $0xa8] sm:$0xff] %v1666
        %1699 = vst [vmem:[%s183 + $0xb0] sm:$0xff] %v1667
        %1700 = vst [vmem:[%s183 + $0xb8] sm:$0xff] %v1668
        %1701 = vst [vmem:[%s183 + $0xc0] sm:$0xff] %v1669
        %1702 = vst [vmem:[%s183 + $0xc8] sm:$0xff] %v1670
        %1703 = vst [vmem:[%s183 + $0xd0] sm:$0xff] %v1671
        %1704 = vst [vmem:[%s183 + $0xd8] sm:$0xff] %v1672
        %1705 = vst [vmem:[%s183 + $0xe0] sm:$0xff] %v1673
        %1706 = vst [vmem:[%s183 + $0xe8] sm:$0xff] %v1674
        %1707 = vst [vmem:[%s183 + $0xf0] sm:$0xff] %v1675
        %1708 = vst [vmem:[%s183 + $0xf8] sm:$0xff] %v1676
        %s1709 = sadd.s32 %s200, 1
        %s1710 = smul.u32 %s1709, 3
        %s1711 = smul.addr %s1710, 4
        %s1712 = scalar_lea.vmem %s195, %s1711
        %v1713 = vld [vmem:[%s1712] sm:$0xf]
        %v1714 = vld [vmem:[%s1712 + $0x4] sm:$0xf]
        %v1715 = vld [vmem:[%s1712 + $0xc] sm:$0xf]
        %v1716 = vld [vmem:[%s1712 + $0x10] sm:$0xf]
        %v1717 = vld [vmem:[%s1712 + $0x18] sm:$0xf]
        %v1718 = vld [vmem:[%s1712 + $0x1c] sm:$0xf]
        %v1719 = vld [vmem:[%s1712 + $0x24] sm:$0xf]
        %v1720 = vld [vmem:[%s1712 + $0x28] sm:$0xf]
        %v1721 = vld [vmem:[%s1712 + $0x30] sm:$0xf]
        %v1722 = vld [vmem:[%s1712 + $0x34] sm:$0xf]
        %v1723 = vld [vmem:[%s1712 + $0x3c] sm:$0xf]
        %v1724 = vld [vmem:[%s1712 + $0x40] sm:$0xf]
        %v1725 = vld [vmem:[%s1712 + $0x48] sm:$0xf]
        %v1726 = vld [vmem:[%s1712 + $0x4c] sm:$0xf]
        %v1727 = vld [vmem:[%s1712 + $0x54] sm:$0xf]
        %v1728 = vld [vmem:[%s1712 + $0x58] sm:$0xf]
        %v1729 = vld [vmem:[%s1712 + $0x60] sm:$0xf]
        %v1730 = vld [vmem:[%s1712 + $0x64] sm:$0xf]
        %v1731 = vld [vmem:[%s1712 + $0x6c] sm:$0xf]
        %v1732 = vld [vmem:[%s1712 + $0x70] sm:$0xf]
        %v1733 = vld [vmem:[%s1712 + $0x78] sm:$0xf]
        %v1734 = vld [vmem:[%s1712 + $0x7c] sm:$0xf]
        %v1735 = vld [vmem:[%s1712 + $0x84] sm:$0xf]
        %v1736 = vld [vmem:[%s1712 + $0x88] sm:$0xf]
        %v1737 = vld [vmem:[%s1712 + $0x90] sm:$0xf]
        %v1738 = vld [vmem:[%s1712 + $0x94] sm:$0xf]
        %v1739 = vld [vmem:[%s1712 + $0x9c] sm:$0xf]
        %v1740 = vld [vmem:[%s1712 + $0xa0] sm:$0xf]
        %v1741 = vld [vmem:[%s1712 + $0xa8] sm:$0xf]
        %v1742 = vld [vmem:[%s1712 + $0xac] sm:$0xf]
        %v1743 = vld [vmem:[%s1712 + $0xb4] sm:$0xf]
        %v1744 = vld [vmem:[%s1712 + $0xb8] sm:$0xf]
        %s1745 = scalar_lea.vmem %s1, 6
        %v1746 = vld [vmem:[%s1745] sm:$0x3]
        %v1779 = vunpack.c.l.b16 %v1713
        %v1780 = vunpack.c.l.b16 %v1714
        %v1781 = vunpack.c.l.b16 %v1715
        %v1782 = vunpack.c.l.b16 %v1716
        %v1783 = vunpack.c.l.b16 %v1717
        %v1784 = vunpack.c.l.b16 %v1718
        %v1785 = vunpack.c.l.b16 %v1719
        %v1786 = vunpack.c.l.b16 %v1720
        %v1787 = vunpack.c.l.b16 %v1721
        %v1788 = vunpack.c.l.b16 %v1722
        %v1789 = vunpack.c.l.b16 %v1723
        %v1790 = vunpack.c.l.b16 %v1724
        %v1791 = vunpack.c.l.b16 %v1725
        %v1792 = vunpack.c.l.b16 %v1726
        %v1793 = vunpack.c.l.b16 %v1727
        %v1794 = vunpack.c.l.b16 %v1728
        %v1795 = vunpack.c.l.b16 %v1729
        %v1796 = vunpack.c.l.b16 %v1730
        %v1797 = vunpack.c.l.b16 %v1731
        %v1798 = vunpack.c.l.b16 %v1732
        %v1799 = vunpack.c.l.b16 %v1733
        %v1800 = vunpack.c.l.b16 %v1734
        %v1801 = vunpack.c.l.b16 %v1735
        %v1802 = vunpack.c.l.b16 %v1736
        %v1803 = vunpack.c.l.b16 %v1737
        %v1804 = vunpack.c.l.b16 %v1738
        %v1805 = vunpack.c.l.b16 %v1739
        %v1806 = vunpack.c.l.b16 %v1740
        %v1807 = vunpack.c.l.b16 %v1741
        %v1808 = vunpack.c.l.b16 %v1742
        %v1809 = vunpack.c.l.b16 %v1743
        %v1810 = vunpack.c.l.b16 %v1744
        %v1811 = vpack.c.b16 %v1780, %v1779
        %v1812 = vpack.c.b16 %v1782, %v1781
        %v1813 = vpack.c.b16 %v1784, %v1783
        %v1814 = vpack.c.b16 %v1786, %v1785
        %v1815 = vpack.c.b16 %v1788, %v1787
        %v1816 = vpack.c.b16 %v1790, %v1789
        %v1817 = vpack.c.b16 %v1792, %v1791
        %v1818 = vpack.c.b16 %v1794, %v1793
        %v1819 = vpack.c.b16 %v1796, %v1795
        %v1820 = vpack.c.b16 %v1798, %v1797
        %v1821 = vpack.c.b16 %v1800, %v1799
        %v1822 = vpack.c.b16 %v1802, %v1801
        %v1823 = vpack.c.b16 %v1804, %v1803
        %v1824 = vpack.c.b16 %v1806, %v1805
        %v1825 = vpack.c.b16 %v1808, %v1807
        %v1826 = vpack.c.b16 %v1810, %v1809
        %v1828 = vsel %vm317, %v1811, 0
        %v1831 = vsel %vm317, %v1812, 0
        %v1834 = vsel %vm317, %v1813, 0
        %v1837 = vsel %vm317, %v1814, 0
        %v1840 = vsel %vm317, %v1815, 0
        %v1843 = vsel %vm317, %v1816, 0
        %v1846 = vsel %vm317, %v1817, 0
        %v1849 = vsel %vm317, %v1818, 0
        %v1852 = vsel %vm317, %v1819, 0
        %v1855 = vsel %vm317, %v1820, 0
        %v1858 = vsel %vm317, %v1821, 0
        %v1861 = vsel %vm317, %v1822, 0
        %v1864 = vsel %vm317, %v1823, 0
        %v1867 = vsel %vm317, %v1824, 0
        %v1870 = vsel %vm317, %v1825, 0
        %v1873 = vsel %vm317, %v1826, 0
        %v1876 = vsel %vm366, %v1746, 0
        %1878 = vmatpush.bf16.msra.mxu0 0
        %1879 = vmatpush.bf16.msra.mxu0 0
        %1880 = vmatpush.bf16.msra.mxu0 0
        %1881 = vmatpush.bf16.msra.mxu0 0
        %1882 = vmatpush.bf16.msra.mxu0 0
        %1883 = vmatpush.bf16.msra.mxu0 0
        %1884 = vmatpush.bf16.msra.mxu0 0
        %1885 = vmatpush.bf16.msra.mxu0 %v1876
        %1886 = vmatmul.bf16.gmra.mxu0 %v1828
        %v1887 = vpop.f32.mrf.mxu0
        %v1888 = vadd.f32 0.0, %v1887
        %v1889 = vpop.f32.mrf.mxu0
        %v1890 = vadd.f32 0.0, %v1889
        %1891 = vmatmul.bf16.gmra.mxu0 %v1831
        %v1892 = vpop.f32.mrf.mxu0
        %v1893 = vadd.f32 0.0, %v1892
        %v1894 = vpop.f32.mrf.mxu0
        %v1895 = vadd.f32 0.0, %v1894
        %1896 = vmatmul.bf16.gmra.mxu0 %v1834
        %v1897 = vpop.f32.mrf.mxu0
        %v1898 = vadd.f32 0.0, %v1897
        %v1899 = vpop.f32.mrf.mxu0
        %v1900 = vadd.f32 0.0, %v1899
        %1901 = vmatmul.bf16.gmra.mxu0 %v1837
        %v1902 = vpop.f32.mrf.mxu0
        %v1903 = vadd.f32 0.0, %v1902
        %v1904 = vpop.f32.mrf.mxu0
        %v1905 = vadd.f32 0.0, %v1904
        %1906 = vmatmul.bf16.gmra.mxu0 %v1840
        %v1907 = vpop.f32.mrf.mxu0
        %v1908 = vadd.f32 0.0, %v1907
        %v1909 = vpop.f32.mrf.mxu0
        %v1910 = vadd.f32 0.0, %v1909
        %1911 = vmatmul.bf16.gmra.mxu0 %v1843
        %v1912 = vpop.f32.mrf.mxu0
        %v1913 = vadd.f32 0.0, %v1912
        %v1914 = vpop.f32.mrf.mxu0
        %v1915 = vadd.f32 0.0, %v1914
        %1916 = vmatmul.bf16.gmra.mxu0 %v1846
        %v1917 = vpop.f32.mrf.mxu0
        %v1918 = vadd.f32 0.0, %v1917
        %v1919 = vpop.f32.mrf.mxu0
        %v1920 = vadd.f32 0.0, %v1919
        %1921 = vmatmul.bf16.gmra.mxu0 %v1849
        %v1922 = vpop.f32.mrf.mxu0
        %v1923 = vadd.f32 0.0, %v1922
        %v1924 = vpop.f32.mrf.mxu0
        %v1925 = vadd.f32 0.0, %v1924
        %1926 = vmatmul.bf16.gmra.mxu0 %v1852
        %v1927 = vpop.f32.mrf.mxu0
        %v1928 = vadd.f32 0.0, %v1927
        %v1929 = vpop.f32.mrf.mxu0
        %v1930 = vadd.f32 0.0, %v1929
        %1931 = vmatmul.bf16.gmra.mxu0 %v1855
        %v1932 = vpop.f32.mrf.mxu0
        %v1933 = vadd.f32 0.0, %v1932
        %v1934 = vpop.f32.mrf.mxu0
        %v1935 = vadd.f32 0.0, %v1934
        %1936 = vmatmul.bf16.gmra.mxu0 %v1858
        %v1937 = vpop.f32.mrf.mxu0
        %v1938 = vadd.f32 0.0, %v1937
        %v1939 = vpop.f32.mrf.mxu0
        %v1940 = vadd.f32 0.0, %v1939
        %1941 = vmatmul.bf16.gmra.mxu0 %v1861
        %v1942 = vpop.f32.mrf.mxu0
        %v1943 = vadd.f32 0.0, %v1942
        %v1944 = vpop.f32.mrf.mxu0
        %v1945 = vadd.f32 0.0, %v1944
        %1946 = vmatmul.bf16.gmra.mxu0 %v1864
        %v1947 = vpop.f32.mrf.mxu0
        %v1948 = vadd.f32 0.0, %v1947
        %v1949 = vpop.f32.mrf.mxu0
        %v1950 = vadd.f32 0.0, %v1949
        %1951 = vmatmul.bf16.gmra.mxu0 %v1867
        %v1952 = vpop.f32.mrf.mxu0
        %v1953 = vadd.f32 0.0, %v1952
        %v1954 = vpop.f32.mrf.mxu0
        %v1955 = vadd.f32 0.0, %v1954
        %1956 = vmatmul.bf16.gmra.mxu0 %v1870
        %v1957 = vpop.f32.mrf.mxu0
        %v1958 = vadd.f32 0.0, %v1957
        %v1959 = vpop.f32.mrf.mxu0
        %v1960 = vadd.f32 0.0, %v1959
        %1961 = vmatmul.bf16.gmra.mxu0 %v1873
        %v1962 = vpop.f32.mrf.mxu0
        %v1963 = vadd.f32 0.0, %v1962
        %v1964 = vpop.f32.mrf.mxu0
        %v1965 = vadd.f32 0.0, %v1964
        %1966 = vdwg.mxu0
        %v1967 = vld [vmem:[%s183] sm:$0xff]
        %v1968 = vld [vmem:[%s183 + $0x8] sm:$0xff]
        %v1969 = vld [vmem:[%s183 + $0x10] sm:$0xff]
        %v1970 = vld [vmem:[%s183 + $0x18] sm:$0xff]
        %v1971 = vld [vmem:[%s183 + $0x20] sm:$0xff]
        %v1972 = vld [vmem:[%s183 + $0x28] sm:$0xff]
        %v1973 = vld [vmem:[%s183 + $0x30] sm:$0xff]
        %v1974 = vld [vmem:[%s183 + $0x38] sm:$0xff]
        %v1975 = vld [vmem:[%s183 + $0x40] sm:$0xff]
        %v1976 = vld [vmem:[%s183 + $0x48] sm:$0xff]
        %v1977 = vld [vmem:[%s183 + $0x50] sm:$0xff]
        %v1978 = vld [vmem:[%s183 + $0x58] sm:$0xff]
        %v1979 = vld [vmem:[%s183 + $0x60] sm:$0xff]
        %v1980 = vld [vmem:[%s183 + $0x68] sm:$0xff]
        %v1981 = vld [vmem:[%s183 + $0x70] sm:$0xff]
        %v1982 = vld [vmem:[%s183 + $0x78] sm:$0xff]
        %v1983 = vld [vmem:[%s183 + $0x80] sm:$0xff]
        %v1984 = vld [vmem:[%s183 + $0x88] sm:$0xff]
        %v1985 = vld [vmem:[%s183 + $0x90] sm:$0xff]
        %v1986 = vld [vmem:[%s183 + $0x98] sm:$0xff]
        %v1987 = vld [vmem:[%s183 + $0xa0] sm:$0xff]
        %v1988 = vld [vmem:[%s183 + $0xa8] sm:$0xff]
        %v1989 = vld [vmem:[%s183 + $0xb0] sm:$0xff]
        %v1990 = vld [vmem:[%s183 + $0xb8] sm:$0xff]
        %v1991 = vld [vmem:[%s183 + $0xc0] sm:$0xff]
        %v1992 = vld [vmem:[%s183 + $0xc8] sm:$0xff]
        %v1993 = vld [vmem:[%s183 + $0xd0] sm:$0xff]
        %v1994 = vld [vmem:[%s183 + $0xd8] sm:$0xff]
        %v1995 = vld [vmem:[%s183 + $0xe0] sm:$0xff]
        %v1996 = vld [vmem:[%s183 + $0xe8] sm:$0xff]
        %v1997 = vld [vmem:[%s183 + $0xf0] sm:$0xff]
        %v1998 = vld [vmem:[%s183 + $0xf8] sm:$0xff]
        %v1999 = vadd.f32 %v1967, %v1888
        %v2000 = vadd.f32 %v1968, %v1890
        %v2001 = vadd.f32 %v1969, %v1893
        %v2002 = vadd.f32 %v1970, %v1895
        %v2003 = vadd.f32 %v1971, %v1898
        %v2004 = vadd.f32 %v1972, %v1900
        %v2005 = vadd.f32 %v1973, %v1903
        %v2006 = vadd.f32 %v1974, %v1905
        %v2007 = vadd.f32 %v1975, %v1908
        %v2008 = vadd.f32 %v1976, %v1910
        %v2009 = vadd.f32 %v1977, %v1913
        %v2010 = vadd.f32 %v1978, %v1915
        %v2011 = vadd.f32 %v1979, %v1918
        %v2012 = vadd.f32 %v1980, %v1920
        %v2013 = vadd.f32 %v1981, %v1923
        %v2014 = vadd.f32 %v1982, %v1925
        %v2015 = vadd.f32 %v1983, %v1928
        %v2016 = vadd.f32 %v1984, %v1930
        %v2017 = vadd.f32 %v1985, %v1933
        %v2018 = vadd.f32 %v1986, %v1935
        %v2019 = vadd.f32 %v1987, %v1938
        %v2020 = vadd.f32 %v1988, %v1940
        %v2021 = vadd.f32 %v1989, %v1943
        %v2022 = vadd.f32 %v1990, %v1945
        %v2023 = vadd.f32 %v1991, %v1948
        %v2024 = vadd.f32 %v1992, %v1950
        %v2025 = vadd.f32 %v1993, %v1953
        %v2026 = vadd.f32 %v1994, %v1955
        %v2027 = vadd.f32 %v1995, %v1958
        %v2028 = vadd.f32 %v1996, %v1960
        %v2029 = vadd.f32 %v1997, %v1963
        %v2030 = vadd.f32 %v1998, %v1965
        %2031 = vst [vmem:[%s183] sm:$0xff] %v1999
        %2032 = vst [vmem:[%s183 + $0x8] sm:$0xff] %v2000
        %2033 = vst [vmem:[%s183 + $0x10] sm:$0xff] %v2001
        %2034 = vst [vmem:[%s183 + $0x18] sm:$0xff] %v2002
        %2035 = vst [vmem:[%s183 + $0x20] sm:$0xff] %v2003
        %2036 = vst [vmem:[%s183 + $0x28] sm:$0xff] %v2004
        %2037 = vst [vmem:[%s183 + $0x30] sm:$0xff] %v2005
        %2038 = vst [vmem:[%s183 + $0x38] sm:$0xff] %v2006
        %2039 = vst [vmem:[%s183 + $0x40] sm:$0xff] %v2007
        %2040 = vst [vmem:[%s183 + $0x48] sm:$0xff] %v2008
        %2041 = vst [vmem:[%s183 + $0x50] sm:$0xff] %v2009
        %2042 = vst [vmem:[%s183 + $0x58] sm:$0xff] %v2010
        %2043 = vst [vmem:[%s183 + $0x60] sm:$0xff] %v2011
        %2044 = vst [vmem:[%s183 + $0x68] sm:$0xff] %v2012
        %2045 = vst [vmem:[%s183 + $0x70] sm:$0xff] %v2013
        %2046 = vst [vmem:[%s183 + $0x78] sm:$0xff] %v2014
        %2047 = vst [vmem:[%s183 + $0x80] sm:$0xff] %v2015
        %2048 = vst [vmem:[%s183 + $0x88] sm:$0xff] %v2016
        %2049 = vst [vmem:[%s183 + $0x90] sm:$0xff] %v2017
        %2050 = vst [vmem:[%s183 + $0x98] sm:$0xff] %v2018
        %2051 = vst [vmem:[%s183 + $0xa0] sm:$0xff] %v2019
        %2052 = vst [vmem:[%s183 + $0xa8] sm:$0xff] %v2020
        %2053 = vst [vmem:[%s183 + $0xb0] sm:$0xff] %v2021
        %2054 = vst [vmem:[%s183 + $0xb8] sm:$0xff] %v2022
        %2055 = vst [vmem:[%s183 + $0xc0] sm:$0xff] %v2023
        %2056 = vst [vmem:[%s183 + $0xc8] sm:$0xff] %v2024
        %2057 = vst [vmem:[%s183 + $0xd0] sm:$0xff] %v2025
        %2058 = vst [vmem:[%s183 + $0xd8] sm:$0xff] %v2026
        %2059 = vst [vmem:[%s183 + $0xe0] sm:$0xff] %v2027
        %2060 = vst [vmem:[%s183 + $0xe8] sm:$0xff] %v2028
        %2061 = vst [vmem:[%s183 + $0xf0] sm:$0xff] %v2029
        %2062 = vst [vmem:[%s183 + $0xf8] sm:$0xff] %v2030
        %v2063 = vld [vmem:[%s1712] sm:$0xf]
        %v2064 = vld [vmem:[%s1712 + $0x4] sm:$0xf]
        %v2065 = vld [vmem:[%s1712 + $0x8] sm:$0x1]
        %v2066 = vld [vmem:[%s1712 + $0xc] sm:$0xf]
        %v2067 = vld [vmem:[%s1712 + $0x10] sm:$0xf]
        %v2068 = vld [vmem:[%s1712 + $0x14] sm:$0x1]
        %v2069 = vld [vmem:[%s1712 + $0x18] sm:$0xf]
        %v2070 = vld [vmem:[%s1712 + $0x1c] sm:$0xf]
        %v2071 = vld [vmem:[%s1712 + $0x20] sm:$0x1]
        %v2072 = vld [vmem:[%s1712 + $0x24] sm:$0xf]
        %v2073 = vld [vmem:[%s1712 + $0x28] sm:$0xf]
        %v2074 = vld [vmem:[%s1712 + $0x2c] sm:$0x1]
        %v2075 = vld [vmem:[%s1712 + $0x30] sm:$0xf]
        %v2076 = vld [vmem:[%s1712 + $0x34] sm:$0xf]
        %v2077 = vld [vmem:[%s1712 + $0x38] sm:$0x1]
        %v2078 = vld [vmem:[%s1712 + $0x3c] sm:$0xf]
        %v2079 = vld [vmem:[%s1712 + $0x40] sm:$0xf]
        %v2080 = vld [vmem:[%s1712 + $0x44] sm:$0x1]
        %v2081 = vld [vmem:[%s1712 + $0x48] sm:$0xf]
        %v2082 = vld [vmem:[%s1712 + $0x4c] sm:$0xf]
        %v2083 = vld [vmem:[%s1712 + $0x50] sm:$0x1]
        %v2084 = vld [vmem:[%s1712 + $0x54] sm:$0xf]
        %v2085 = vld [vmem:[%s1712 + $0x58] sm:$0xf]
        %v2086 = vld [vmem:[%s1712 + $0x5c] sm:$0x1]
        %v2087 = vld [vmem:[%s1712 + $0x60] sm:$0xf]
        %v2088 = vld [vmem:[%s1712 + $0x64] sm:$0xf]
        %v2089 = vld [vmem:[%s1712 + $0x68] sm:$0x1]
        %v2090 = vld [vmem:[%s1712 + $0x6c] sm:$0xf]
        %v2091 = vld [vmem:[%s1712 + $0x70] sm:$0xf]
        %v2092 = vld [vmem:[%s1712 + $0x74] sm:$0x1]
        %v2093 = vld [vmem:[%s1712 + $0x78] sm:$0xf]
        %v2094 = vld [vmem:[%s1712 + $0x7c] sm:$0xf]
        %v2095 = vld [vmem:[%s1712 + $0x80] sm:$0x1]
        %v2096 = vld [vmem:[%s1712 + $0x84] sm:$0xf]
        %v2097 = vld [vmem:[%s1712 + $0x88] sm:$0xf]
        %v2098 = vld [vmem:[%s1712 + $0x8c] sm:$0x1]
        %v2099 = vld [vmem:[%s1712 + $0x90] sm:$0xf]
        %v2100 = vld [vmem:[%s1712 + $0x94] sm:$0xf]
        %v2101 = vld [vmem:[%s1712 + $0x98] sm:$0x1]
        %v2102 = vld [vmem:[%s1712 + $0x9c] sm:$0xf]
        %v2103 = vld [vmem:[%s1712 + $0xa0] sm:$0xf]
        %v2104 = vld [vmem:[%s1712 + $0xa4] sm:$0x1]
        %v2105 = vld [vmem:[%s1712 + $0xa8] sm:$0xf]
        %v2106 = vld [vmem:[%s1712 + $0xac] sm:$0xf]
        %v2107 = vld [vmem:[%s1712 + $0xb0] sm:$0x1]
        %v2108 = vld [vmem:[%s1712 + $0xb4] sm:$0xf]
        %v2109 = vld [vmem:[%s1712 + $0xb8] sm:$0xf]
        %v2110 = vld [vmem:[%s1712 + $0xbc] sm:$0x1]
        %v2112 = vshrl.u32 %v2063, 16
        %v2114 = vrot.slane %v2112, 4
        %v2115 = vshll.u32 %v2063, 16
        %v2117 = vrot.slane %v2115, 5
        %v2118 = vor.u32 %v2114, %v2117
        %v2119 = vrot.slane %v2118, 4
        %v2121 = vshll.u32 %v2064, 16
        %v2123 = vrot.slane %v2121, 5
        %v2124 = vsel %vm541, %v2119, %v2123
        %v2125 = vshrl.u32 %v2064, 16
        %v2127 = vrot.slane %v2125, 4
        %v2128 = vor.u32 %v2127, %v2123
        %v2129 = vrot.slane %v2128, 4
        %v2131 = vshll.u32 %v2065, 16
        %v2133 = vrot.slane %v2131, 5
        %v2134 = vsel %vm541, %v2129, %v2133
        %v2136 = vshrl.u32 %v2066, 16
        %v2138 = vrot.slane %v2136, 4
        %v2139 = vshll.u32 %v2066, 16
        %v2141 = vrot.slane %v2139, 5
        %v2142 = vor.u32 %v2138, %v2141
        %v2143 = vrot.slane %v2142, 4
        %v2145 = vshll.u32 %v2067, 16
        %v2147 = vrot.slane %v2145, 5
        %v2148 = vsel %vm541, %v2143, %v2147
        %v2149 = vshrl.u32 %v2067, 16
        %v2151 = vrot.slane %v2149, 4
        %v2152 = vor.u32 %v2151, %v2147
        %v2153 = vrot.slane %v2152, 4
        %v2155 = vshll.u32 %v2068, 16
        %v2157 = vrot.slane %v2155, 5
        %v2158 = vsel %vm541, %v2153, %v2157
        %v2160 = vshrl.u32 %v2069, 16
        %v2162 = vrot.slane %v2160, 4
        %v2163 = vshll.u32 %v2069, 16
        %v2165 = vrot.slane %v2163, 5
        %v2166 = vor.u32 %v2162, %v2165
        %v2167 = vrot.slane %v2166, 4
        %v2169 = vshll.u32 %v2070, 16
        %v2171 = vrot.slane %v2169, 5
        %v2172 = vsel %vm541, %v2167, %v2171
        %v2173 = vshrl.u32 %v2070, 16
        %v2175 = vrot.slane %v2173, 4
        %v2176 = vor.u32 %v2175, %v2171
        %v2177 = vrot.slane %v2176, 4
        %v2179 = vshll.u32 %v2071, 16
        %v2181 = vrot.slane %v2179, 5
        %v2182 = vsel %vm541, %v2177, %v2181
        %v2184 = vshrl.u32 %v2072, 16
        %v2186 = vrot.slane %v2184, 4
        %v2187 = vshll.u32 %v2072, 16
        %v2189 = vrot.slane %v2187, 5
        %v2190 = vor.u32 %v2186, %v2189
        %v2191 = vrot.slane %v2190, 4
        %v2193 = vshll.u32 %v2073, 16
        %v2195 = vrot.slane %v2193, 5
        %v2196 = vsel %vm541, %v2191, %v2195
        %v2197 = vshrl.u32 %v2073, 16
        %v2199 = vrot.slane %v2197, 4
        %v2200 = vor.u32 %v2199, %v2195
        %v2201 = vrot.slane %v2200, 4
        %v2203 = vshll.u32 %v2074, 16
        %v2205 = vrot.slane %v2203, 5
        %v2206 = vsel %vm541, %v2201, %v2205
        %v2208 = vshrl.u32 %v2075, 16
        %v2210 = vrot.slane %v2208, 4
        %v2211 = vshll.u32 %v2075, 16
        %v2213 = vrot.slane %v2211, 5
        %v2214 = vor.u32 %v2210, %v2213
        %v2215 = vrot.slane %v2214, 4
        %v2217 = vshll.u32 %v2076, 16
        %v2219 = vrot.slane %v2217, 5
        %v2220 = vsel %vm541, %v2215, %v2219
        %v2221 = vshrl.u32 %v2076, 16
        %v2223 = vrot.slane %v2221, 4
        %v2224 = vor.u32 %v2223, %v2219
        %v2225 = vrot.slane %v2224, 4
        %v2227 = vshll.u32 %v2077, 16
        %v2229 = vrot.slane %v2227, 5
        %v2230 = vsel %vm541, %v2225, %v2229
        %v2232 = vshrl.u32 %v2078, 16
        %v2234 = vrot.slane %v2232, 4
        %v2235 = vshll.u32 %v2078, 16
        %v2237 = vrot.slane %v2235, 5
        %v2238 = vor.u32 %v2234, %v2237
        %v2239 = vrot.slane %v2238, 4
        %v2241 = vshll.u32 %v2079, 16
        %v2243 = vrot.slane %v2241, 5
        %v2244 = vsel %vm541, %v2239, %v2243
        %v2245 = vshrl.u32 %v2079, 16
        %v2247 = vrot.slane %v2245, 4
        %v2248 = vor.u32 %v2247, %v2243
        %v2249 = vrot.slane %v2248, 4
        %v2251 = vshll.u32 %v2080, 16
        %v2253 = vrot.slane %v2251, 5
        %v2254 = vsel %vm541, %v2249, %v2253
        %v2256 = vshrl.u32 %v2081, 16
        %v2258 = vrot.slane %v2256, 4
        %v2259 = vshll.u32 %v2081, 16
        %v2261 = vrot.slane %v2259, 5
        %v2262 = vor.u32 %v2258, %v2261
        %v2263 = vrot.slane %v2262, 4
        %v2265 = vshll.u32 %v2082, 16
        %v2267 = vrot.slane %v2265, 5
        %v2268 = vsel %vm541, %v2263, %v2267
        %v2269 = vshrl.u32 %v2082, 16
        %v2271 = vrot.slane %v2269, 4
        %v2272 = vor.u32 %v2271, %v2267
        %v2273 = vrot.slane %v2272, 4
        %v2275 = vshll.u32 %v2083, 16
        %v2277 = vrot.slane %v2275, 5
        %v2278 = vsel %vm541, %v2273, %v2277
        %v2280 = vshrl.u32 %v2084, 16
        %v2282 = vrot.slane %v2280, 4
        %v2283 = vshll.u32 %v2084, 16
        %v2285 = vrot.slane %v2283, 5
        %v2286 = vor.u32 %v2282, %v2285
        %v2287 = vrot.slane %v2286, 4
        %v2289 = vshll.u32 %v2085, 16
        %v2291 = vrot.slane %v2289, 5
        %v2292 = vsel %vm541, %v2287, %v2291
        %v2293 = vshrl.u32 %v2085, 16
        %v2295 = vrot.slane %v2293, 4
        %v2296 = vor.u32 %v2295, %v2291
        %v2297 = vrot.slane %v2296, 4
        %v2299 = vshll.u32 %v2086, 16
        %v2301 = vrot.slane %v2299, 5
        %v2302 = vsel %vm541, %v2297, %v2301
        %v2304 = vshrl.u32 %v2087, 16
        %v2306 = vrot.slane %v2304, 4
        %v2307 = vshll.u32 %v2087, 16
        %v2309 = vrot.slane %v2307, 5
        %v2310 = vor.u32 %v2306, %v2309
        %v2311 = vrot.slane %v2310, 4
        %v2313 = vshll.u32 %v2088, 16
        %v2315 = vrot.slane %v2313, 5
        %v2316 = vsel %vm541, %v2311, %v2315
        %v2317 = vshrl.u32 %v2088, 16
        %v2319 = vrot.slane %v2317, 4
        %v2320 = vor.u32 %v2319, %v2315
        %v2321 = vrot.slane %v2320, 4
        %v2323 = vshll.u32 %v2089, 16
        %v2325 = vrot.slane %v2323, 5
        %v2326 = vsel %vm541, %v2321, %v2325
        %v2328 = vshrl.u32 %v2090, 16
        %v2330 = vrot.slane %v2328, 4
        %v2331 = vshll.u32 %v2090, 16
        %v2333 = vrot.slane %v2331, 5
        %v2334 = vor.u32 %v2330, %v2333
        %v2335 = vrot.slane %v2334, 4
        %v2337 = vshll.u32 %v2091, 16
        %v2339 = vrot.slane %v2337, 5
        %v2340 = vsel %vm541, %v2335, %v2339
        %v2341 = vshrl.u32 %v2091, 16
        %v2343 = vrot.slane %v2341, 4
        %v2344 = vor.u32 %v2343, %v2339
        %v2345 = vrot.slane %v2344, 4
        %v2347 = vshll.u32 %v2092, 16
        %v2349 = vrot.slane %v2347, 5
        %v2350 = vsel %vm541, %v2345, %v2349
        %v2352 = vshrl.u32 %v2093, 16
        %v2354 = vrot.slane %v2352, 4
        %v2355 = vshll.u32 %v2093, 16
        %v2357 = vrot.slane %v2355, 5
        %v2358 = vor.u32 %v2354, %v2357
        %v2359 = vrot.slane %v2358, 4
        %v2361 = vshll.u32 %v2094, 16
        %v2363 = vrot.slane %v2361, 5
        %v2364 = vsel %vm541, %v2359, %v2363
        %v2365 = vshrl.u32 %v2094, 16
        %v2367 = vrot.slane %v2365, 4
        %v2368 = vor.u32 %v2367, %v2363
        %v2369 = vrot.slane %v2368, 4
        %v2371 = vshll.u32 %v2095, 16
        %v2373 = vrot.slane %v2371, 5
        %v2374 = vsel %vm541, %v2369, %v2373
        %v2376 = vshrl.u32 %v2096, 16
        %v2378 = vrot.slane %v2376, 4
        %v2379 = vshll.u32 %v2096, 16
        %v2381 = vrot.slane %v2379, 5
        %v2382 = vor.u32 %v2378, %v2381
        %v2383 = vrot.slane %v2382, 4
        %v2385 = vshll.u32 %v2097, 16
        %v2387 = vrot.slane %v2385, 5
        %v2388 = vsel %vm541, %v2383, %v2387
        %v2389 = vshrl.u32 %v2097, 16
        %v2391 = vrot.slane %v2389, 4
        %v2392 = vor.u32 %v2391, %v2387
        %v2393 = vrot.slane %v2392, 4
        %v2395 = vshll.u32 %v2098, 16
        %v2397 = vrot.slane %v2395, 5
        %v2398 = vsel %vm541, %v2393, %v2397
        %v2400 = vshrl.u32 %v2099, 16
        %v2402 = vrot.slane %v2400, 4
        %v2403 = vshll.u32 %v2099, 16
        %v2405 = vrot.slane %v2403, 5
        %v2406 = vor.u32 %v2402, %v2405
        %v2407 = vrot.slane %v2406, 4
        %v2409 = vshll.u32 %v2100, 16
        %v2411 = vrot.slane %v2409, 5
        %v2412 = vsel %vm541, %v2407, %v2411
        %v2413 = vshrl.u32 %v2100, 16
        %v2415 = vrot.slane %v2413, 4
        %v2416 = vor.u32 %v2415, %v2411
        %v2417 = vrot.slane %v2416, 4
        %v2419 = vshll.u32 %v2101, 16
        %v2421 = vrot.slane %v2419, 5
        %v2422 = vsel %vm541, %v2417, %v2421
        %v2424 = vshrl.u32 %v2102, 16
        %v2426 = vrot.slane %v2424, 4
        %v2427 = vshll.u32 %v2102, 16
        %v2429 = vrot.slane %v2427, 5
        %v2430 = vor.u32 %v2426, %v2429
        %v2431 = vrot.slane %v2430, 4
        %v2433 = vshll.u32 %v2103, 16
        %v2435 = vrot.slane %v2433, 5
        %v2436 = vsel %vm541, %v2431, %v2435
        %v2437 = vshrl.u32 %v2103, 16
        %v2439 = vrot.slane %v2437, 4
        %v2440 = vor.u32 %v2439, %v2435
        %v2441 = vrot.slane %v2440, 4
        %v2443 = vshll.u32 %v2104, 16
        %v2445 = vrot.slane %v2443, 5
        %v2446 = vsel %vm541, %v2441, %v2445
        %v2448 = vshrl.u32 %v2105, 16
        %v2450 = vrot.slane %v2448, 4
        %v2451 = vshll.u32 %v2105, 16
        %v2453 = vrot.slane %v2451, 5
        %v2454 = vor.u32 %v2450, %v2453
        %v2455 = vrot.slane %v2454, 4
        %v2457 = vshll.u32 %v2106, 16
        %v2459 = vrot.slane %v2457, 5
        %v2460 = vsel %vm541, %v2455, %v2459
        %v2461 = vshrl.u32 %v2106, 16
        %v2463 = vrot.slane %v2461, 4
        %v2464 = vor.u32 %v2463, %v2459
        %v2465 = vrot.slane %v2464, 4
        %v2467 = vshll.u32 %v2107, 16
        %v2469 = vrot.slane %v2467, 5
        %v2470 = vsel %vm541, %v2465, %v2469
        %v2472 = vshrl.u32 %v2108, 16
        %v2474 = vrot.slane %v2472, 4
        %v2475 = vshll.u32 %v2108, 16
        %v2477 = vrot.slane %v2475, 5
        %v2478 = vor.u32 %v2474, %v2477
        %v2479 = vrot.slane %v2478, 4
        %v2481 = vshll.u32 %v2109, 16
        %v2483 = vrot.slane %v2481, 5
        %v2484 = vsel %vm541, %v2479, %v2483
        %v2485 = vshrl.u32 %v2109, 16
        %v2487 = vrot.slane %v2485, 4
        %v2488 = vor.u32 %v2487, %v2483
        %v2489 = vrot.slane %v2488, 4
        %v2491 = vshll.u32 %v2110, 16
        %v2493 = vrot.slane %v2491, 5
        %v2494 = vsel %vm541, %v2489, %v2493
        %s2495 = scalar_lea.vmem %s1, 8
        %v2496 = vld [vmem:[%s2495] sm:$0x3]
        %v2497 = vunpack.c.l.b16 %v2124
        %v2498 = vunpack.c.l.b16 %v2134
        %v2499 = vunpack.c.l.b16 %v2148
        %v2500 = vunpack.c.l.b16 %v2158
        %v2501 = vunpack.c.l.b16 %v2172
        %v2502 = vunpack.c.l.b16 %v2182
        %v2503 = vunpack.c.l.b16 %v2196
        %v2504 = vunpack.c.l.b16 %v2206
        %v2505 = vunpack.c.l.b16 %v2220
        %v2506 = vunpack.c.l.b16 %v2230
        %v2507 = vunpack.c.l.b16 %v2244
        %v2508 = vunpack.c.l.b16 %v2254
        %v2509 = vunpack.c.l.b16 %v2268
        %v2510 = vunpack.c.l.b16 %v2278
        %v2511 = vunpack.c.l.b16 %v2292
        %v2512 = vunpack.c.l.b16 %v2302
        %v2513 = vunpack.c.l.b16 %v2316
        %v2514 = vunpack.c.l.b16 %v2326
        %v2515 = vunpack.c.l.b16 %v2340
        %v2516 = vunpack.c.l.b16 %v2350
        %v2517 = vunpack.c.l.b16 %v2364
        %v2518 = vunpack.c.l.b16 %v2374
        %v2519 = vunpack.c.l.b16 %v2388
        %v2520 = vunpack.c.l.b16 %v2398
        %v2521 = vunpack.c.l.b16 %v2412
        %v2522 = vunpack.c.l.b16 %v2422
        %v2523 = vunpack.c.l.b16 %v2436
        %v2524 = vunpack.c.l.b16 %v2446
        %v2525 = vunpack.c.l.b16 %v2460
        %v2526 = vunpack.c.l.b16 %v2470
        %v2527 = vunpack.c.l.b16 %v2484
        %v2528 = vunpack.c.l.b16 %v2494
        %v2529 = vpack.c.b16 %v2498, %v2497
        %v2530 = vpack.c.b16 %v2500, %v2499
        %v2531 = vpack.c.b16 %v2502, %v2501
        %v2532 = vpack.c.b16 %v2504, %v2503
        %v2533 = vpack.c.b16 %v2506, %v2505
        %v2534 = vpack.c.b16 %v2508, %v2507
        %v2535 = vpack.c.b16 %v2510, %v2509
        %v2536 = vpack.c.b16 %v2512, %v2511
        %v2537 = vpack.c.b16 %v2514, %v2513
        %v2538 = vpack.c.b16 %v2516, %v2515
        %v2539 = vpack.c.b16 %v2518, %v2517
        %v2540 = vpack.c.b16 %v2520, %v2519
        %v2541 = vpack.c.b16 %v2522, %v2521
        %v2542 = vpack.c.b16 %v2524, %v2523
        %v2543 = vpack.c.b16 %v2526, %v2525
        %v2544 = vpack.c.b16 %v2528, %v2527
        %v2546 = vsel %vm317, %v2529, 0
        %v2549 = vsel %vm317, %v2530, 0
        %v2552 = vsel %vm317, %v2531, 0
        %v2555 = vsel %vm317, %v2532, 0
        %v2558 = vsel %vm317, %v2533, 0
        %v2561 = vsel %vm317, %v2534, 0
        %v2564 = vsel %vm317, %v2535, 0
        %v2567 = vsel %vm317, %v2536, 0
        %v2570 = vsel %vm317, %v2537, 0
        %v2573 = vsel %vm317, %v2538, 0
        %v2576 = vsel %vm317, %v2539, 0
        %v2579 = vsel %vm317, %v2540, 0
        %v2582 = vsel %vm317, %v2541, 0
        %v2585 = vsel %vm317, %v2542, 0
        %v2588 = vsel %vm317, %v2543, 0
        %v2591 = vsel %vm317, %v2544, 0
        %v2594 = vsel %vm366, %v2496, 0
        %2596 = vmatpush.bf16.msra.mxu0 0
        %2597 = vmatpush.bf16.msra.mxu0 0
        %2598 = vmatpush.bf16.msra.mxu0 0
        %2599 = vmatpush.bf16.msra.mxu0 0
        %2600 = vmatpush.bf16.msra.mxu0 0
        %2601 = vmatpush.bf16.msra.mxu0 0
        %2602 = vmatpush.bf16.msra.mxu0 0
        %2603 = vmatpush.bf16.msra.mxu0 %v2594
        %2604 = vmatmul.bf16.gmra.mxu0 %v2546
        %v2605 = vpop.f32.mrf.mxu0
        %v2606 = vadd.f32 0.0, %v2605
        %v2607 = vpop.f32.mrf.mxu0
        %v2608 = vadd.f32 0.0, %v2607
        %2609 = vmatmul.bf16.gmra.mxu0 %v2549
        %v2610 = vpop.f32.mrf.mxu0
        %v2611 = vadd.f32 0.0, %v2610
        %v2612 = vpop.f32.mrf.mxu0
        %v2613 = vadd.f32 0.0, %v2612
        %2614 = vmatmul.bf16.gmra.mxu0 %v2552
        %v2615 = vpop.f32.mrf.mxu0
        %v2616 = vadd.f32 0.0, %v2615
        %v2617 = vpop.f32.mrf.mxu0
        %v2618 = vadd.f32 0.0, %v2617
        %2619 = vmatmul.bf16.gmra.mxu0 %v2555
        %v2620 = vpop.f32.mrf.mxu0
        %v2621 = vadd.f32 0.0, %v2620
        %v2622 = vpop.f32.mrf.mxu0
        %v2623 = vadd.f32 0.0, %v2622
        %2624 = vmatmul.bf16.gmra.mxu0 %v2558
        %v2625 = vpop.f32.mrf.mxu0
        %v2626 = vadd.f32 0.0, %v2625
        %v2627 = vpop.f32.mrf.mxu0
        %v2628 = vadd.f32 0.0, %v2627
        %2629 = vmatmul.bf16.gmra.mxu0 %v2561
        %v2630 = vpop.f32.mrf.mxu0
        %v2631 = vadd.f32 0.0, %v2630
        %v2632 = vpop.f32.mrf.mxu0
        %v2633 = vadd.f32 0.0, %v2632
        %2634 = vmatmul.bf16.gmra.mxu0 %v2564
        %v2635 = vpop.f32.mrf.mxu0
        %v2636 = vadd.f32 0.0, %v2635
        %v2637 = vpop.f32.mrf.mxu0
        %v2638 = vadd.f32 0.0, %v2637
        %2639 = vmatmul.bf16.gmra.mxu0 %v2567
        %v2640 = vpop.f32.mrf.mxu0
        %v2641 = vadd.f32 0.0, %v2640
        %v2642 = vpop.f32.mrf.mxu0
        %v2643 = vadd.f32 0.0, %v2642
        %2644 = vmatmul.bf16.gmra.mxu0 %v2570
        %v2645 = vpop.f32.mrf.mxu0
        %v2646 = vadd.f32 0.0, %v2645
        %v2647 = vpop.f32.mrf.mxu0
        %v2648 = vadd.f32 0.0, %v2647
        %2649 = vmatmul.bf16.gmra.mxu0 %v2573
        %v2650 = vpop.f32.mrf.mxu0
        %v2651 = vadd.f32 0.0, %v2650
        %v2652 = vpop.f32.mrf.mxu0
        %v2653 = vadd.f32 0.0, %v2652
        %2654 = vmatmul.bf16.gmra.mxu0 %v2576
        %v2655 = vpop.f32.mrf.mxu0
        %v2656 = vadd.f32 0.0, %v2655
        %v2657 = vpop.f32.mrf.mxu0
        %v2658 = vadd.f32 0.0, %v2657
        %2659 = vmatmul.bf16.gmra.mxu0 %v2579
        %v2660 = vpop.f32.mrf.mxu0
        %v2661 = vadd.f32 0.0, %v2660
        %v2662 = vpop.f32.mrf.mxu0
        %v2663 = vadd.f32 0.0, %v2662
        %2664 = vmatmul.bf16.gmra.mxu0 %v2582
        %v2665 = vpop.f32.mrf.mxu0
        %v2666 = vadd.f32 0.0, %v2665
        %v2667 = vpop.f32.mrf.mxu0
        %v2668 = vadd.f32 0.0, %v2667
        %2669 = vmatmul.bf16.gmra.mxu0 %v2585
        %v2670 = vpop.f32.mrf.mxu0
        %v2671 = vadd.f32 0.0, %v2670
        %v2672 = vpop.f32.mrf.mxu0
        %v2673 = vadd.f32 0.0, %v2672
        %2674 = vmatmul.bf16.gmra.mxu0 %v2588
        %v2675 = vpop.f32.mrf.mxu0
        %v2676 = vadd.f32 0.0, %v2675
        %v2677 = vpop.f32.mrf.mxu0
        %v2678 = vadd.f32 0.0, %v2677
        %2679 = vmatmul.bf16.gmra.mxu0 %v2591
        %v2680 = vpop.f32.mrf.mxu0
        %v2681 = vadd.f32 0.0, %v2680
        %v2682 = vpop.f32.mrf.mxu0
        %v2683 = vadd.f32 0.0, %v2682
        %2684 = vdwg.mxu0
        %v2685 = vld [vmem:[%s183] sm:$0xff]
        %v2686 = vld [vmem:[%s183 + $0x8] sm:$0xff]
        %v2687 = vld [vmem:[%s183 + $0x10] sm:$0xff]
        %v2688 = vld [vmem:[%s183 + $0x18] sm:$0xff]
        %v2689 = vld [vmem:[%s183 + $0x20] sm:$0xff]
        %v2690 = vld [vmem:[%s183 + $0x28] sm:$0xff]
        %v2691 = vld [vmem:[%s183 + $0x30] sm:$0xff]
        %v2692 = vld [vmem:[%s183 + $0x38] sm:$0xff]
        %v2693 = vld [vmem:[%s183 + $0x40] sm:$0xff]
        %v2694 = vld [vmem:[%s183 + $0x48] sm:$0xff]
        %v2695 = vld [vmem:[%s183 + $0x50] sm:$0xff]
        %v2696 = vld [vmem:[%s183 + $0x58] sm:$0xff]
        %v2697 = vld [vmem:[%s183 + $0x60] sm:$0xff]
        %v2698 = vld [vmem:[%s183 + $0x68] sm:$0xff]
        %v2699 = vld [vmem:[%s183 + $0x70] sm:$0xff]
        %v2700 = vld [vmem:[%s183 + $0x78] sm:$0xff]
        %v2701 = vld [vmem:[%s183 + $0x80] sm:$0xff]
        %v2702 = vld [vmem:[%s183 + $0x88] sm:$0xff]
        %v2703 = vld [vmem:[%s183 + $0x90] sm:$0xff]
        %v2704 = vld [vmem:[%s183 + $0x98] sm:$0xff]
        %v2705 = vld [vmem:[%s183 + $0xa0] sm:$0xff]
        %v2706 = vld [vmem:[%s183 + $0xa8] sm:$0xff]
        %v2707 = vld [vmem:[%s183 + $0xb0] sm:$0xff]
        %v2708 = vld [vmem:[%s183 + $0xb8] sm:$0xff]
        %v2709 = vld [vmem:[%s183 + $0xc0] sm:$0xff]
        %v2710 = vld [vmem:[%s183 + $0xc8] sm:$0xff]
        %v2711 = vld [vmem:[%s183 + $0xd0] sm:$0xff]
        %v2712 = vld [vmem:[%s183 + $0xd8] sm:$0xff]
        %v2713 = vld [vmem:[%s183 + $0xe0] sm:$0xff]
        %v2714 = vld [vmem:[%s183 + $0xe8] sm:$0xff]
        %v2715 = vld [vmem:[%s183 + $0xf0] sm:$0xff]
        %v2716 = vld [vmem:[%s183 + $0xf8] sm:$0xff]
        %v2717 = vadd.f32 %v2685, %v2606
        %v2718 = vadd.f32 %v2686, %v2608
        %v2719 = vadd.f32 %v2687, %v2611
        %v2720 = vadd.f32 %v2688, %v2613
        %v2721 = vadd.f32 %v2689, %v2616
        %v2722 = vadd.f32 %v2690, %v2618
        %v2723 = vadd.f32 %v2691, %v2621
        %v2724 = vadd.f32 %v2692, %v2623
        %v2725 = vadd.f32 %v2693, %v2626
        %v2726 = vadd.f32 %v2694, %v2628
        %v2727 = vadd.f32 %v2695, %v2631
        %v2728 = vadd.f32 %v2696, %v2633
        %v2729 = vadd.f32 %v2697, %v2636
        %v2730 = vadd.f32 %v2698, %v2638
        %v2731 = vadd.f32 %v2699, %v2641
        %v2732 = vadd.f32 %v2700, %v2643
        %v2733 = vadd.f32 %v2701, %v2646
        %v2734 = vadd.f32 %v2702, %v2648
        %v2735 = vadd.f32 %v2703, %v2651
        %v2736 = vadd.f32 %v2704, %v2653
        %v2737 = vadd.f32 %v2705, %v2656
        %v2738 = vadd.f32 %v2706, %v2658
        %v2739 = vadd.f32 %v2707, %v2661
        %v2740 = vadd.f32 %v2708, %v2663
        %v2741 = vadd.f32 %v2709, %v2666
        %v2742 = vadd.f32 %v2710, %v2668
        %v2743 = vadd.f32 %v2711, %v2671
        %v2744 = vadd.f32 %v2712, %v2673
        %v2745 = vadd.f32 %v2713, %v2676
        %v2746 = vadd.f32 %v2714, %v2678
        %v2747 = vadd.f32 %v2715, %v2681
        %v2748 = vadd.f32 %v2716, %v2683
        %2749 = vst [vmem:[%s183] sm:$0xff] %v2717
        %2750 = vst [vmem:[%s183 + $0x8] sm:$0xff] %v2718
        %2751 = vst [vmem:[%s183 + $0x10] sm:$0xff] %v2719
        %2752 = vst [vmem:[%s183 + $0x18] sm:$0xff] %v2720
        %2753 = vst [vmem:[%s183 + $0x20] sm:$0xff] %v2721
        %2754 = vst [vmem:[%s183 + $0x28] sm:$0xff] %v2722
        %2755 = vst [vmem:[%s183 + $0x30] sm:$0xff] %v2723
        %2756 = vst [vmem:[%s183 + $0x38] sm:$0xff] %v2724
        %2757 = vst [vmem:[%s183 + $0x40] sm:$0xff] %v2725
        %2758 = vst [vmem:[%s183 + $0x48] sm:$0xff] %v2726
        %2759 = vst [vmem:[%s183 + $0x50] sm:$0xff] %v2727
        %2760 = vst [vmem:[%s183 + $0x58] sm:$0xff] %v2728
        %2761 = vst [vmem:[%s183 + $0x60] sm:$0xff] %v2729
        %2762 = vst [vmem:[%s183 + $0x68] sm:$0xff] %v2730
        %2763 = vst [vmem:[%s183 + $0x70] sm:$0xff] %v2731
        %2764 = vst [vmem:[%s183 + $0x78] sm:$0xff] %v2732
        %2765 = vst [vmem:[%s183 + $0x80] sm:$0xff] %v2733
        %2766 = vst [vmem:[%s183 + $0x88] sm:$0xff] %v2734
        %2767 = vst [vmem:[%s183 + $0x90] sm:$0xff] %v2735
        %2768 = vst [vmem:[%s183 + $0x98] sm:$0xff] %v2736
        %2769 = vst [vmem:[%s183 + $0xa0] sm:$0xff] %v2737
        %2770 = vst [vmem:[%s183 + $0xa8] sm:$0xff] %v2738
        %2771 = vst [vmem:[%s183 + $0xb0] sm:$0xff] %v2739
        %2772 = vst [vmem:[%s183 + $0xb8] sm:$0xff] %v2740
        %2773 = vst [vmem:[%s183 + $0xc0] sm:$0xff] %v2741
        %2774 = vst [vmem:[%s183 + $0xc8] sm:$0xff] %v2742
        %2775 = vst [vmem:[%s183 + $0xd0] sm:$0xff] %v2743
        %2776 = vst [vmem:[%s183 + $0xd8] sm:$0xff] %v2744
        %2777 = vst [vmem:[%s183 + $0xe0] sm:$0xff] %v2745
        %2778 = vst [vmem:[%s183 + $0xe8] sm:$0xff] %v2746
        %2779 = vst [vmem:[%s183 + $0xf0] sm:$0xff] %v2747
        %2780 = vst [vmem:[%s183 + $0xf8] sm:$0xff] %v2748
        %v2781 = vld [vmem:[%s1712] sm:$0xe]
        %v2782 = vld [vmem:[%s1712 + $0x4] sm:$0xf]
        %v2783 = vld [vmem:[%s1712 + $0x8] sm:$0x1]
        %v2784 = vld [vmem:[%s1712 + $0xc] sm:$0xe]
        %v2785 = vld [vmem:[%s1712 + $0x10] sm:$0xf]
        %v2786 = vld [vmem:[%s1712 + $0x14] sm:$0x1]
        %v2787 = vld [vmem:[%s1712 + $0x18] sm:$0xe]
        %v2788 = vld [vmem:[%s1712 + $0x1c] sm:$0xf]
        %v2789 = vld [vmem:[%s1712 + $0x20] sm:$0x1]
        %v2790 = vld [vmem:[%s1712 + $0x24] sm:$0xe]
        %v2791 = vld [vmem:[%s1712 + $0x28] sm:$0xf]
        %v2792 = vld [vmem:[%s1712 + $0x2c] sm:$0x1]
        %v2793 = vld [vmem:[%s1712 + $0x30] sm:$0xe]
        %v2794 = vld [vmem:[%s1712 + $0x34] sm:$0xf]
        %v2795 = vld [vmem:[%s1712 + $0x38] sm:$0x1]
        %v2796 = vld [vmem:[%s1712 + $0x3c] sm:$0xe]
        %v2797 = vld [vmem:[%s1712 + $0x40] sm:$0xf]
        %v2798 = vld [vmem:[%s1712 + $0x44] sm:$0x1]
        %v2799 = vld [vmem:[%s1712 + $0x48] sm:$0xe]
        %v2800 = vld [vmem:[%s1712 + $0x4c] sm:$0xf]
        %v2801 = vld [vmem:[%s1712 + $0x50] sm:$0x1]
        %v2802 = vld [vmem:[%s1712 + $0x54] sm:$0xe]
        %v2803 = vld [vmem:[%s1712 + $0x58] sm:$0xf]
        %v2804 = vld [vmem:[%s1712 + $0x5c] sm:$0x1]
        %v2805 = vld [vmem:[%s1712 + $0x60] sm:$0xe]
        %v2806 = vld [vmem:[%s1712 + $0x64] sm:$0xf]
        %v2807 = vld [vmem:[%s1712 + $0x68] sm:$0x1]
        %v2808 = vld [vmem:[%s1712 + $0x6c] sm:$0xe]
        %v2809 = vld [vmem:[%s1712 + $0x70] sm:$0xf]
        %v2810 = vld [vmem:[%s1712 + $0x74] sm:$0x1]
        %v2811 = vld [vmem:[%s1712 + $0x78] sm:$0xe]
        %v2812 = vld [vmem:[%s1712 + $0x7c] sm:$0xf]
        %v2813 = vld [vmem:[%s1712 + $0x80] sm:$0x1]
        %v2814 = vld [vmem:[%s1712 + $0x84] sm:$0xe]
        %v2815 = vld [vmem:[%s1712 + $0x88] sm:$0xf]
        %v2816 = vld [vmem:[%s1712 + $0x8c] sm:$0x1]
        %v2817 = vld [vmem:[%s1712 + $0x90] sm:$0xe]
        %v2818 = vld [vmem:[%s1712 + $0x94] sm:$0xf]
        %v2819 = vld [vmem:[%s1712 + $0x98] sm:$0x1]
        %v2820 = vld [vmem:[%s1712 + $0x9c] sm:$0xe]
        %v2821 = vld [vmem:[%s1712 + $0xa0] sm:$0xf]
        %v2822 = vld [vmem:[%s1712 + $0xa4] sm:$0x1]
        %v2823 = vld [vmem:[%s1712 + $0xa8] sm:$0xe]
        %v2824 = vld [vmem:[%s1712 + $0xac] sm:$0xf]
        %v2825 = vld [vmem:[%s1712 + $0xb0] sm:$0x1]
        %v2826 = vld [vmem:[%s1712 + $0xb4] sm:$0xe]
        %v2827 = vld [vmem:[%s1712 + $0xb8] sm:$0xf]
        %v2828 = vld [vmem:[%s1712 + $0xbc] sm:$0x1]
        %v2877 = vrot.slane %v2781, 5
        %v2878 = vrot.slane %v2877, 4
        %v2879 = vrot.slane %v2782, 5
        %v2880 = vsel %vm1310, %v2878, %v2879
        %v2881 = vrot.slane %v2879, 4
        %v2882 = vrot.slane %v2783, 5
        %v2883 = vsel %vm1310, %v2881, %v2882
        %v2884 = vrot.slane %v2784, 5
        %v2885 = vrot.slane %v2884, 4
        %v2886 = vrot.slane %v2785, 5
        %v2887 = vsel %vm1310, %v2885, %v2886
        %v2888 = vrot.slane %v2886, 4
        %v2889 = vrot.slane %v2786, 5
        %v2890 = vsel %vm1310, %v2888, %v2889
        %v2891 = vrot.slane %v2787, 5
        %v2892 = vrot.slane %v2891, 4
        %v2893 = vrot.slane %v2788, 5
        %v2894 = vsel %vm1310, %v2892, %v2893
        %v2895 = vrot.slane %v2893, 4
        %v2896 = vrot.slane %v2789, 5
        %v2897 = vsel %vm1310, %v2895, %v2896
        %v2898 = vrot.slane %v2790, 5
        %v2899 = vrot.slane %v2898, 4
        %v2900 = vrot.slane %v2791, 5
        %v2901 = vsel %vm1310, %v2899, %v2900
        %v2902 = vrot.slane %v2900, 4
        %v2903 = vrot.slane %v2792, 5
        %v2904 = vsel %vm1310, %v2902, %v2903
        %v2905 = vrot.slane %v2793, 5
        %v2906 = vrot.slane %v2905, 4
        %v2907 = vrot.slane %v2794, 5
        %v2908 = vsel %vm1310, %v2906, %v2907
        %v2909 = vrot.slane %v2907, 4
        %v2910 = vrot.slane %v2795, 5
        %v2911 = vsel %vm1310, %v2909, %v2910
        %v2912 = vrot.slane %v2796, 5
        %v2913 = vrot.slane %v2912, 4
        %v2914 = vrot.slane %v2797, 5
        %v2915 = vsel %vm1310, %v2913, %v2914
        %v2916 = vrot.slane %v2914, 4
        %v2917 = vrot.slane %v2798, 5
        %v2918 = vsel %vm1310, %v2916, %v2917
        %v2919 = vrot.slane %v2799, 5
        %v2920 = vrot.slane %v2919, 4
        %v2921 = vrot.slane %v2800, 5
        %v2922 = vsel %vm1310, %v2920, %v2921
        %v2923 = vrot.slane %v2921, 4
        %v2924 = vrot.slane %v2801, 5
        %v2925 = vsel %vm1310, %v2923, %v2924
        %v2926 = vrot.slane %v2802, 5
        %v2927 = vrot.slane %v2926, 4
        %v2928 = vrot.slane %v2803, 5
        %v2929 = vsel %vm1310, %v2927, %v2928
        %v2930 = vrot.slane %v2928, 4
        %v2931 = vrot.slane %v2804, 5
        %v2932 = vsel %vm1310, %v2930, %v2931
        %v2933 = vrot.slane %v2805, 5
        %v2934 = vrot.slane %v2933, 4
        %v2935 = vrot.slane %v2806, 5
        %v2936 = vsel %vm1310, %v2934, %v2935
        %v2937 = vrot.slane %v2935, 4
        %v2938 = vrot.slane %v2807, 5
        %v2939 = vsel %vm1310, %v2937, %v2938
        %v2940 = vrot.slane %v2808, 5
        %v2941 = vrot.slane %v2940, 4
        %v2942 = vrot.slane %v2809, 5
        %v2943 = vsel %vm1310, %v2941, %v2942
        %v2944 = vrot.slane %v2942, 4
        %v2945 = vrot.slane %v2810, 5
        %v2946 = vsel %vm1310, %v2944, %v2945
        %v2947 = vrot.slane %v2811, 5
        %v2948 = vrot.slane %v2947, 4
        %v2949 = vrot.slane %v2812, 5
        %v2950 = vsel %vm1310, %v2948, %v2949
        %v2951 = vrot.slane %v2949, 4
        %v2952 = vrot.slane %v2813, 5
        %v2953 = vsel %vm1310, %v2951, %v2952
        %v2954 = vrot.slane %v2814, 5
        %v2955 = vrot.slane %v2954, 4
        %v2956 = vrot.slane %v2815, 5
        %v2957 = vsel %vm1310, %v2955, %v2956
        %v2958 = vrot.slane %v2956, 4
        %v2959 = vrot.slane %v2816, 5
        %v2960 = vsel %vm1310, %v2958, %v2959
        %v2961 = vrot.slane %v2817, 5
        %v2962 = vrot.slane %v2961, 4
        %v2963 = vrot.slane %v2818, 5
        %v2964 = vsel %vm1310, %v2962, %v2963
        %v2965 = vrot.slane %v2963, 4
        %v2966 = vrot.slane %v2819, 5
        %v2967 = vsel %vm1310, %v2965, %v2966
        %v2968 = vrot.slane %v2820, 5
        %v2969 = vrot.slane %v2968, 4
        %v2970 = vrot.slane %v2821, 5
        %v2971 = vsel %vm1310, %v2969, %v2970
        %v2972 = vrot.slane %v2970, 4
        %v2973 = vrot.slane %v2822, 5
        %v2974 = vsel %vm1310, %v2972, %v2973
        %v2975 = vrot.slane %v2823, 5
        %v2976 = vrot.slane %v2975, 4
        %v2977 = vrot.slane %v2824, 5
        %v2978 = vsel %vm1310, %v2976, %v2977
        %v2979 = vrot.slane %v2977, 4
        %v2980 = vrot.slane %v2825, 5
        %v2981 = vsel %vm1310, %v2979, %v2980
        %v2982 = vrot.slane %v2826, 5
        %v2983 = vrot.slane %v2982, 4
        %v2984 = vrot.slane %v2827, 5
        %v2985 = vsel %vm1310, %v2983, %v2984
        %v2986 = vrot.slane %v2984, 4
        %v2987 = vrot.slane %v2828, 5
        %v2988 = vsel %vm1310, %v2986, %v2987
        %s2989 = scalar_lea.vmem %s1, 10
        %v2990 = vld [vmem:[%s2989] sm:$0x3]
        %v2991 = vunpack.c.l.b16 %v2880
        %v2992 = vunpack.c.l.b16 %v2883
        %v2993 = vunpack.c.l.b16 %v2887
        %v2994 = vunpack.c.l.b16 %v2890
        %v2995 = vunpack.c.l.b16 %v2894
        %v2996 = vunpack.c.l.b16 %v2897
        %v2997 = vunpack.c.l.b16 %v2901
        %v2998 = vunpack.c.l.b16 %v2904
        %v2999 = vunpack.c.l.b16 %v2908
        %v3000 = vunpack.c.l.b16 %v2911
        %v3001 = vunpack.c.l.b16 %v2915
        %v3002 = vunpack.c.l.b16 %v2918
        %v3003 = vunpack.c.l.b16 %v2922
        %v3004 = vunpack.c.l.b16 %v2925
        %v3005 = vunpack.c.l.b16 %v2929
        %v3006 = vunpack.c.l.b16 %v2932
        %v3007 = vunpack.c.l.b16 %v2936
        %v3008 = vunpack.c.l.b16 %v2939
        %v3009 = vunpack.c.l.b16 %v2943
        %v3010 = vunpack.c.l.b16 %v2946
        %v3011 = vunpack.c.l.b16 %v2950
        %v3012 = vunpack.c.l.b16 %v2953
        %v3013 = vunpack.c.l.b16 %v2957
        %v3014 = vunpack.c.l.b16 %v2960
        %v3015 = vunpack.c.l.b16 %v2964
        %v3016 = vunpack.c.l.b16 %v2967
        %v3017 = vunpack.c.l.b16 %v2971
        %v3018 = vunpack.c.l.b16 %v2974
        %v3019 = vunpack.c.l.b16 %v2978
        %v3020 = vunpack.c.l.b16 %v2981
        %v3021 = vunpack.c.l.b16 %v2985
        %v3022 = vunpack.c.l.b16 %v2988
        %v3023 = vpack.c.b16 %v2992, %v2991
        %v3024 = vpack.c.b16 %v2994, %v2993
        %v3025 = vpack.c.b16 %v2996, %v2995
        %v3026 = vpack.c.b16 %v2998, %v2997
        %v3027 = vpack.c.b16 %v3000, %v2999
        %v3028 = vpack.c.b16 %v3002, %v3001
        %v3029 = vpack.c.b16 %v3004, %v3003
        %v3030 = vpack.c.b16 %v3006, %v3005
        %v3031 = vpack.c.b16 %v3008, %v3007
        %v3032 = vpack.c.b16 %v3010, %v3009
        %v3033 = vpack.c.b16 %v3012, %v3011
        %v3034 = vpack.c.b16 %v3014, %v3013
        %v3035 = vpack.c.b16 %v3016, %v3015
        %v3036 = vpack.c.b16 %v3018, %v3017
        %v3037 = vpack.c.b16 %v3020, %v3019
        %v3038 = vpack.c.b16 %v3022, %v3021
        %v3040 = vsel %vm317, %v3023, 0
        %v3043 = vsel %vm317, %v3024, 0
        %v3046 = vsel %vm317, %v3025, 0
        %v3049 = vsel %vm317, %v3026, 0
        %v3052 = vsel %vm317, %v3027, 0
        %v3055 = vsel %vm317, %v3028, 0
        %v3058 = vsel %vm317, %v3029, 0
        %v3061 = vsel %vm317, %v3030, 0
        %v3064 = vsel %vm317, %v3031, 0
        %v3067 = vsel %vm317, %v3032, 0
        %v3070 = vsel %vm317, %v3033, 0
        %v3073 = vsel %vm317, %v3034, 0
        %v3076 = vsel %vm317, %v3035, 0
        %v3079 = vsel %vm317, %v3036, 0
        %v3082 = vsel %vm317, %v3037, 0
        %v3085 = vsel %vm317, %v3038, 0
        %v3088 = vsel %vm366, %v2990, 0
        %3090 = vmatpush.bf16.msra.mxu0 0
        %3091 = vmatpush.bf16.msra.mxu0 0
        %3092 = vmatpush.bf16.msra.mxu0 0
        %3093 = vmatpush.bf16.msra.mxu0 0
        %3094 = vmatpush.bf16.msra.mxu0 0
        %3095 = vmatpush.bf16.msra.mxu0 0
        %3096 = vmatpush.bf16.msra.mxu0 0
        %3097 = vmatpush.bf16.msra.mxu0 %v3088
        %3098 = vmatmul.bf16.gmra.mxu0 %v3040
        %v3099 = vpop.f32.mrf.mxu0
        %v3100 = vadd.f32 0.0, %v3099
        %v3101 = vpop.f32.mrf.mxu0
        %v3102 = vadd.f32 0.0, %v3101
        %3103 = vmatmul.bf16.gmra.mxu0 %v3043
        %v3104 = vpop.f32.mrf.mxu0
        %v3105 = vadd.f32 0.0, %v3104
        %v3106 = vpop.f32.mrf.mxu0
        %v3107 = vadd.f32 0.0, %v3106
        %3108 = vmatmul.bf16.gmra.mxu0 %v3046
        %v3109 = vpop.f32.mrf.mxu0
        %v3110 = vadd.f32 0.0, %v3109
        %v3111 = vpop.f32.mrf.mxu0
        %v3112 = vadd.f32 0.0, %v3111
        %3113 = vmatmul.bf16.gmra.mxu0 %v3049
        %v3114 = vpop.f32.mrf.mxu0
        %v3115 = vadd.f32 0.0, %v3114
        %v3116 = vpop.f32.mrf.mxu0
        %v3117 = vadd.f32 0.0, %v3116
        %3118 = vmatmul.bf16.gmra.mxu0 %v3052
        %v3119 = vpop.f32.mrf.mxu0
        %v3120 = vadd.f32 0.0, %v3119
        %v3121 = vpop.f32.mrf.mxu0
        %v3122 = vadd.f32 0.0, %v3121
        %3123 = vmatmul.bf16.gmra.mxu0 %v3055
        %v3124 = vpop.f32.mrf.mxu0
        %v3125 = vadd.f32 0.0, %v3124
        %v3126 = vpop.f32.mrf.mxu0
        %v3127 = vadd.f32 0.0, %v3126
        %3128 = vmatmul.bf16.gmra.mxu0 %v3058
        %v3129 = vpop.f32.mrf.mxu0
        %v3130 = vadd.f32 0.0, %v3129
        %v3131 = vpop.f32.mrf.mxu0
        %v3132 = vadd.f32 0.0, %v3131
        %3133 = vmatmul.bf16.gmra.mxu0 %v3061
        %v3134 = vpop.f32.mrf.mxu0
        %v3135 = vadd.f32 0.0, %v3134
        %v3136 = vpop.f32.mrf.mxu0
        %v3137 = vadd.f32 0.0, %v3136
        %3138 = vmatmul.bf16.gmra.mxu0 %v3064
        %v3139 = vpop.f32.mrf.mxu0
        %v3140 = vadd.f32 0.0, %v3139
        %v3141 = vpop.f32.mrf.mxu0
        %v3142 = vadd.f32 0.0, %v3141
        %3143 = vmatmul.bf16.gmra.mxu0 %v3067
        %v3144 = vpop.f32.mrf.mxu0
        %v3145 = vadd.f32 0.0, %v3144
        %v3146 = vpop.f32.mrf.mxu0
        %v3147 = vadd.f32 0.0, %v3146
        %3148 = vmatmul.bf16.gmra.mxu0 %v3070
        %v3149 = vpop.f32.mrf.mxu0
        %v3150 = vadd.f32 0.0, %v3149
        %v3151 = vpop.f32.mrf.mxu0
        %v3152 = vadd.f32 0.0, %v3151
        %3153 = vmatmul.bf16.gmra.mxu0 %v3073
        %v3154 = vpop.f32.mrf.mxu0
        %v3155 = vadd.f32 0.0, %v3154
        %v3156 = vpop.f32.mrf.mxu0
        %v3157 = vadd.f32 0.0, %v3156
        %3158 = vmatmul.bf16.gmra.mxu0 %v3076
        %v3159 = vpop.f32.mrf.mxu0
        %v3160 = vadd.f32 0.0, %v3159
        %v3161 = vpop.f32.mrf.mxu0
        %v3162 = vadd.f32 0.0, %v3161
        %3163 = vmatmul.bf16.gmra.mxu0 %v3079
        %v3164 = vpop.f32.mrf.mxu0
        %v3165 = vadd.f32 0.0, %v3164
        %v3166 = vpop.f32.mrf.mxu0
        %v3167 = vadd.f32 0.0, %v3166
        %3168 = vmatmul.bf16.gmra.mxu0 %v3082
        %v3169 = vpop.f32.mrf.mxu0
        %v3170 = vadd.f32 0.0, %v3169
        %v3171 = vpop.f32.mrf.mxu0
        %v3172 = vadd.f32 0.0, %v3171
        %3173 = vmatmul.bf16.gmra.mxu0 %v3085
        %v3174 = vpop.f32.mrf.mxu0
        %v3175 = vadd.f32 0.0, %v3174
        %v3176 = vpop.f32.mrf.mxu0
        %v3177 = vadd.f32 0.0, %v3176
        %3178 = vdwg.mxu0
        %v3179 = vld [vmem:[%s183] sm:$0xff]
        %v3180 = vld [vmem:[%s183 + $0x8] sm:$0xff]
        %v3181 = vld [vmem:[%s183 + $0x10] sm:$0xff]
        %v3182 = vld [vmem:[%s183 + $0x18] sm:$0xff]
        %v3183 = vld [vmem:[%s183 + $0x20] sm:$0xff]
        %v3184 = vld [vmem:[%s183 + $0x28] sm:$0xff]
        %v3185 = vld [vmem:[%s183 + $0x30] sm:$0xff]
        %v3186 = vld [vmem:[%s183 + $0x38] sm:$0xff]
        %v3187 = vld [vmem:[%s183 + $0x40] sm:$0xff]
        %v3188 = vld [vmem:[%s183 + $0x48] sm:$0xff]
        %v3189 = vld [vmem:[%s183 + $0x50] sm:$0xff]
        %v3190 = vld [vmem:[%s183 + $0x58] sm:$0xff]
        %v3191 = vld [vmem:[%s183 + $0x60] sm:$0xff]
        %v3192 = vld [vmem:[%s183 + $0x68] sm:$0xff]
        %v3193 = vld [vmem:[%s183 + $0x70] sm:$0xff]
        %v3194 = vld [vmem:[%s183 + $0x78] sm:$0xff]
        %v3195 = vld [vmem:[%s183 + $0x80] sm:$0xff]
        %v3196 = vld [vmem:[%s183 + $0x88] sm:$0xff]
        %v3197 = vld [vmem:[%s183 + $0x90] sm:$0xff]
        %v3198 = vld [vmem:[%s183 + $0x98] sm:$0xff]
        %v3199 = vld [vmem:[%s183 + $0xa0] sm:$0xff]
        %v3200 = vld [vmem:[%s183 + $0xa8] sm:$0xff]
        %v3201 = vld [vmem:[%s183 + $0xb0] sm:$0xff]
        %v3202 = vld [vmem:[%s183 + $0xb8] sm:$0xff]
        %v3203 = vld [vmem:[%s183 + $0xc0] sm:$0xff]
        %v3204 = vld [vmem:[%s183 + $0xc8] sm:$0xff]
        %v3205 = vld [vmem:[%s183 + $0xd0] sm:$0xff]
        %v3206 = vld [vmem:[%s183 + $0xd8] sm:$0xff]
        %v3207 = vld [vmem:[%s183 + $0xe0] sm:$0xff]
        %v3208 = vld [vmem:[%s183 + $0xe8] sm:$0xff]
        %v3209 = vld [vmem:[%s183 + $0xf0] sm:$0xff]
        %v3210 = vld [vmem:[%s183 + $0xf8] sm:$0xff]
        %v3211 = vadd.f32 %v3179, %v3100
        %v3212 = vadd.f32 %v3180, %v3102
        %v3213 = vadd.f32 %v3181, %v3105
        %v3214 = vadd.f32 %v3182, %v3107
        %v3215 = vadd.f32 %v3183, %v3110
        %v3216 = vadd.f32 %v3184, %v3112
        %v3217 = vadd.f32 %v3185, %v3115
        %v3218 = vadd.f32 %v3186, %v3117
        %v3219 = vadd.f32 %v3187, %v3120
        %v3220 = vadd.f32 %v3188, %v3122
        %v3221 = vadd.f32 %v3189, %v3125
        %v3222 = vadd.f32 %v3190, %v3127
        %v3223 = vadd.f32 %v3191, %v3130
        %v3224 = vadd.f32 %v3192, %v3132
        %v3225 = vadd.f32 %v3193, %v3135
        %v3226 = vadd.f32 %v3194, %v3137
        %v3227 = vadd.f32 %v3195, %v3140
        %v3228 = vadd.f32 %v3196, %v3142
        %v3229 = vadd.f32 %v3197, %v3145
        %v3230 = vadd.f32 %v3198, %v3147
        %v3231 = vadd.f32 %v3199, %v3150
        %v3232 = vadd.f32 %v3200, %v3152
        %v3233 = vadd.f32 %v3201, %v3155
        %v3234 = vadd.f32 %v3202, %v3157
        %v3235 = vadd.f32 %v3203, %v3160
        %v3236 = vadd.f32 %v3204, %v3162
        %v3237 = vadd.f32 %v3205, %v3165
        %v3238 = vadd.f32 %v3206, %v3167
        %v3239 = vadd.f32 %v3207, %v3170
        %v3240 = vadd.f32 %v3208, %v3172
        %v3241 = vadd.f32 %v3209, %v3175
        %v3242 = vadd.f32 %v3210, %v3177
        %3243 = vst [vmem:[%s183] sm:$0xff] %v3211
        %3244 = vst [vmem:[%s183 + $0x8] sm:$0xff] %v3212
        %3245 = vst [vmem:[%s183 + $0x10] sm:$0xff] %v3213
        %3246 = vst [vmem:[%s183 + $0x18] sm:$0xff] %v3214
        %3247 = vst [vmem:[%s183 + $0x20] sm:$0xff] %v3215
        %3248 = vst [vmem:[%s183 + $0x28] sm:$0xff] %v3216
        %3249 = vst [vmem:[%s183 + $0x30] sm:$0xff] %v3217
        %3250 = vst [vmem:[%s183 + $0x38] sm:$0xff] %v3218
        %3251 = vst [vmem:[%s183 + $0x40] sm:$0xff] %v3219
        %3252 = vst [vmem:[%s183 + $0x48] sm:$0xff] %v3220
        %3253 = vst [vmem:[%s183 + $0x50] sm:$0xff] %v3221
        %3254 = vst [vmem:[%s183 + $0x58] sm:$0xff] %v3222
        %3255 = vst [vmem:[%s183 + $0x60] sm:$0xff] %v3223
        %3256 = vst [vmem:[%s183 + $0x68] sm:$0xff] %v3224
        %3257 = vst [vmem:[%s183 + $0x70] sm:$0xff] %v3225
        %3258 = vst [vmem:[%s183 + $0x78] sm:$0xff] %v3226
        %3259 = vst [vmem:[%s183 + $0x80] sm:$0xff] %v3227
        %3260 = vst [vmem:[%s183 + $0x88] sm:$0xff] %v3228
        %3261 = vst [vmem:[%s183 + $0x90] sm:$0xff] %v3229
        %3262 = vst [vmem:[%s183 + $0x98] sm:$0xff] %v3230
        %3263 = vst [vmem:[%s183 + $0xa0] sm:$0xff] %v3231
        %3264 = vst [vmem:[%s183 + $0xa8] sm:$0xff] %v3232
        %3265 = vst [vmem:[%s183 + $0xb0] sm:$0xff] %v3233
        %3266 = vst [vmem:[%s183 + $0xb8] sm:$0xff] %v3234
        %3267 = vst [vmem:[%s183 + $0xc0] sm:$0xff] %v3235
        %3268 = vst [vmem:[%s183 + $0xc8] sm:$0xff] %v3236
        %3269 = vst [vmem:[%s183 + $0xd0] sm:$0xff] %v3237
        %3270 = vst [vmem:[%s183 + $0xd8] sm:$0xff] %v3238
        %3271 = vst [vmem:[%s183 + $0xe0] sm:$0xff] %v3239
        %3272 = vst [vmem:[%s183 + $0xe8] sm:$0xff] %v3240
        %3273 = vst [vmem:[%s183 + $0xf0] sm:$0xff] %v3241
        %3274 = vst [vmem:[%s183 + $0xf8] sm:$0xff] %v3242
        %s3275 = sadd.s32 %s200, 2
        %s3276 = smul.u32 %s3275, 3
        %s3277 = smul.addr %s3276, 4
        %s3278 = scalar_lea.vmem %s195, %s3277
        %v3279 = vld [vmem:[%s3278] sm:$0xf]
        %v3280 = vld [vmem:[%s3278 + $0x4] sm:$0xf]
        %v3281 = vld [vmem:[%s3278 + $0xc] sm:$0xf]
        %v3282 = vld [vmem:[%s3278 + $0x10] sm:$0xf]
        %v3283 = vld [vmem:[%s3278 + $0x18] sm:$0xf]
        %v3284 = vld [vmem:[%s3278 + $0x1c] sm:$0xf]
        %v3285 = vld [vmem:[%s3278 + $0x24] sm:$0xf]
        %v3286 = vld [vmem:[%s3278 + $0x28] sm:$0xf]
        %v3287 = vld [vmem:[%s3278 + $0x30] sm:$0xf]
        %v3288 = vld [vmem:[%s3278 + $0x34] sm:$0xf]
        %v3289 = vld [vmem:[%s3278 + $0x3c] sm:$0xf]
        %v3290 = vld [vmem:[%s3278 + $0x40] sm:$0xf]
        %v3291 = vld [vmem:[%s3278 + $0x48] sm:$0xf]
        %v3292 = vld [vmem:[%s3278 + $0x4c] sm:$0xf]
        %v3293 = vld [vmem:[%s3278 + $0x54] sm:$0xf]
        %v3294 = vld [vmem:[%s3278 + $0x58] sm:$0xf]
        %v3295 = vld [vmem:[%s3278 + $0x60] sm:$0xf]
        %v3296 = vld [vmem:[%s3278 + $0x64] sm:$0xf]
        %v3297 = vld [vmem:[%s3278 + $0x6c] sm:$0xf]
        %v3298 = vld [vmem:[%s3278 + $0x70] sm:$0xf]
        %v3299 = vld [vmem:[%s3278 + $0x78] sm:$0xf]
        %v3300 = vld [vmem:[%s3278 + $0x7c] sm:$0xf]
        %v3301 = vld [vmem:[%s3278 + $0x84] sm:$0xf]
        %v3302 = vld [vmem:[%s3278 + $0x88] sm:$0xf]
        %v3303 = vld [vmem:[%s3278 + $0x90] sm:$0xf]
        %v3304 = vld [vmem:[%s3278 + $0x94] sm:$0xf]
        %v3305 = vld [vmem:[%s3278 + $0x9c] sm:$0xf]
        %v3306 = vld [vmem:[%s3278 + $0xa0] sm:$0xf]
        %v3307 = vld [vmem:[%s3278 + $0xa8] sm:$0xf]
        %v3308 = vld [vmem:[%s3278 + $0xac] sm:$0xf]
        %v3309 = vld [vmem:[%s3278 + $0xb4] sm:$0xf]
        %v3310 = vld [vmem:[%s3278 + $0xb8] sm:$0xf]
        %s3311 = scalar_lea.vmem %s1, 12
        %v3312 = vld [vmem:[%s3311] sm:$0x3]
        %v3345 = vunpack.c.l.b16 %v3279
        %v3346 = vunpack.c.l.b16 %v3280
        %v3347 = vunpack.c.l.b16 %v3281
        %v3348 = vunpack.c.l.b16 %v3282
        %v3349 = vunpack.c.l.b16 %v3283
        %v3350 = vunpack.c.l.b16 %v3284
        %v3351 = vunpack.c.l.b16 %v3285
        %v3352 = vunpack.c.l.b16 %v3286
        %v3353 = vunpack.c.l.b16 %v3287
        %v3354 = vunpack.c.l.b16 %v3288
        %v3355 = vunpack.c.l.b16 %v3289
        %v3356 = vunpack.c.l.b16 %v3290
        %v3357 = vunpack.c.l.b16 %v3291
        %v3358 = vunpack.c.l.b16 %v3292
        %v3359 = vunpack.c.l.b16 %v3293
        %v3360 = vunpack.c.l.b16 %v3294
        %v3361 = vunpack.c.l.b16 %v3295
        %v3362 = vunpack.c.l.b16 %v3296
        %v3363 = vunpack.c.l.b16 %v3297
        %v3364 = vunpack.c.l.b16 %v3298
        %v3365 = vunpack.c.l.b16 %v3299
        %v3366 = vunpack.c.l.b16 %v3300
        %v3367 = vunpack.c.l.b16 %v3301
        %v3368 = vunpack.c.l.b16 %v3302
        %v3369 = vunpack.c.l.b16 %v3303
        %v3370 = vunpack.c.l.b16 %v3304
        %v3371 = vunpack.c.l.b16 %v3305
        %v3372 = vunpack.c.l.b16 %v3306
        %v3373 = vunpack.c.l.b16 %v3307
        %v3374 = vunpack.c.l.b16 %v3308
        %v3375 = vunpack.c.l.b16 %v3309
        %v3376 = vunpack.c.l.b16 %v3310
        %v3377 = vpack.c.b16 %v3346, %v3345
        %v3378 = vpack.c.b16 %v3348, %v3347
        %v3379 = vpack.c.b16 %v3350, %v3349
        %v3380 = vpack.c.b16 %v3352, %v3351
        %v3381 = vpack.c.b16 %v3354, %v3353
        %v3382 = vpack.c.b16 %v3356, %v3355
        %v3383 = vpack.c.b16 %v3358, %v3357
        %v3384 = vpack.c.b16 %v3360, %v3359
        %v3385 = vpack.c.b16 %v3362, %v3361
        %v3386 = vpack.c.b16 %v3364, %v3363
        %v3387 = vpack.c.b16 %v3366, %v3365
        %v3388 = vpack.c.b16 %v3368, %v3367
        %v3389 = vpack.c.b16 %v3370, %v3369
        %v3390 = vpack.c.b16 %v3372, %v3371
        %v3391 = vpack.c.b16 %v3374, %v3373
        %v3392 = vpack.c.b16 %v3376, %v3375
        %v3394 = vsel %vm317, %v3377, 0
        %v3397 = vsel %vm317, %v3378, 0
        %v3400 = vsel %vm317, %v3379, 0
        %v3403 = vsel %vm317, %v3380, 0
        %v3406 = vsel %vm317, %v3381, 0
        %v3409 = vsel %vm317, %v3382, 0
        %v3412 = vsel %vm317, %v3383, 0
        %v3415 = vsel %vm317, %v3384, 0
        %v3418 = vsel %vm317, %v3385, 0
        %v3421 = vsel %vm317, %v3386, 0
        %v3424 = vsel %vm317, %v3387, 0
        %v3427 = vsel %vm317, %v3388, 0
        %v3430 = vsel %vm317, %v3389, 0
        %v3433 = vsel %vm317, %v3390, 0
        %v3436 = vsel %vm317, %v3391, 0
        %v3439 = vsel %vm317, %v3392, 0
        %v3442 = vsel %vm366, %v3312, 0
        %3444 = vmatpush.bf16.msra.mxu0 0
        %3445 = vmatpush.bf16.msra.mxu0 0
        %3446 = vmatpush.bf16.msra.mxu0 0
        %3447 = vmatpush.bf16.msra.mxu0 0
        %3448 = vmatpush.bf16.msra.mxu0 0
        %3449 = vmatpush.bf16.msra.mxu0 0
        %3450 = vmatpush.bf16.msra.mxu0 0
        %3451 = vmatpush.bf16.msra.mxu0 %v3442
        %3452 = vmatmul.bf16.gmra.mxu0 %v3394
        %v3453 = vpop.f32.mrf.mxu0
        %v3454 = vadd.f32 0.0, %v3453
        %v3455 = vpop.f32.mrf.mxu0
        %v3456 = vadd.f32 0.0, %v3455
        %3457 = vmatmul.bf16.gmra.mxu0 %v3397
        %v3458 = vpop.f32.mrf.mxu0
        %v3459 = vadd.f32 0.0, %v3458
        %v3460 = vpop.f32.mrf.mxu0
        %v3461 = vadd.f32 0.0, %v3460
        %3462 = vmatmul.bf16.gmra.mxu0 %v3400
        %v3463 = vpop.f32.mrf.mxu0
        %v3464 = vadd.f32 0.0, %v3463
        %v3465 = vpop.f32.mrf.mxu0
        %v3466 = vadd.f32 0.0, %v3465
        %3467 = vmatmul.bf16.gmra.mxu0 %v3403
        %v3468 = vpop.f32.mrf.mxu0
        %v3469 = vadd.f32 0.0, %v3468
        %v3470 = vpop.f32.mrf.mxu0
        %v3471 = vadd.f32 0.0, %v3470
        %3472 = vmatmul.bf16.gmra.mxu0 %v3406
        %v3473 = vpop.f32.mrf.mxu0
        %v3474 = vadd.f32 0.0, %v3473
        %v3475 = vpop.f32.mrf.mxu0
        %v3476 = vadd.f32 0.0, %v3475
        %3477 = vmatmul.bf16.gmra.mxu0 %v3409
        %v3478 = vpop.f32.mrf.mxu0
        %v3479 = vadd.f32 0.0, %v3478
        %v3480 = vpop.f32.mrf.mxu0
        %v3481 = vadd.f32 0.0, %v3480
        %3482 = vmatmul.bf16.gmra.mxu0 %v3412
        %v3483 = vpop.f32.mrf.mxu0
        %v3484 = vadd.f32 0.0, %v3483
        %v3485 = vpop.f32.mrf.mxu0
        %v3486 = vadd.f32 0.0, %v3485
        %3487 = vmatmul.bf16.gmra.mxu0 %v3415
        %v3488 = vpop.f32.mrf.mxu0
        %v3489 = vadd.f32 0.0, %v3488
        %v3490 = vpop.f32.mrf.mxu0
        %v3491 = vadd.f32 0.0, %v3490
        %3492 = vmatmul.bf16.gmra.mxu0 %v3418
        %v3493 = vpop.f32.mrf.mxu0
        %v3494 = vadd.f32 0.0, %v3493
        %v3495 = vpop.f32.mrf.mxu0
        %v3496 = vadd.f32 0.0, %v3495
        %3497 = vmatmul.bf16.gmra.mxu0 %v3421
        %v3498 = vpop.f32.mrf.mxu0
        %v3499 = vadd.f32 0.0, %v3498
        %v3500 = vpop.f32.mrf.mxu0
        %v3501 = vadd.f32 0.0, %v3500
        %3502 = vmatmul.bf16.gmra.mxu0 %v3424
        %v3503 = vpop.f32.mrf.mxu0
        %v3504 = vadd.f32 0.0, %v3503
        %v3505 = vpop.f32.mrf.mxu0
        %v3506 = vadd.f32 0.0, %v3505
        %3507 = vmatmul.bf16.gmra.mxu0 %v3427
        %v3508 = vpop.f32.mrf.mxu0
        %v3509 = vadd.f32 0.0, %v3508
        %v3510 = vpop.f32.mrf.mxu0
        %v3511 = vadd.f32 0.0, %v3510
        %3512 = vmatmul.bf16.gmra.mxu0 %v3430
        %v3513 = vpop.f32.mrf.mxu0
        %v3514 = vadd.f32 0.0, %v3513
        %v3515 = vpop.f32.mrf.mxu0
        %v3516 = vadd.f32 0.0, %v3515
        %3517 = vmatmul.bf16.gmra.mxu0 %v3433
        %v3518 = vpop.f32.mrf.mxu0
        %v3519 = vadd.f32 0.0, %v3518
        %v3520 = vpop.f32.mrf.mxu0
        %v3521 = vadd.f32 0.0, %v3520
        %3522 = vmatmul.bf16.gmra.mxu0 %v3436
        %v3523 = vpop.f32.mrf.mxu0
        %v3524 = vadd.f32 0.0, %v3523
        %v3525 = vpop.f32.mrf.mxu0
        %v3526 = vadd.f32 0.0, %v3525
        %3527 = vmatmul.bf16.gmra.mxu0 %v3439
        %v3528 = vpop.f32.mrf.mxu0
        %v3529 = vadd.f32 0.0, %v3528
        %v3530 = vpop.f32.mrf.mxu0
        %v3531 = vadd.f32 0.0, %v3530
        %3532 = vdwg.mxu0
        %v3533 = vld [vmem:[%s183] sm:$0xff]
        %v3534 = vld [vmem:[%s183 + $0x8] sm:$0xff]
        %v3535 = vld [vmem:[%s183 + $0x10] sm:$0xff]
        %v3536 = vld [vmem:[%s183 + $0x18] sm:$0xff]
        %v3537 = vld [vmem:[%s183 + $0x20] sm:$0xff]
        %v3538 = vld [vmem:[%s183 + $0x28] sm:$0xff]
        %v3539 = vld [vmem:[%s183 + $0x30] sm:$0xff]
        %v3540 = vld [vmem:[%s183 + $0x38] sm:$0xff]
        %v3541 = vld [vmem:[%s183 + $0x40] sm:$0xff]
        %v3542 = vld [vmem:[%s183 + $0x48] sm:$0xff]
        %v3543 = vld [vmem:[%s183 + $0x50] sm:$0xff]
        %v3544 = vld [vmem:[%s183 + $0x58] sm:$0xff]
        %v3545 = vld [vmem:[%s183 + $0x60] sm:$0xff]
        %v3546 = vld [vmem:[%s183 + $0x68] sm:$0xff]
        %v3547 = vld [vmem:[%s183 + $0x70] sm:$0xff]
        %v3548 = vld [vmem:[%s183 + $0x78] sm:$0xff]
        %v3549 = vld [vmem:[%s183 + $0x80] sm:$0xff]
        %v3550 = vld [vmem:[%s183 + $0x88] sm:$0xff]
        %v3551 = vld [vmem:[%s183 + $0x90] sm:$0xff]
        %v3552 = vld [vmem:[%s183 + $0x98] sm:$0xff]
        %v3553 = vld [vmem:[%s183 + $0xa0] sm:$0xff]
        %v3554 = vld [vmem:[%s183 + $0xa8] sm:$0xff]
        %v3555 = vld [vmem:[%s183 + $0xb0] sm:$0xff]
        %v3556 = vld [vmem:[%s183 + $0xb8] sm:$0xff]
        %v3557 = vld [vmem:[%s183 + $0xc0] sm:$0xff]
        %v3558 = vld [vmem:[%s183 + $0xc8] sm:$0xff]
        %v3559 = vld [vmem:[%s183 + $0xd0] sm:$0xff]
        %v3560 = vld [vmem:[%s183 + $0xd8] sm:$0xff]
        %v3561 = vld [vmem:[%s183 + $0xe0] sm:$0xff]
        %v3562 = vld [vmem:[%s183 + $0xe8] sm:$0xff]
        %v3563 = vld [vmem:[%s183 + $0xf0] sm:$0xff]
        %v3564 = vld [vmem:[%s183 + $0xf8] sm:$0xff]
        %v3565 = vadd.f32 %v3533, %v3454
        %v3566 = vadd.f32 %v3534, %v3456
        %v3567 = vadd.f32 %v3535, %v3459
        %v3568 = vadd.f32 %v3536, %v3461
        %v3569 = vadd.f32 %v3537, %v3464
        %v3570 = vadd.f32 %v3538, %v3466
        %v3571 = vadd.f32 %v3539, %v3469
        %v3572 = vadd.f32 %v3540, %v3471
        %v3573 = vadd.f32 %v3541, %v3474
        %v3574 = vadd.f32 %v3542, %v3476
        %v3575 = vadd.f32 %v3543, %v3479
        %v3576 = vadd.f32 %v3544, %v3481
        %v3577 = vadd.f32 %v3545, %v3484
        %v3578 = vadd.f32 %v3546, %v3486
        %v3579 = vadd.f32 %v3547, %v3489
        %v3580 = vadd.f32 %v3548, %v3491
        %v3581 = vadd.f32 %v3549, %v3494
        %v3582 = vadd.f32 %v3550, %v3496
        %v3583 = vadd.f32 %v3551, %v3499
        %v3584 = vadd.f32 %v3552, %v3501
        %v3585 = vadd.f32 %v3553, %v3504
        %v3586 = vadd.f32 %v3554, %v3506
        %v3587 = vadd.f32 %v3555, %v3509
        %v3588 = vadd.f32 %v3556, %v3511
        %v3589 = vadd.f32 %v3557, %v3514
        %v3590 = vadd.f32 %v3558, %v3516
        %v3591 = vadd.f32 %v3559, %v3519
        %v3592 = vadd.f32 %v3560, %v3521
        %v3593 = vadd.f32 %v3561, %v3524
        %v3594 = vadd.f32 %v3562, %v3526
        %v3595 = vadd.f32 %v3563, %v3529
        %v3596 = vadd.f32 %v3564, %v3531
        %3597 = vst [vmem:[%s183] sm:$0xff] %v3565
        %3598 = vst [vmem:[%s183 + $0x8] sm:$0xff] %v3566
        %3599 = vst [vmem:[%s183 + $0x10] sm:$0xff] %v3567
        %3600 = vst [vmem:[%s183 + $0x18] sm:$0xff] %v3568
        %3601 = vst [vmem:[%s183 + $0x20] sm:$0xff] %v3569
        %3602 = vst [vmem:[%s183 + $0x28] sm:$0xff] %v3570
        %3603 = vst [vmem:[%s183 + $0x30] sm:$0xff] %v3571
        %3604 = vst [vmem:[%s183 + $0x38] sm:$0xff] %v3572
        %3605 = vst [vmem:[%s183 + $0x40] sm:$0xff] %v3573
        %3606 = vst [vmem:[%s183 + $0x48] sm:$0xff] %v3574
        %3607 = vst [vmem:[%s183 + $0x50] sm:$0xff] %v3575
        %3608 = vst [vmem:[%s183 + $0x58] sm:$0xff] %v3576
        %3609 = vst [vmem:[%s183 + $0x60] sm:$0xff] %v3577
        %3610 = vst [vmem:[%s183 + $0x68] sm:$0xff] %v3578
        %3611 = vst [vmem:[%s183 + $0x70] sm:$0xff] %v3579
        %3612 = vst [vmem:[%s183 + $0x78] sm:$0xff] %v3580
        %3613 = vst [vmem:[%s183 + $0x80] sm:$0xff] %v3581
        %3614 = vst [vmem:[%s183 + $0x88] sm:$0xff] %v3582
        %3615 = vst [vmem:[%s183 + $0x90] sm:$0xff] %v3583
        %3616 = vst [vmem:[%s183 + $0x98] sm:$0xff] %v3584
        %3617 = vst [vmem:[%s183 + $0xa0] sm:$0xff] %v3585
        %3618 = vst [vmem:[%s183 + $0xa8] sm:$0xff] %v3586
        %3619 = vst [vmem:[%s183 + $0xb0] sm:$0xff] %v3587
        %3620 = vst [vmem:[%s183 + $0xb8] sm:$0xff] %v3588
        %3621 = vst [vmem:[%s183 + $0xc0] sm:$0xff] %v3589
        %3622 = vst [vmem:[%s183 + $0xc8] sm:$0xff] %v3590
        %3623 = vst [vmem:[%s183 + $0xd0] sm:$0xff] %v3591
        %3624 = vst [vmem:[%s183 + $0xd8] sm:$0xff] %v3592
        %3625 = vst [vmem:[%s183 + $0xe0] sm:$0xff] %v3593
        %3626 = vst [vmem:[%s183 + $0xe8] sm:$0xff] %v3594
        %3627 = vst [vmem:[%s183 + $0xf0] sm:$0xff] %v3595
        %3628 = vst [vmem:[%s183 + $0xf8] sm:$0xff] %v3596
        %v3629 = vld [vmem:[%s3278] sm:$0xf]
        %v3630 = vld [vmem:[%s3278 + $0x4] sm:$0xf]
        %v3631 = vld [vmem:[%s3278 + $0x8] sm:$0x1]
        %v3632 = vld [vmem:[%s3278 + $0xc] sm:$0xf]
        %v3633 = vld [vmem:[%s3278 + $0x10] sm:$0xf]
        %v3634 = vld [vmem:[%s3278 + $0x14] sm:$0x1]
        %v3635 = vld [vmem:[%s3278 + $0x18] sm:$0xf]
        %v3636 = vld [vmem:[%s3278 + $0x1c] sm:$0xf]
        %v3637 = vld [vmem:[%s3278 + $0x20] sm:$0x1]
        %v3638 = vld [vmem:[%s3278 + $0x24] sm:$0xf]
        %v3639 = vld [vmem:[%s3278 + $0x28] sm:$0xf]
        %v3640 = vld [vmem:[%s3278 + $0x2c] sm:$0x1]
        %v3641 = vld [vmem:[%s3278 + $0x30] sm:$0xf]
        %v3642 = vld [vmem:[%s3278 + $0x34] sm:$0xf]
        %v3643 = vld [vmem:[%s3278 + $0x38] sm:$0x1]
        %v3644 = vld [vmem:[%s3278 + $0x3c] sm:$0xf]
        %v3645 = vld [vmem:[%s3278 + $0x40] sm:$0xf]
        %v3646 = vld [vmem:[%s3278 + $0x44] sm:$0x1]
        %v3647 = vld [vmem:[%s3278 + $0x48] sm:$0xf]
        %v3648 = vld [vmem:[%s3278 + $0x4c] sm:$0xf]
        %v3649 = vld [vmem:[%s3278 + $0x50] sm:$0x1]
        %v3650 = vld [vmem:[%s3278 + $0x54] sm:$0xf]
        %v3651 = vld [vmem:[%s3278 + $0x58] sm:$0xf]
        %v3652 = vld [vmem:[%s3278 + $0x5c] sm:$0x1]
        %v3653 = vld [vmem:[%s3278 + $0x60] sm:$0xf]
        %v3654 = vld [vmem:[%s3278 + $0x64] sm:$0xf]
        %v3655 = vld [vmem:[%s3278 + $0x68] sm:$0x1]
        %v3656 = vld [vmem:[%s3278 + $0x6c] sm:$0xf]
        %v3657 = vld [vmem:[%s3278 + $0x70] sm:$0xf]
        %v3658 = vld [vmem:[%s3278 + $0x74] sm:$0x1]
        %v3659 = vld [vmem:[%s3278 + $0x78] sm:$0xf]
        %v3660 = vld [vmem:[%s3278 + $0x7c] sm:$0xf]
        %v3661 = vld [vmem:[%s3278 + $0x80] sm:$0x1]
        %v3662 = vld [vmem:[%s3278 + $0x84] sm:$0xf]
        %v3663 = vld [vmem:[%s3278 + $0x88] sm:$0xf]
        %v3664 = vld [vmem:[%s3278 + $0x8c] sm:$0x1]
        %v3665 = vld [vmem:[%s3278 + $0x90] sm:$0xf]
        %v3666 = vld [vmem:[%s3278 + $0x94] sm:$0xf]
        %v3667 = vld [vmem:[%s3278 + $0x98] sm:$0x1]
        %v3668 = vld [vmem:[%s3278 + $0x9c] sm:$0xf]
        %v3669 = vld [vmem:[%s3278 + $0xa0] sm:$0xf]
        %v3670 = vld [vmem:[%s3278 + $0xa4] sm:$0x1]
        %v3671 = vld [vmem:[%s3278 + $0xa8] sm:$0xf]
        %v3672 = vld [vmem:[%s3278 + $0xac] sm:$0xf]
        %v3673 = vld [vmem:[%s3278 + $0xb0] sm:$0x1]
        %v3674 = vld [vmem:[%s3278 + $0xb4] sm:$0xf]
        %v3675 = vld [vmem:[%s3278 + $0xb8] sm:$0xf]
        %v3676 = vld [vmem:[%s3278 + $0xbc] sm:$0x1]
        %v3678 = vshrl.u32 %v3629, 16
        %v3680 = vrot.slane %v3678, 4
        %v3681 = vshll.u32 %v3629, 16
        %v3683 = vrot.slane %v3681, 5
        %v3684 = vor.u32 %v3680, %v3683
        %v3685 = vrot.slane %v3684, 4
        %v3687 = vshll.u32 %v3630, 16
        %v3689 = vrot.slane %v3687, 5
        %v3690 = vsel %vm541, %v3685, %v3689
        %v3691 = vshrl.u32 %v3630, 16
        %v3693 = vrot.slane %v3691, 4
        %v3694 = vor.u32 %v3693, %v3689
        %v3695 = vrot.slane %v3694, 4
        %v3697 = vshll.u32 %v3631, 16
        %v3699 = vrot.slane %v3697, 5
        %v3700 = vsel %vm541, %v3695, %v3699
        %v3702 = vshrl.u32 %v3632, 16
        %v3704 = vrot.slane %v3702, 4
        %v3705 = vshll.u32 %v3632, 16
        %v3707 = vrot.slane %v3705, 5
        %v3708 = vor.u32 %v3704, %v3707
        %v3709 = vrot.slane %v3708, 4
        %v3711 = vshll.u32 %v3633, 16
        %v3713 = vrot.slane %v3711, 5
        %v3714 = vsel %vm541, %v3709, %v3713
        %v3715 = vshrl.u32 %v3633, 16
        %v3717 = vrot.slane %v3715, 4
        %v3718 = vor.u32 %v3717, %v3713
        %v3719 = vrot.slane %v3718, 4
        %v3721 = vshll.u32 %v3634, 16
        %v3723 = vrot.slane %v3721, 5
        %v3724 = vsel %vm541, %v3719, %v3723
        %v3726 = vshrl.u32 %v3635, 16
        %v3728 = vrot.slane %v3726, 4
        %v3729 = vshll.u32 %v3635, 16
        %v3731 = vrot.slane %v3729, 5
        %v3732 = vor.u32 %v3728, %v3731
        %v3733 = vrot.slane %v3732, 4
        %v3735 = vshll.u32 %v3636, 16
        %v3737 = vrot.slane %v3735, 5
        %v3738 = vsel %vm541, %v3733, %v3737
        %v3739 = vshrl.u32 %v3636, 16
        %v3741 = vrot.slane %v3739, 4
        %v3742 = vor.u32 %v3741, %v3737
        %v3743 = vrot.slane %v3742, 4
        %v3745 = vshll.u32 %v3637, 16
        %v3747 = vrot.slane %v3745, 5
        %v3748 = vsel %vm541, %v3743, %v3747
        %v3750 = vshrl.u32 %v3638, 16
        %v3752 = vrot.slane %v3750, 4
        %v3753 = vshll.u32 %v3638, 16
        %v3755 = vrot.slane %v3753, 5
        %v3756 = vor.u32 %v3752, %v3755
        %v3757 = vrot.slane %v3756, 4
        %v3759 = vshll.u32 %v3639, 16
        %v3761 = vrot.slane %v3759, 5
        %v3762 = vsel %vm541, %v3757, %v3761
        %v3763 = vshrl.u32 %v3639, 16
        %v3765 = vrot.slane %v3763, 4
        %v3766 = vor.u32 %v3765, %v3761
        %v3767 = vrot.slane %v3766, 4
        %v3769 = vshll.u32 %v3640, 16
        %v3771 = vrot.slane %v3769, 5
        %v3772 = vsel %vm541, %v3767, %v3771
        %v3774 = vshrl.u32 %v3641, 16
        %v3776 = vrot.slane %v3774, 4
        %v3777 = vshll.u32 %v3641, 16
        %v3779 = vrot.slane %v3777, 5
        %v3780 = vor.u32 %v3776, %v3779
        %v3781 = vrot.slane %v3780, 4
        %v3783 = vshll.u32 %v3642, 16
        %v3785 = vrot.slane %v3783, 5
        %v3786 = vsel %vm541, %v3781, %v3785
        %v3787 = vshrl.u32 %v3642, 16
        %v3789 = vrot.slane %v3787, 4
        %v3790 = vor.u32 %v3789, %v3785
        %v3791 = vrot.slane %v3790, 4
        %v3793 = vshll.u32 %v3643, 16
        %v3795 = vrot.slane %v3793, 5
        %v3796 = vsel %vm541, %v3791, %v3795
        %v3798 = vshrl.u32 %v3644, 16
        %v3800 = vrot.slane %v3798, 4
        %v3801 = vshll.u32 %v3644, 16
        %v3803 = vrot.slane %v3801, 5
        %v3804 = vor.u32 %v3800, %v3803
        %v3805 = vrot.slane %v3804, 4
        %v3807 = vshll.u32 %v3645, 16
        %v3809 = vrot.slane %v3807, 5
        %v3810 = vsel %vm541, %v3805, %v3809
        %v3811 = vshrl.u32 %v3645, 16
        %v3813 = vrot.slane %v3811, 4
        %v3814 = vor.u32 %v3813, %v3809
        %v3815 = vrot.slane %v3814, 4
        %v3817 = vshll.u32 %v3646, 16
        %v3819 = vrot.slane %v3817, 5
        %v3820 = vsel %vm541, %v3815, %v3819
        %v3822 = vshrl.u32 %v3647, 16
        %v3824 = vrot.slane %v3822, 4
        %v3825 = vshll.u32 %v3647, 16
        %v3827 = vrot.slane %v3825, 5
        %v3828 = vor.u32 %v3824, %v3827
        %v3829 = vrot.slane %v3828, 4
        %v3831 = vshll.u32 %v3648, 16
        %v3833 = vrot.slane %v3831, 5
        %v3834 = vsel %vm541, %v3829, %v3833
        %v3835 = vshrl.u32 %v3648, 16
        %v3837 = vrot.slane %v3835, 4
        %v3838 = vor.u32 %v3837, %v3833
        %v3839 = vrot.slane %v3838, 4
        %v3841 = vshll.u32 %v3649, 16
        %v3843 = vrot.slane %v3841, 5
        %v3844 = vsel %vm541, %v3839, %v3843
        %v3846 = vshrl.u32 %v3650, 16
        %v3848 = vrot.slane %v3846, 4
        %v3849 = vshll.u32 %v3650, 16
        %v3851 = vrot.slane %v3849, 5
        %v3852 = vor.u32 %v3848, %v3851
        %v3853 = vrot.slane %v3852, 4
        %v3855 = vshll.u32 %v3651, 16
        %v3857 = vrot.slane %v3855, 5
        %v3858 = vsel %vm541, %v3853, %v3857
        %v3859 = vshrl.u32 %v3651, 16
        %v3861 = vrot.slane %v3859, 4
        %v3862 = vor.u32 %v3861, %v3857
        %v3863 = vrot.slane %v3862, 4
        %v3865 = vshll.u32 %v3652, 16
        %v3867 = vrot.slane %v3865, 5
        %v3868 = vsel %vm541, %v3863, %v3867
        %v3870 = vshrl.u32 %v3653, 16
        %v3872 = vrot.slane %v3870, 4
        %v3873 = vshll.u32 %v3653, 16
        %v3875 = vrot.slane %v3873, 5
        %v3876 = vor.u32 %v3872, %v3875
        %v3877 = vrot.slane %v3876, 4
        %v3879 = vshll.u32 %v3654, 16
        %v3881 = vrot.slane %v3879, 5
        %v3882 = vsel %vm541, %v3877, %v3881
        %v3883 = vshrl.u32 %v3654, 16
        %v3885 = vrot.slane %v3883, 4
        %v3886 = vor.u32 %v3885, %v3881
        %v3887 = vrot.slane %v3886, 4
        %v3889 = vshll.u32 %v3655, 16
        %v3891 = vrot.slane %v3889, 5
        %v3892 = vsel %vm541, %v3887, %v3891
        %v3894 = vshrl.u32 %v3656, 16
        %v3896 = vrot.slane %v3894, 4
        %v3897 = vshll.u32 %v3656, 16
        %v3899 = vrot.slane %v3897, 5
        %v3900 = vor.u32 %v3896, %v3899
        %v3901 = vrot.slane %v3900, 4
        %v3903 = vshll.u32 %v3657, 16
        %v3905 = vrot.slane %v3903, 5
        %v3906 = vsel %vm541, %v3901, %v3905
        %v3907 = vshrl.u32 %v3657, 16
        %v3909 = vrot.slane %v3907, 4
        %v3910 = vor.u32 %v3909, %v3905
        %v3911 = vrot.slane %v3910, 4
        %v3913 = vshll.u32 %v3658, 16
        %v3915 = vrot.slane %v3913, 5
        %v3916 = vsel %vm541, %v3911, %v3915
        %v3918 = vshrl.u32 %v3659, 16
        %v3920 = vrot.slane %v3918, 4
        %v3921 = vshll.u32 %v3659, 16
        %v3923 = vrot.slane %v3921, 5
        %v3924 = vor.u32 %v3920, %v3923
        %v3925 = vrot.slane %v3924, 4
        %v3927 = vshll.u32 %v3660, 16
        %v3929 = vrot.slane %v3927, 5
        %v3930 = vsel %vm541, %v3925, %v3929
        %v3931 = vshrl.u32 %v3660, 16
        %v3933 = vrot.slane %v3931, 4
        %v3934 = vor.u32 %v3933, %v3929
        %v3935 = vrot.slane %v3934, 4
        %v3937 = vshll.u32 %v3661, 16
        %v3939 = vrot.slane %v3937, 5
        %v3940 = vsel %vm541, %v3935, %v3939
        %v3942 = vshrl.u32 %v3662, 16
        %v3944 = vrot.slane %v3942, 4
        %v3945 = vshll.u32 %v3662, 16
        %v3947 = vrot.slane %v3945, 5
        %v3948 = vor.u32 %v3944, %v3947
        %v3949 = vrot.slane %v3948, 4
        %v3951 = vshll.u32 %v3663, 16
        %v3953 = vrot.slane %v3951, 5
        %v3954 = vsel %vm541, %v3949, %v3953
        %v3955 = vshrl.u32 %v3663, 16
        %v3957 = vrot.slane %v3955, 4
        %v3958 = vor.u32 %v3957, %v3953
        %v3959 = vrot.slane %v3958, 4
        %v3961 = vshll.u32 %v3664, 16
        %v3963 = vrot.slane %v3961, 5
        %v3964 = vsel %vm541, %v3959, %v3963
        %v3966 = vshrl.u32 %v3665, 16
        %v3968 = vrot.slane %v3966, 4
        %v3969 = vshll.u32 %v3665, 16
        %v3971 = vrot.slane %v3969, 5
        %v3972 = vor.u32 %v3968, %v3971
        %v3973 = vrot.slane %v3972, 4
        %v3975 = vshll.u32 %v3666, 16
        %v3977 = vrot.slane %v3975, 5
        %v3978 = vsel %vm541, %v3973, %v3977
        %v3979 = vshrl.u32 %v3666, 16
        %v3981 = vrot.slane %v3979, 4
        %v3982 = vor.u32 %v3981, %v3977
        %v3983 = vrot.slane %v3982, 4
        %v3985 = vshll.u32 %v3667, 16
        %v3987 = vrot.slane %v3985, 5
        %v3988 = vsel %vm541, %v3983, %v3987
        %v3990 = vshrl.u32 %v3668, 16
        %v3992 = vrot.slane %v3990, 4
        %v3993 = vshll.u32 %v3668, 16
        %v3995 = vrot.slane %v3993, 5
        %v3996 = vor.u32 %v3992, %v3995
        %v3997 = vrot.slane %v3996, 4
        %v3999 = vshll.u32 %v3669, 16
        %v4001 = vrot.slane %v3999, 5
        %v4002 = vsel %vm541, %v3997, %v4001
        %v4003 = vshrl.u32 %v3669, 16
        %v4005 = vrot.slane %v4003, 4
        %v4006 = vor.u32 %v4005, %v4001
        %v4007 = vrot.slane %v4006, 4
        %v4009 = vshll.u32 %v3670, 16
        %v4011 = vrot.slane %v4009, 5
        %v4012 = vsel %vm541, %v4007, %v4011
        %v4014 = vshrl.u32 %v3671, 16
        %v4016 = vrot.slane %v4014, 4
        %v4017 = vshll.u32 %v3671, 16
        %v4019 = vrot.slane %v4017, 5
        %v4020 = vor.u32 %v4016, %v4019
        %v4021 = vrot.slane %v4020, 4
        %v4023 = vshll.u32 %v3672, 16
        %v4025 = vrot.slane %v4023, 5
        %v4026 = vsel %vm541, %v4021, %v4025
        %v4027 = vshrl.u32 %v3672, 16
        %v4029 = vrot.slane %v4027, 4
        %v4030 = vor.u32 %v4029, %v4025
        %v4031 = vrot.slane %v4030, 4
        %v4033 = vshll.u32 %v3673, 16
        %v4035 = vrot.slane %v4033, 5
        %v4036 = vsel %vm541, %v4031, %v4035
        %v4038 = vshrl.u32 %v3674, 16
        %v4040 = vrot.slane %v4038, 4
        %v4041 = vshll.u32 %v3674, 16
        %v4043 = vrot.slane %v4041, 5
        %v4044 = vor.u32 %v4040, %v4043
        %v4045 = vrot.slane %v4044, 4
        %v4047 = vshll.u32 %v3675, 16
        %v4049 = vrot.slane %v4047, 5
        %v4050 = vsel %vm541, %v4045, %v4049
        %v4051 = vshrl.u32 %v3675, 16
        %v4053 = vrot.slane %v4051, 4
        %v4054 = vor.u32 %v4053, %v4049
        %v4055 = vrot.slane %v4054, 4
        %v4057 = vshll.u32 %v3676, 16
        %v4059 = vrot.slane %v4057, 5
        %v4060 = vsel %vm541, %v4055, %v4059
        %s4061 = scalar_lea.vmem %s1, 14
        %v4062 = vld [vmem:[%s4061] sm:$0x3]
        %v4063 = vunpack.c.l.b16 %v3690
        %v4064 = vunpack.c.l.b16 %v3700
        %v4065 = vunpack.c.l.b16 %v3714
        %v4066 = vunpack.c.l.b16 %v3724
        %v4067 = vunpack.c.l.b16 %v3738
        %v4068 = vunpack.c.l.b16 %v3748
        %v4069 = vunpack.c.l.b16 %v3762
        %v4070 = vunpack.c.l.b16 %v3772
        %v4071 = vunpack.c.l.b16 %v3786
        %v4072 = vunpack.c.l.b16 %v3796
        %v4073 = vunpack.c.l.b16 %v3810
        %v4074 = vunpack.c.l.b16 %v3820
        %v4075 = vunpack.c.l.b16 %v3834
        %v4076 = vunpack.c.l.b16 %v3844
        %v4077 = vunpack.c.l.b16 %v3858
        %v4078 = vunpack.c.l.b16 %v3868
        %v4079 = vunpack.c.l.b16 %v3882
        %v4080 = vunpack.c.l.b16 %v3892
        %v4081 = vunpack.c.l.b16 %v3906
        %v4082 = vunpack.c.l.b16 %v3916
        %v4083 = vunpack.c.l.b16 %v3930
        %v4084 = vunpack.c.l.b16 %v3940
        %v4085 = vunpack.c.l.b16 %v3954
        %v4086 = vunpack.c.l.b16 %v3964
        %v4087 = vunpack.c.l.b16 %v3978
        %v4088 = vunpack.c.l.b16 %v3988
        %v4089 = vunpack.c.l.b16 %v4002
        %v4090 = vunpack.c.l.b16 %v4012
        %v4091 = vunpack.c.l.b16 %v4026
        %v4092 = vunpack.c.l.b16 %v4036
        %v4093 = vunpack.c.l.b16 %v4050
        %v4094 = vunpack.c.l.b16 %v4060
        %v4095 = vpack.c.b16 %v4064, %v4063
        %v4096 = vpack.c.b16 %v4066, %v4065
        %v4097 = vpack.c.b16 %v4068, %v4067
        %v4098 = vpack.c.b16 %v4070, %v4069
        %v4099 = vpack.c.b16 %v4072, %v4071
        %v4100 = vpack.c.b16 %v4074, %v4073
        %v4101 = vpack.c.b16 %v4076, %v4075
        %v4102 = vpack.c.b16 %v4078, %v4077
        %v4103 = vpack.c.b16 %v4080, %v4079
        %v4104 = vpack.c.b16 %v4082, %v4081
        %v4105 = vpack.c.b16 %v4084, %v4083
        %v4106 = vpack.c.b16 %v4086, %v4085
        %v4107 = vpack.c.b16 %v4088, %v4087
        %v4108 = vpack.c.b16 %v4090, %v4089
        %v4109 = vpack.c.b16 %v4092, %v4091
        %v4110 = vpack.c.b16 %v4094, %v4093
        %v4112 = vsel %vm317, %v4095, 0
        %v4115 = vsel %vm317, %v4096, 0
        %v4118 = vsel %vm317, %v4097, 0
        %v4121 = vsel %vm317, %v4098, 0
        %v4124 = vsel %vm317, %v4099, 0
        %v4127 = vsel %vm317, %v4100, 0
        %v4130 = vsel %vm317, %v4101, 0
        %v4133 = vsel %vm317, %v4102, 0
        %v4136 = vsel %vm317, %v4103, 0
        %v4139 = vsel %vm317, %v4104, 0
        %v4142 = vsel %vm317, %v4105, 0
        %v4145 = vsel %vm317, %v4106, 0
        %v4148 = vsel %vm317, %v4107, 0
        %v4151 = vsel %vm317, %v4108, 0
        %v4154 = vsel %vm317, %v4109, 0
        %v4157 = vsel %vm317, %v4110, 0
        %v4160 = vsel %vm366, %v4062, 0
        %4162 = vmatpush.bf16.msra.mxu0 0
        %4163 = vmatpush.bf16.msra.mxu0 0
        %4164 = vmatpush.bf16.msra.mxu0 0
        %4165 = vmatpush.bf16.msra.mxu0 0
        %4166 = vmatpush.bf16.msra.mxu0 0
        %4167 = vmatpush.bf16.msra.mxu0 0
        %4168 = vmatpush.bf16.msra.mxu0 0
        %4169 = vmatpush.bf16.msra.mxu0 %v4160
        %4170 = vmatmul.bf16.gmra.mxu0 %v4112
        %v4171 = vpop.f32.mrf.mxu0
        %v4172 = vadd.f32 0.0, %v4171
        %v4173 = vpop.f32.mrf.mxu0
        %v4174 = vadd.f32 0.0, %v4173
        %4175 = vmatmul.bf16.gmra.mxu0 %v4115
        %v4176 = vpop.f32.mrf.mxu0
        %v4177 = vadd.f32 0.0, %v4176
        %v4178 = vpop.f32.mrf.mxu0
        %v4179 = vadd.f32 0.0, %v4178
        %4180 = vmatmul.bf16.gmra.mxu0 %v4118
        %v4181 = vpop.f32.mrf.mxu0
        %v4182 = vadd.f32 0.0, %v4181
        %v4183 = vpop.f32.mrf.mxu0
        %v4184 = vadd.f32 0.0, %v4183
        %4185 = vmatmul.bf16.gmra.mxu0 %v4121
        %v4186 = vpop.f32.mrf.mxu0
        %v4187 = vadd.f32 0.0, %v4186
        %v4188 = vpop.f32.mrf.mxu0
        %v4189 = vadd.f32 0.0, %v4188
        %4190 = vmatmul.bf16.gmra.mxu0 %v4124
        %v4191 = vpop.f32.mrf.mxu0
        %v4192 = vadd.f32 0.0, %v4191
        %v4193 = vpop.f32.mrf.mxu0
        %v4194 = vadd.f32 0.0, %v4193
        %4195 = vmatmul.bf16.gmra.mxu0 %v4127
        %v4196 = vpop.f32.mrf.mxu0
        %v4197 = vadd.f32 0.0, %v4196
        %v4198 = vpop.f32.mrf.mxu0
        %v4199 = vadd.f32 0.0, %v4198
        %4200 = vmatmul.bf16.gmra.mxu0 %v4130
        %v4201 = vpop.f32.mrf.mxu0
        %v4202 = vadd.f32 0.0, %v4201
        %v4203 = vpop.f32.mrf.mxu0
        %v4204 = vadd.f32 0.0, %v4203
        %4205 = vmatmul.bf16.gmra.mxu0 %v4133
        %v4206 = vpop.f32.mrf.mxu0
        %v4207 = vadd.f32 0.0, %v4206
        %v4208 = vpop.f32.mrf.mxu0
        %v4209 = vadd.f32 0.0, %v4208
        %4210 = vmatmul.bf16.gmra.mxu0 %v4136
        %v4211 = vpop.f32.mrf.mxu0
        %v4212 = vadd.f32 0.0, %v4211
        %v4213 = vpop.f32.mrf.mxu0
        %v4214 = vadd.f32 0.0, %v4213
        %4215 = vmatmul.bf16.gmra.mxu0 %v4139
        %v4216 = vpop.f32.mrf.mxu0
        %v4217 = vadd.f32 0.0, %v4216
        %v4218 = vpop.f32.mrf.mxu0
        %v4219 = vadd.f32 0.0, %v4218
        %4220 = vmatmul.bf16.gmra.mxu0 %v4142
        %v4221 = vpop.f32.mrf.mxu0
        %v4222 = vadd.f32 0.0, %v4221
        %v4223 = vpop.f32.mrf.mxu0
        %v4224 = vadd.f32 0.0, %v4223
        %4225 = vmatmul.bf16.gmra.mxu0 %v4145
        %v4226 = vpop.f32.mrf.mxu0
        %v4227 = vadd.f32 0.0, %v4226
        %v4228 = vpop.f32.mrf.mxu0
        %v4229 = vadd.f32 0.0, %v4228
        %4230 = vmatmul.bf16.gmra.mxu0 %v4148
        %v4231 = vpop.f32.mrf.mxu0
        %v4232 = vadd.f32 0.0, %v4231
        %v4233 = vpop.f32.mrf.mxu0
        %v4234 = vadd.f32 0.0, %v4233
        %4235 = vmatmul.bf16.gmra.mxu0 %v4151
        %v4236 = vpop.f32.mrf.mxu0
        %v4237 = vadd.f32 0.0, %v4236
        %v4238 = vpop.f32.mrf.mxu0
        %v4239 = vadd.f32 0.0, %v4238
        %4240 = vmatmul.bf16.gmra.mxu0 %v4154
        %v4241 = vpop.f32.mrf.mxu0
        %v4242 = vadd.f32 0.0, %v4241
        %v4243 = vpop.f32.mrf.mxu0
        %v4244 = vadd.f32 0.0, %v4243
        %4245 = vmatmul.bf16.gmra.mxu0 %v4157
        %v4246 = vpop.f32.mrf.mxu0
        %v4247 = vadd.f32 0.0, %v4246
        %v4248 = vpop.f32.mrf.mxu0
        %v4249 = vadd.f32 0.0, %v4248
        %4250 = vdwg.mxu0
        %v4251 = vld [vmem:[%s183] sm:$0xff]
        %v4252 = vld [vmem:[%s183 + $0x8] sm:$0xff]
        %v4253 = vld [vmem:[%s183 + $0x10] sm:$0xff]
        %v4254 = vld [vmem:[%s183 + $0x18] sm:$0xff]
        %v4255 = vld [vmem:[%s183 + $0x20] sm:$0xff]
        %v4256 = vld [vmem:[%s183 + $0x28] sm:$0xff]
        %v4257 = vld [vmem:[%s183 + $0x30] sm:$0xff]
        %v4258 = vld [vmem:[%s183 + $0x38] sm:$0xff]
        %v4259 = vld [vmem:[%s183 + $0x40] sm:$0xff]
        %v4260 = vld [vmem:[%s183 + $0x48] sm:$0xff]
        %v4261 = vld [vmem:[%s183 + $0x50] sm:$0xff]
        %v4262 = vld [vmem:[%s183 + $0x58] sm:$0xff]
        %v4263 = vld [vmem:[%s183 + $0x60] sm:$0xff]
        %v4264 = vld [vmem:[%s183 + $0x68] sm:$0xff]
        %v4265 = vld [vmem:[%s183 + $0x70] sm:$0xff]
        %v4266 = vld [vmem:[%s183 + $0x78] sm:$0xff]
        %v4267 = vld [vmem:[%s183 + $0x80] sm:$0xff]
        %v4268 = vld [vmem:[%s183 + $0x88] sm:$0xff]
        %v4269 = vld [vmem:[%s183 + $0x90] sm:$0xff]
        %v4270 = vld [vmem:[%s183 + $0x98] sm:$0xff]
        %v4271 = vld [vmem:[%s183 + $0xa0] sm:$0xff]
        %v4272 = vld [vmem:[%s183 + $0xa8] sm:$0xff]
        %v4273 = vld [vmem:[%s183 + $0xb0] sm:$0xff]
        %v4274 = vld [vmem:[%s183 + $0xb8] sm:$0xff]
        %v4275 = vld [vmem:[%s183 + $0xc0] sm:$0xff]
        %v4276 = vld [vmem:[%s183 + $0xc8] sm:$0xff]
        %v4277 = vld [vmem:[%s183 + $0xd0] sm:$0xff]
        %v4278 = vld [vmem:[%s183 + $0xd8] sm:$0xff]
        %v4279 = vld [vmem:[%s183 + $0xe0] sm:$0xff]
        %v4280 = vld [vmem:[%s183 + $0xe8] sm:$0xff]
        %v4281 = vld [vmem:[%s183 + $0xf0] sm:$0xff]
        %v4282 = vld [vmem:[%s183 + $0xf8] sm:$0xff]
        %v4283 = vadd.f32 %v4251, %v4172
        %v4284 = vadd.f32 %v4252, %v4174
        %v4285 = vadd.f32 %v4253, %v4177
        %v4286 = vadd.f32 %v4254, %v4179
        %v4287 = vadd.f32 %v4255, %v4182
        %v4288 = vadd.f32 %v4256, %v4184
        %v4289 = vadd.f32 %v4257, %v4187
        %v4290 = vadd.f32 %v4258, %v4189
        %v4291 = vadd.f32 %v4259, %v4192
        %v4292 = vadd.f32 %v4260, %v4194
        %v4293 = vadd.f32 %v4261, %v4197
        %v4294 = vadd.f32 %v4262, %v4199
        %v4295 = vadd.f32 %v4263, %v4202
        %v4296 = vadd.f32 %v4264, %v4204
        %v4297 = vadd.f32 %v4265, %v4207
        %v4298 = vadd.f32 %v4266, %v4209
        %v4299 = vadd.f32 %v4267, %v4212
        %v4300 = vadd.f32 %v4268, %v4214
        %v4301 = vadd.f32 %v4269, %v4217
        %v4302 = vadd.f32 %v4270, %v4219
        %v4303 = vadd.f32 %v4271, %v4222
        %v4304 = vadd.f32 %v4272, %v4224
        %v4305 = vadd.f32 %v4273, %v4227
        %v4306 = vadd.f32 %v4274, %v4229
        %v4307 = vadd.f32 %v4275, %v4232
        %v4308 = vadd.f32 %v4276, %v4234
        %v4309 = vadd.f32 %v4277, %v4237
        %v4310 = vadd.f32 %v4278, %v4239
        %v4311 = vadd.f32 %v4279, %v4242
        %v4312 = vadd.f32 %v4280, %v4244
        %v4313 = vadd.f32 %v4281, %v4247
        %v4314 = vadd.f32 %v4282, %v4249
        %4315 = vst [vmem:[%s183] sm:$0xff] %v4283
        %4316 = vst [vmem:[%s183 + $0x8] sm:$0xff] %v4284
        %4317 = vst [vmem:[%s183 + $0x10] sm:$0xff] %v4285
        %4318 = vst [vmem:[%s183 + $0x18] sm:$0xff] %v4286
        %4319 = vst [vmem:[%s183 + $0x20] sm:$0xff] %v4287
        %4320 = vst [vmem:[%s183 + $0x28] sm:$0xff] %v4288
        %4321 = vst [vmem:[%s183 + $0x30] sm:$0xff] %v4289
        %4322 = vst [vmem:[%s183 + $0x38] sm:$0xff] %v4290
        %4323 = vst [vmem:[%s183 + $0x40] sm:$0xff] %v4291
        %4324 = vst [vmem:[%s183 + $0x48] sm:$0xff] %v4292
        %4325 = vst [vmem:[%s183 + $0x50] sm:$0xff] %v4293
        %4326 = vst [vmem:[%s183 + $0x58] sm:$0xff] %v4294
        %4327 = vst [vmem:[%s183 + $0x60] sm:$0xff] %v4295
        %4328 = vst [vmem:[%s183 + $0x68] sm:$0xff] %v4296
        %4329 = vst [vmem:[%s183 + $0x70] sm:$0xff] %v4297
        %4330 = vst [vmem:[%s183 + $0x78] sm:$0xff] %v4298
        %4331 = vst [vmem:[%s183 + $0x80] sm:$0xff] %v4299
        %4332 = vst [vmem:[%s183 + $0x88] sm:$0xff] %v4300
        %4333 = vst [vmem:[%s183 + $0x90] sm:$0xff] %v4301
        %4334 = vst [vmem:[%s183 + $0x98] sm:$0xff] %v4302
        %4335 = vst [vmem:[%s183 + $0xa0] sm:$0xff] %v4303
        %4336 = vst [vmem:[%s183 + $0xa8] sm:$0xff] %v4304
        %4337 = vst [vmem:[%s183 + $0xb0] sm:$0xff] %v4305
        %4338 = vst [vmem:[%s183 + $0xb8] sm:$0xff] %v4306
        %4339 = vst [vmem:[%s183 + $0xc0] sm:$0xff] %v4307
        %4340 = vst [vmem:[%s183 + $0xc8] sm:$0xff] %v4308
        %4341 = vst [vmem:[%s183 + $0xd0] sm:$0xff] %v4309
        %4342 = vst [vmem:[%s183 + $0xd8] sm:$0xff] %v4310
        %4343 = vst [vmem:[%s183 + $0xe0] sm:$0xff] %v4311
        %4344 = vst [vmem:[%s183 + $0xe8] sm:$0xff] %v4312
        %4345 = vst [vmem:[%s183 + $0xf0] sm:$0xff] %v4313
        %4346 = vst [vmem:[%s183 + $0xf8] sm:$0xff] %v4314
        %v4347 = vld [vmem:[%s3278] sm:$0xe]
        %v4348 = vld [vmem:[%s3278 + $0x4] sm:$0xf]
        %v4349 = vld [vmem:[%s3278 + $0x8] sm:$0x1]
        %v4350 = vld [vmem:[%s3278 + $0xc] sm:$0xe]
        %v4351 = vld [vmem:[%s3278 + $0x10] sm:$0xf]
        %v4352 = vld [vmem:[%s3278 + $0x14] sm:$0x1]
        %v4353 = vld [vmem:[%s3278 + $0x18] sm:$0xe]
        %v4354 = vld [vmem:[%s3278 + $0x1c] sm:$0xf]
        %v4355 = vld [vmem:[%s3278 + $0x20] sm:$0x1]
        %v4356 = vld [vmem:[%s3278 + $0x24] sm:$0xe]
        %v4357 = vld [vmem:[%s3278 + $0x28] sm:$0xf]
        %v4358 = vld [vmem:[%s3278 + $0x2c] sm:$0x1]
        %v4359 = vld [vmem:[%s3278 + $0x30] sm:$0xe]
        %v4360 = vld [vmem:[%s3278 + $0x34] sm:$0xf]
        %v4361 = vld [vmem:[%s3278 + $0x38] sm:$0x1]
        %v4362 = vld [vmem:[%s3278 + $0x3c] sm:$0xe]
        %v4363 = vld [vmem:[%s3278 + $0x40] sm:$0xf]
        %v4364 = vld [vmem:[%s3278 + $0x44] sm:$0x1]
        %v4365 = vld [vmem:[%s3278 + $0x48] sm:$0xe]
        %v4366 = vld [vmem:[%s3278 + $0x4c] sm:$0xf]
        %v4367 = vld [vmem:[%s3278 + $0x50] sm:$0x1]
        %v4368 = vld [vmem:[%s3278 + $0x54] sm:$0xe]
        %v4369 = vld [vmem:[%s3278 + $0x58] sm:$0xf]
        %v4370 = vld [vmem:[%s3278 + $0x5c] sm:$0x1]
        %v4371 = vld [vmem:[%s3278 + $0x60] sm:$0xe]
        %v4372 = vld [vmem:[%s3278 + $0x64] sm:$0xf]
        %v4373 = vld [vmem:[%s3278 + $0x68] sm:$0x1]
        %v4374 = vld [vmem:[%s3278 + $0x6c] sm:$0xe]
        %v4375 = vld [vmem:[%s3278 + $0x70] sm:$0xf]
        %v4376 = vld [vmem:[%s3278 + $0x74] sm:$0x1]
        %v4377 = vld [vmem:[%s3278 + $0x78] sm:$0xe]
        %v4378 = vld [vmem:[%s3278 + $0x7c] sm:$0xf]
        %v4379 = vld [vmem:[%s3278 + $0x80] sm:$0x1]
        %v4380 = vld [vmem:[%s3278 + $0x84] sm:$0xe]
        %v4381 = vld [vmem:[%s3278 + $0x88] sm:$0xf]
        %v4382 = vld [vmem:[%s3278 + $0x8c] sm:$0x1]
        %v4383 = vld [vmem:[%s3278 + $0x90] sm:$0xe]
        %v4384 = vld [vmem:[%s3278 + $0x94] sm:$0xf]
        %v4385 = vld [vmem:[%s3278 + $0x98] sm:$0x1]
        %v4386 = vld [vmem:[%s3278 + $0x9c] sm:$0xe]
        %v4387 = vld [vmem:[%s3278 + $0xa0] sm:$0xf]
        %v4388 = vld [vmem:[%s3278 + $0xa4] sm:$0x1]
        %v4389 = vld [vmem:[%s3278 + $0xa8] sm:$0xe]
        %v4390 = vld [vmem:[%s3278 + $0xac] sm:$0xf]
        %v4391 = vld [vmem:[%s3278 + $0xb0] sm:$0x1]
        %v4392 = vld [vmem:[%s3278 + $0xb4] sm:$0xe]
        %v4393 = vld [vmem:[%s3278 + $0xb8] sm:$0xf]
        %v4394 = vld [vmem:[%s3278 + $0xbc] sm:$0x1]
        %v4443 = vrot.slane %v4347, 5
        %v4444 = vrot.slane %v4443, 4
        %v4445 = vrot.slane %v4348, 5
        %v4446 = vsel %vm1310, %v4444, %v4445
        %v4447 = vrot.slane %v4445, 4
        %v4448 = vrot.slane %v4349, 5
        %v4449 = vsel %vm1310, %v4447, %v4448
        %v4450 = vrot.slane %v4350, 5
        %v4451 = vrot.slane %v4450, 4
        %v4452 = vrot.slane %v4351, 5
        %v4453 = vsel %vm1310, %v4451, %v4452
        %v4454 = vrot.slane %v4452, 4
        %v4455 = vrot.slane %v4352, 5
        %v4456 = vsel %vm1310, %v4454, %v4455
        %v4457 = vrot.slane %v4353, 5
        %v4458 = vrot.slane %v4457, 4
        %v4459 = vrot.slane %v4354, 5
        %v4460 = vsel %vm1310, %v4458, %v4459
        %v4461 = vrot.slane %v4459, 4
        %v4462 = vrot.slane %v4355, 5
        %v4463 = vsel %vm1310, %v4461, %v4462
        %v4464 = vrot.slane %v4356, 5
        %v4465 = vrot.slane %v4464, 4
        %v4466 = vrot.slane %v4357, 5
        %v4467 = vsel %vm1310, %v4465, %v4466
        %v4468 = vrot.slane %v4466, 4
        %v4469 = vrot.slane %v4358, 5
        %v4470 = vsel %vm1310, %v4468, %v4469
        %v4471 = vrot.slane %v4359, 5
        %v4472 = vrot.slane %v4471, 4
        %v4473 = vrot.slane %v4360, 5
        %v4474 = vsel %vm1310, %v4472, %v4473
        %v4475 = vrot.slane %v4473, 4
        %v4476 = vrot.slane %v4361, 5
        %v4477 = vsel %vm1310, %v4475, %v4476
        %v4478 = vrot.slane %v4362, 5
        %v4479 = vrot.slane %v4478, 4
        %v4480 = vrot.slane %v4363, 5
        %v4481 = vsel %vm1310, %v4479, %v4480
        %v4482 = vrot.slane %v4480, 4
        %v4483 = vrot.slane %v4364, 5
        %v4484 = vsel %vm1310, %v4482, %v4483
        %v4485 = vrot.slane %v4365, 5
        %v4486 = vrot.slane %v4485, 4
        %v4487 = vrot.slane %v4366, 5
        %v4488 = vsel %vm1310, %v4486, %v4487
        %v4489 = vrot.slane %v4487, 4
        %v4490 = vrot.slane %v4367, 5
        %v4491 = vsel %vm1310, %v4489, %v4490
        %v4492 = vrot.slane %v4368, 5
        %v4493 = vrot.slane %v4492, 4
        %v4494 = vrot.slane %v4369, 5
        %v4495 = vsel %vm1310, %v4493, %v4494
        %v4496 = vrot.slane %v4494, 4
        %v4497 = vrot.slane %v4370, 5
        %v4498 = vsel %vm1310, %v4496, %v4497
        %v4499 = vrot.slane %v4371, 5
        %v4500 = vrot.slane %v4499, 4
        %v4501 = vrot.slane %v4372, 5
        %v4502 = vsel %vm1310, %v4500, %v4501
        %v4503 = vrot.slane %v4501, 4
        %v4504 = vrot.slane %v4373, 5
        %v4505 = vsel %vm1310, %v4503, %v4504
        %v4506 = vrot.slane %v4374, 5
        %v4507 = vrot.slane %v4506, 4
        %v4508 = vrot.slane %v4375, 5
        %v4509 = vsel %vm1310, %v4507, %v4508
        %v4510 = vrot.slane %v4508, 4
        %v4511 = vrot.slane %v4376, 5
        %v4512 = vsel %vm1310, %v4510, %v4511
        %v4513 = vrot.slane %v4377, 5
        %v4514 = vrot.slane %v4513, 4
        %v4515 = vrot.slane %v4378, 5
        %v4516 = vsel %vm1310, %v4514, %v4515
        %v4517 = vrot.slane %v4515, 4
        %v4518 = vrot.slane %v4379, 5
        %v4519 = vsel %vm1310, %v4517, %v4518
        %v4520 = vrot.slane %v4380, 5
        %v4521 = vrot.slane %v4520, 4
        %v4522 = vrot.slane %v4381, 5
        %v4523 = vsel %vm1310, %v4521, %v4522
        %v4524 = vrot.slane %v4522, 4
        %v4525 = vrot.slane %v4382, 5
        %v4526 = vsel %vm1310, %v4524, %v4525
        %v4527 = vrot.slane %v4383, 5
        %v4528 = vrot.slane %v4527, 4
        %v4529 = vrot.slane %v4384, 5
        %v4530 = vsel %vm1310, %v4528, %v4529
        %v4531 = vrot.slane %v4529, 4
        %v4532 = vrot.slane %v4385, 5
        %v4533 = vsel %vm1310, %v4531, %v4532
        %v4534 = vrot.slane %v4386, 5
        %v4535 = vrot.slane %v4534, 4
        %v4536 = vrot.slane %v4387, 5
        %v4537 = vsel %vm1310, %v4535, %v4536
        %v4538 = vrot.slane %v4536, 4
        %v4539 = vrot.slane %v4388, 5
        %v4540 = vsel %vm1310, %v4538, %v4539
        %v4541 = vrot.slane %v4389, 5
        %v4542 = vrot.slane %v4541, 4
        %v4543 = vrot.slane %v4390, 5
        %v4544 = vsel %vm1310, %v4542, %v4543
        %v4545 = vrot.slane %v4543, 4
        %v4546 = vrot.slane %v4391, 5
        %v4547 = vsel %vm1310, %v4545, %v4546
        %v4548 = vrot.slane %v4392, 5
        %v4549 = vrot.slane %v4548, 4
        %v4550 = vrot.slane %v4393, 5
        %v4551 = vsel %vm1310, %v4549, %v4550
        %v4552 = vrot.slane %v4550, 4
        %v4553 = vrot.slane %v4394, 5
        %v4554 = vsel %vm1310, %v4552, %v4553
        %s4555 = scalar_lea.vmem %s1, 16
        %v4556 = vld [vmem:[%s4555] sm:$0x3]
        %v4557 = vunpack.c.l.b16 %v4446
        %v4558 = vunpack.c.l.b16 %v4449
        %v4559 = vunpack.c.l.b16 %v4453
        %v4560 = vunpack.c.l.b16 %v4456
        %v4561 = vunpack.c.l.b16 %v4460
        %v4562 = vunpack.c.l.b16 %v4463
        %v4563 = vunpack.c.l.b16 %v4467
        %v4564 = vunpack.c.l.b16 %v4470
        %v4565 = vunpack.c.l.b16 %v4474
        %v4566 = vunpack.c.l.b16 %v4477
        %v4567 = vunpack.c.l.b16 %v4481
        %v4568 = vunpack.c.l.b16 %v4484
        %v4569 = vunpack.c.l.b16 %v4488
        %v4570 = vunpack.c.l.b16 %v4491
        %v4571 = vunpack.c.l.b16 %v4495
        %v4572 = vunpack.c.l.b16 %v4498
        %v4573 = vunpack.c.l.b16 %v4502
        %v4574 = vunpack.c.l.b16 %v4505
        %v4575 = vunpack.c.l.b16 %v4509
        %v4576 = vunpack.c.l.b16 %v4512
        %v4577 = vunpack.c.l.b16 %v4516
        %v4578 = vunpack.c.l.b16 %v4519
        %v4579 = vunpack.c.l.b16 %v4523
        %v4580 = vunpack.c.l.b16 %v4526
        %v4581 = vunpack.c.l.b16 %v4530
        %v4582 = vunpack.c.l.b16 %v4533
        %v4583 = vunpack.c.l.b16 %v4537
        %v4584 = vunpack.c.l.b16 %v4540
        %v4585 = vunpack.c.l.b16 %v4544
        %v4586 = vunpack.c.l.b16 %v4547
        %v4587 = vunpack.c.l.b16 %v4551
        %v4588 = vunpack.c.l.b16 %v4554
        %v4589 = vpack.c.b16 %v4558, %v4557
        %v4590 = vpack.c.b16 %v4560, %v4559
        %v4591 = vpack.c.b16 %v4562, %v4561
        %v4592 = vpack.c.b16 %v4564, %v4563
        %v4593 = vpack.c.b16 %v4566, %v4565
        %v4594 = vpack.c.b16 %v4568, %v4567
        %v4595 = vpack.c.b16 %v4570, %v4569
        %v4596 = vpack.c.b16 %v4572, %v4571
        %v4597 = vpack.c.b16 %v4574, %v4573
        %v4598 = vpack.c.b16 %v4576, %v4575
        %v4599 = vpack.c.b16 %v4578, %v4577
        %v4600 = vpack.c.b16 %v4580, %v4579
        %v4601 = vpack.c.b16 %v4582, %v4581
        %v4602 = vpack.c.b16 %v4584, %v4583
        %v4603 = vpack.c.b16 %v4586, %v4585
        %v4604 = vpack.c.b16 %v4588, %v4587
        %v4606 = vsel %vm317, %v4589, 0
        %v4609 = vsel %vm317, %v4590, 0
        %v4612 = vsel %vm317, %v4591, 0
        %v4615 = vsel %vm317, %v4592, 0
        %v4618 = vsel %vm317, %v4593, 0
        %v4621 = vsel %vm317, %v4594, 0
        %v4624 = vsel %vm317, %v4595, 0
        %v4627 = vsel %vm317, %v4596, 0
        %v4630 = vsel %vm317, %v4597, 0
        %v4633 = vsel %vm317, %v4598, 0
        %v4636 = vsel %vm317, %v4599, 0
        %v4639 = vsel %vm317, %v4600, 0
        %v4642 = vsel %vm317, %v4601, 0
        %v4645 = vsel %vm317, %v4602, 0
        %v4648 = vsel %vm317, %v4603, 0
        %v4651 = vsel %vm317, %v4604, 0
        %v4654 = vsel %vm366, %v4556, 0
        %4656 = vmatpush.bf16.msra.mxu0 0
        %4657 = vmatpush.bf16.msra.mxu0 0
        %4658 = vmatpush.bf16.msra.mxu0 0
        %4659 = vmatpush.bf16.msra.mxu0 0
        %4660 = vmatpush.bf16.msra.mxu0 0
        %4661 = vmatpush.bf16.msra.mxu0 0
        %4662 = vmatpush.bf16.msra.mxu0 0
        %4663 = vmatpush.bf16.msra.mxu0 %v4654
        %4664 = vmatmul.bf16.gmra.mxu0 %v4606
        %v4665 = vpop.f32.mrf.mxu0
        %v4666 = vadd.f32 0.0, %v4665
        %v4667 = vpop.f32.mrf.mxu0
        %v4668 = vadd.f32 0.0, %v4667
        %4669 = vmatmul.bf16.gmra.mxu0 %v4609
        %v4670 = vpop.f32.mrf.mxu0
        %v4671 = vadd.f32 0.0, %v4670
        %v4672 = vpop.f32.mrf.mxu0
        %v4673 = vadd.f32 0.0, %v4672
        %4674 = vmatmul.bf16.gmra.mxu0 %v4612
        %v4675 = vpop.f32.mrf.mxu0
        %v4676 = vadd.f32 0.0, %v4675
        %v4677 = vpop.f32.mrf.mxu0
        %v4678 = vadd.f32 0.0, %v4677
        %4679 = vmatmul.bf16.gmra.mxu0 %v4615
        %v4680 = vpop.f32.mrf.mxu0
        %v4681 = vadd.f32 0.0, %v4680
        %v4682 = vpop.f32.mrf.mxu0
        %v4683 = vadd.f32 0.0, %v4682
        %4684 = vmatmul.bf16.gmra.mxu0 %v4618
        %v4685 = vpop.f32.mrf.mxu0
        %v4686 = vadd.f32 0.0, %v4685
        %v4687 = vpop.f32.mrf.mxu0
        %v4688 = vadd.f32 0.0, %v4687
        %4689 = vmatmul.bf16.gmra.mxu0 %v4621
        %v4690 = vpop.f32.mrf.mxu0
        %v4691 = vadd.f32 0.0, %v4690
        %v4692 = vpop.f32.mrf.mxu0
        %v4693 = vadd.f32 0.0, %v4692
        %4694 = vmatmul.bf16.gmra.mxu0 %v4624
        %v4695 = vpop.f32.mrf.mxu0
        %v4696 = vadd.f32 0.0, %v4695
        %v4697 = vpop.f32.mrf.mxu0
        %v4698 = vadd.f32 0.0, %v4697
        %4699 = vmatmul.bf16.gmra.mxu0 %v4627
        %v4700 = vpop.f32.mrf.mxu0
        %v4701 = vadd.f32 0.0, %v4700
        %v4702 = vpop.f32.mrf.mxu0
        %v4703 = vadd.f32 0.0, %v4702
        %4704 = vmatmul.bf16.gmra.mxu0 %v4630
        %v4705 = vpop.f32.mrf.mxu0
        %v4706 = vadd.f32 0.0, %v4705
        %v4707 = vpop.f32.mrf.mxu0
        %v4708 = vadd.f32 0.0, %v4707
        %4709 = vmatmul.bf16.gmra.mxu0 %v4633
        %v4710 = vpop.f32.mrf.mxu0
        %v4711 = vadd.f32 0.0, %v4710
        %v4712 = vpop.f32.mrf.mxu0
        %v4713 = vadd.f32 0.0, %v4712
        %4714 = vmatmul.bf16.gmra.mxu0 %v4636
        %v4715 = vpop.f32.mrf.mxu0
        %v4716 = vadd.f32 0.0, %v4715
        %v4717 = vpop.f32.mrf.mxu0
        %v4718 = vadd.f32 0.0, %v4717
        %4719 = vmatmul.bf16.gmra.mxu0 %v4639
        %v4720 = vpop.f32.mrf.mxu0
        %v4721 = vadd.f32 0.0, %v4720
        %v4722 = vpop.f32.mrf.mxu0
        %v4723 = vadd.f32 0.0, %v4722
        %4724 = vmatmul.bf16.gmra.mxu0 %v4642
        %v4725 = vpop.f32.mrf.mxu0
        %v4726 = vadd.f32 0.0, %v4725
        %v4727 = vpop.f32.mrf.mxu0
        %v4728 = vadd.f32 0.0, %v4727
        %4729 = vmatmul.bf16.gmra.mxu0 %v4645
        %v4730 = vpop.f32.mrf.mxu0
        %v4731 = vadd.f32 0.0, %v4730
        %v4732 = vpop.f32.mrf.mxu0
        %v4733 = vadd.f32 0.0, %v4732
        %4734 = vmatmul.bf16.gmra.mxu0 %v4648
        %v4735 = vpop.f32.mrf.mxu0
        %v4736 = vadd.f32 0.0, %v4735
        %v4737 = vpop.f32.mrf.mxu0
        %v4738 = vadd.f32 0.0, %v4737
        %4739 = vmatmul.bf16.gmra.mxu0 %v4651
        %v4740 = vpop.f32.mrf.mxu0
        %v4741 = vadd.f32 0.0, %v4740
        %v4742 = vpop.f32.mrf.mxu0
        %v4743 = vadd.f32 0.0, %v4742
        %4744 = vdwg.mxu0
        %v4745 = vld [vmem:[%s183] sm:$0xff]
        %v4746 = vld [vmem:[%s183 + $0x8] sm:$0xff]
        %v4747 = vld [vmem:[%s183 + $0x10] sm:$0xff]
        %v4748 = vld [vmem:[%s183 + $0x18] sm:$0xff]
        %v4749 = vld [vmem:[%s183 + $0x20] sm:$0xff]
        %v4750 = vld [vmem:[%s183 + $0x28] sm:$0xff]
        %v4751 = vld [vmem:[%s183 + $0x30] sm:$0xff]
        %v4752 = vld [vmem:[%s183 + $0x38] sm:$0xff]
        %v4753 = vld [vmem:[%s183 + $0x40] sm:$0xff]
        %v4754 = vld [vmem:[%s183 + $0x48] sm:$0xff]
        %v4755 = vld [vmem:[%s183 + $0x50] sm:$0xff]
        %v4756 = vld [vmem:[%s183 + $0x58] sm:$0xff]
        %v4757 = vld [vmem:[%s183 + $0x60] sm:$0xff]
        %v4758 = vld [vmem:[%s183 + $0x68] sm:$0xff]
        %v4759 = vld [vmem:[%s183 + $0x70] sm:$0xff]
        %v4760 = vld [vmem:[%s183 + $0x78] sm:$0xff]
        %v4761 = vld [vmem:[%s183 + $0x80] sm:$0xff]
        %v4762 = vld [vmem:[%s183 + $0x88] sm:$0xff]
        %v4763 = vld [vmem:[%s183 + $0x90] sm:$0xff]
        %v4764 = vld [vmem:[%s183 + $0x98] sm:$0xff]
        %v4765 = vld [vmem:[%s183 + $0xa0] sm:$0xff]
        %v4766 = vld [vmem:[%s183 + $0xa8] sm:$0xff]
        %v4767 = vld [vmem:[%s183 + $0xb0] sm:$0xff]
        %v4768 = vld [vmem:[%s183 + $0xb8] sm:$0xff]
        %v4769 = vld [vmem:[%s183 + $0xc0] sm:$0xff]
        %v4770 = vld [vmem:[%s183 + $0xc8] sm:$0xff]
        %v4771 = vld [vmem:[%s183 + $0xd0] sm:$0xff]
        %v4772 = vld [vmem:[%s183 + $0xd8] sm:$0xff]
        %v4773 = vld [vmem:[%s183 + $0xe0] sm:$0xff]
        %v4774 = vld [vmem:[%s183 + $0xe8] sm:$0xff]
        %v4775 = vld [vmem:[%s183 + $0xf0] sm:$0xff]
        %v4776 = vld [vmem:[%s183 + $0xf8] sm:$0xff]
        %v4777 = vadd.f32 %v4745, %v4666
        %v4778 = vadd.f32 %v4746, %v4668
        %v4779 = vadd.f32 %v4747, %v4671
        %v4780 = vadd.f32 %v4748, %v4673
        %v4781 = vadd.f32 %v4749, %v4676
        %v4782 = vadd.f32 %v4750, %v4678
        %v4783 = vadd.f32 %v4751, %v4681
        %v4784 = vadd.f32 %v4752, %v4683
        %v4785 = vadd.f32 %v4753, %v4686
        %v4786 = vadd.f32 %v4754, %v4688
        %v4787 = vadd.f32 %v4755, %v4691
        %v4788 = vadd.f32 %v4756, %v4693
        %v4789 = vadd.f32 %v4757, %v4696
        %v4790 = vadd.f32 %v4758, %v4698
        %v4791 = vadd.f32 %v4759, %v4701
        %v4792 = vadd.f32 %v4760, %v4703
        %v4793 = vadd.f32 %v4761, %v4706
        %v4794 = vadd.f32 %v4762, %v4708
        %v4795 = vadd.f32 %v4763, %v4711
        %v4796 = vadd.f32 %v4764, %v4713
        %v4797 = vadd.f32 %v4765, %v4716
        %v4798 = vadd.f32 %v4766, %v4718
        %v4799 = vadd.f32 %v4767, %v4721
        %v4800 = vadd.f32 %v4768, %v4723
        %v4801 = vadd.f32 %v4769, %v4726
        %v4802 = vadd.f32 %v4770, %v4728
        %v4803 = vadd.f32 %v4771, %v4731
        %v4804 = vadd.f32 %v4772, %v4733
        %v4805 = vadd.f32 %v4773, %v4736
        %v4806 = vadd.f32 %v4774, %v4738
        %v4807 = vadd.f32 %v4775, %v4741
        %v4808 = vadd.f32 %v4776, %v4743
        %4809 = vst [vmem:[%s183] sm:$0xff] %v4777
        %4810 = vst [vmem:[%s183 + $0x8] sm:$0xff] %v4778
        %4811 = vst [vmem:[%s183 + $0x10] sm:$0xff] %v4779
        %4812 = vst [vmem:[%s183 + $0x18] sm:$0xff] %v4780
        %4813 = vst [vmem:[%s183 + $0x20] sm:$0xff] %v4781
        %4814 = vst [vmem:[%s183 + $0x28] sm:$0xff] %v4782
        %4815 = vst [vmem:[%s183 + $0x30] sm:$0xff] %v4783
        %4816 = vst [vmem:[%s183 + $0x38] sm:$0xff] %v4784
        %4817 = vst [vmem:[%s183 + $0x40] sm:$0xff] %v4785
        %4818 = vst [vmem:[%s183 + $0x48] sm:$0xff] %v4786
        %4819 = vst [vmem:[%s183 + $0x50] sm:$0xff] %v4787
        %4820 = vst [vmem:[%s183 + $0x58] sm:$0xff] %v4788
        %4821 = vst [vmem:[%s183 + $0x60] sm:$0xff] %v4789
        %4822 = vst [vmem:[%s183 + $0x68] sm:$0xff] %v4790
        %4823 = vst [vmem:[%s183 + $0x70] sm:$0xff] %v4791
        %4824 = vst [vmem:[%s183 + $0x78] sm:$0xff] %v4792
        %4825 = vst [vmem:[%s183 + $0x80] sm:$0xff] %v4793
        %4826 = vst [vmem:[%s183 + $0x88] sm:$0xff] %v4794
        %4827 = vst [vmem:[%s183 + $0x90] sm:$0xff] %v4795
        %4828 = vst [vmem:[%s183 + $0x98] sm:$0xff] %v4796
        %4829 = vst [vmem:[%s183 + $0xa0] sm:$0xff] %v4797
        %4830 = vst [vmem:[%s183 + $0xa8] sm:$0xff] %v4798
        %4831 = vst [vmem:[%s183 + $0xb0] sm:$0xff] %v4799
        %4832 = vst [vmem:[%s183 + $0xb8] sm:$0xff] %v4800
        %4833 = vst [vmem:[%s183 + $0xc0] sm:$0xff] %v4801
        %4834 = vst [vmem:[%s183 + $0xc8] sm:$0xff] %v4802
        %4835 = vst [vmem:[%s183 + $0xd0] sm:$0xff] %v4803
        %4836 = vst [vmem:[%s183 + $0xd8] sm:$0xff] %v4804
        %4837 = vst [vmem:[%s183 + $0xe0] sm:$0xff] %v4805
        %4838 = vst [vmem:[%s183 + $0xe8] sm:$0xff] %v4806
        %4839 = vst [vmem:[%s183 + $0xf0] sm:$0xff] %v4807
        %4840 = vst [vmem:[%s183 + $0xf8] sm:$0xff] %v4808
        %v4841 = vld [vmem:[%s183] sm:$0xff]
        %v4842 = vld [vmem:[%s183 + $0x8] sm:$0xff]
        %v4843 = vld [vmem:[%s183 + $0x10] sm:$0xff]
        %v4844 = vld [vmem:[%s183 + $0x18] sm:$0xff]
        %v4845 = vld [vmem:[%s183 + $0x20] sm:$0xff]
        %v4846 = vld [vmem:[%s183 + $0x28] sm:$0xff]
        %v4847 = vld [vmem:[%s183 + $0x30] sm:$0xff]
        %v4848 = vld [vmem:[%s183 + $0x38] sm:$0xff]
        %v4849 = vld [vmem:[%s183 + $0x40] sm:$0xff]
        %v4850 = vld [vmem:[%s183 + $0x48] sm:$0xff]
        %v4851 = vld [vmem:[%s183 + $0x50] sm:$0xff]
        %v4852 = vld [vmem:[%s183 + $0x58] sm:$0xff]
        %v4853 = vld [vmem:[%s183 + $0x60] sm:$0xff]
        %v4854 = vld [vmem:[%s183 + $0x68] sm:$0xff]
        %v4855 = vld [vmem:[%s183 + $0x70] sm:$0xff]
        %v4856 = vld [vmem:[%s183 + $0x78] sm:$0xff]
        %v4857 = vld [vmem:[%s183 + $0x80] sm:$0xff]
        %v4858 = vld [vmem:[%s183 + $0x88] sm:$0xff]
        %v4859 = vld [vmem:[%s183 + $0x90] sm:$0xff]
        %v4860 = vld [vmem:[%s183 + $0x98] sm:$0xff]
        %v4861 = vld [vmem:[%s183 + $0xa0] sm:$0xff]
        %v4862 = vld [vmem:[%s183 + $0xa8] sm:$0xff]
        %v4863 = vld [vmem:[%s183 + $0xb0] sm:$0xff]
        %v4864 = vld [vmem:[%s183 + $0xb8] sm:$0xff]
        %v4865 = vld [vmem:[%s183 + $0xc0] sm:$0xff]
        %v4866 = vld [vmem:[%s183 + $0xc8] sm:$0xff]
        %v4867 = vld [vmem:[%s183 + $0xd0] sm:$0xff]
        %v4868 = vld [vmem:[%s183 + $0xd8] sm:$0xff]
        %v4869 = vld [vmem:[%s183 + $0xe0] sm:$0xff]
        %v4870 = vld [vmem:[%s183 + $0xe8] sm:$0xff]
        %v4871 = vld [vmem:[%s183 + $0xf0] sm:$0xff]
        %v4872 = vld [vmem:[%s183 + $0xf8] sm:$0xff]
        %v4873 = vadd.f32 %v4841, %v4842
        %v4874 = vadd.f32 %v4873, %v4843
        %v4875 = vadd.f32 %v4874, %v4844
        %v4876 = vadd.f32 %v4875, %v4845
        %v4877 = vadd.f32 %v4876, %v4846
        %v4878 = vadd.f32 %v4877, %v4847
        %v4879 = vadd.f32 %v4878, %v4848
        %v4880 = vadd.f32 %v4879, %v4849
        %v4881 = vadd.f32 %v4880, %v4850
        %v4882 = vadd.f32 %v4881, %v4851
        %v4883 = vadd.f32 %v4882, %v4852
        %v4884 = vadd.f32 %v4883, %v4853
        %v4885 = vadd.f32 %v4884, %v4854
        %v4886 = vadd.f32 %v4885, %v4855
        %v4887 = vadd.f32 %v4886, %v4856
        %v4888 = vadd.f32 %v4887, %v4857
        %v4889 = vadd.f32 %v4888, %v4858
        %v4890 = vadd.f32 %v4889, %v4859
        %v4891 = vadd.f32 %v4890, %v4860
        %v4892 = vadd.f32 %v4891, %v4861
        %v4893 = vadd.f32 %v4892, %v4862
        %v4894 = vadd.f32 %v4893, %v4863
        %v4895 = vadd.f32 %v4894, %v4864
        %v4896 = vadd.f32 %v4895, %v4865
        %v4897 = vadd.f32 %v4896, %v4866
        %v4898 = vadd.f32 %v4897, %v4867
        %v4899 = vadd.f32 %v4898, %v4868
        %v4900 = vadd.f32 %v4899, %v4869
        %v4901 = vadd.f32 %v4900, %v4870
        %v4902 = vadd.f32 %v4901, %v4871
        %v4903 = vadd.f32 %v4902, %v4872
        %v4904 = vrot.slane %v4903, 4
        %v4905 = vadd.f32 %v4903, %v4904
        %v4906 = vrot.slane %v4905, 2
        %v4907 = vadd.f32 %v4905, %v4906
        %v4908 = vrot.slane %v4907, 1
        %v4909 = vadd.f32 %v4907, %v4908
        %4910 = vst [vmem:[%s190] sm:$0x1] %v4909
        %v4911 = vmul.f32 %v4841, %v4841
        %v4912 = vmul.f32 %v4842, %v4842
        %v4913 = vmul.f32 %v4843, %v4843
        %v4914 = vmul.f32 %v4844, %v4844
        %v4915 = vmul.f32 %v4845, %v4845
        %v4916 = vmul.f32 %v4846, %v4846
        %v4917 = vmul.f32 %v4847, %v4847
        %v4918 = vmul.f32 %v4848, %v4848
        %v4919 = vmul.f32 %v4849, %v4849
        %v4920 = vmul.f32 %v4850, %v4850
        %v4921 = vmul.f32 %v4851, %v4851
        %v4922 = vmul.f32 %v4852, %v4852
        %v4923 = vmul.f32 %v4853, %v4853
        %v4924 = vmul.f32 %v4854, %v4854
        %v4925 = vmul.f32 %v4855, %v4855
        %v4926 = vmul.f32 %v4856, %v4856
        %v4927 = vmul.f32 %v4857, %v4857
        %v4928 = vmul.f32 %v4858, %v4858
        %v4929 = vmul.f32 %v4859, %v4859
        %v4930 = vmul.f32 %v4860, %v4860
        %v4931 = vmul.f32 %v4861, %v4861
        %v4932 = vmul.f32 %v4862, %v4862
        %v4933 = vmul.f32 %v4863, %v4863
        %v4934 = vmul.f32 %v4864, %v4864
        %v4935 = vmul.f32 %v4865, %v4865
        %v4936 = vmul.f32 %v4866, %v4866
        %v4937 = vmul.f32 %v4867, %v4867
        %v4938 = vmul.f32 %v4868, %v4868
        %v4939 = vmul.f32 %v4869, %v4869
        %v4940 = vmul.f32 %v4870, %v4870
        %v4941 = vmul.f32 %v4871, %v4871
        %v4942 = vmul.f32 %v4872, %v4872
        %v4943 = vadd.f32 %v4911, %v4912
        %v4944 = vadd.f32 %v4943, %v4913
        %v4945 = vadd.f32 %v4944, %v4914
        %v4946 = vadd.f32 %v4945, %v4915
        %v4947 = vadd.f32 %v4946, %v4916
        %v4948 = vadd.f32 %v4947, %v4917
        %v4949 = vadd.f32 %v4948, %v4918
        %v4950 = vadd.f32 %v4949, %v4919
        %v4951 = vadd.f32 %v4950, %v4920
        %v4952 = vadd.f32 %v4951, %v4921
        %v4953 = vadd.f32 %v4952, %v4922
        %v4954 = vadd.f32 %v4953, %v4923
        %v4955 = vadd.f32 %v4954, %v4924
        %v4956 = vadd.f32 %v4955, %v4925
        %v4957 = vadd.f32 %v4956, %v4926
        %v4958 = vadd.f32 %v4957, %v4927
        %v4959 = vadd.f32 %v4958, %v4928
        %v4960 = vadd.f32 %v4959, %v4929
        %v4961 = vadd.f32 %v4960, %v4930
        %v4962 = vadd.f32 %v4961, %v4931
        %v4963 = vadd.f32 %v4962, %v4932
        %v4964 = vadd.f32 %v4963, %v4933
        %v4965 = vadd.f32 %v4964, %v4934
        %v4966 = vadd.f32 %v4965, %v4935
        %v4967 = vadd.f32 %v4966, %v4936
        %v4968 = vadd.f32 %v4967, %v4937
        %v4969 = vadd.f32 %v4968, %v4938
        %v4970 = vadd.f32 %v4969, %v4939
        %v4971 = vadd.f32 %v4970, %v4940
        %v4972 = vadd.f32 %v4971, %v4941
        %v4973 = vadd.f32 %v4972, %v4942
        %v4974 = vrot.slane %v4973, 4
        %v4975 = vadd.f32 %v4973, %v4974
        %v4976 = vrot.slane %v4975, 2
        %v4977 = vadd.f32 %v4975, %v4976
        %v4978 = vrot.slane %v4977, 1
        %v4979 = vadd.f32 %v4977, %v4978
        %4980 = vst [vmem:[%s190 + $0x1] sm:$0x1] %v4979
        %s4981 = sand.u32 %s90, 1
        %s4982 = scalar_lea.sflag [#allocation3], %s4981
        %s4983 = sand.u32 %s90, 1
        %s4984 = smul.addr %s4983, 256
        %s4985 = scalar_lea.vmem [#allocation2], %s4984
        %s4986 = sand.u32 %s118, 1
        %s4987 = scalar_lea.sflag [#allocation5], %s4986
        %s4988 = sand.u32 %s118, 1
        %s4989 = smul.addr %s4988, 2
        %s4990 = scalar_lea.vmem [#allocation4], %s4989
        // Predicated region
        $region29: #{tpu_custom_call.1} parent=27 // pred_check
          %p4991 = pneg %p100
        $region30: #{tpu_custom_call.1} parent=27 // pred_check_branch
          %4993 = sbr.rel (%p4991) target = $region32
        $region31: #{tpu_custom_call.1} parent=27 // pred_region
          %s4994 = sadd.s32 %s25, %s26
          %s4995 = smul.u32 32, %s4994
          %4997 = vsyncadd %s4982, 0
          %s4998 = smul.addr %s4995, 8
          %s4999 = scalar_lea.hbm %s2, %s4998
          %s5000 = sshll.u32 %s4985, 4
          %s5001 = int_to_ptr.vmem [resolvable:$true] %s5000
          %s5002 = sshll.u32 %s4999, 4
          %s5003 = int_to_ptr.hbm [resolvable:$true] %s5002
          %5008 = dma.vmem_to_hbm [thread:$0]  %s5001, 4096, %s5003, %s4982, 128, 128, 8
        $region32: #{tpu_custom_call.1} parent=27 // pred_fallthru
          _
        // Predicated region
        $region33: #{tpu_custom_call.1} parent=27 // pred_check
          %p5009 = pneg %p128
        $region34: #{tpu_custom_call.1} parent=27 // pred_check_branch
          %5011 = sbr.rel (%p5009) target = $region36
        $region35: #{tpu_custom_call.1} parent=27 // pred_region
          %s5012 = sadd.s32 %s25, %s26
          %5014 = vsyncadd %s4987, 0
          %s5015 = smul.addr %s5012, 2
          %s5016 = scalar_lea.hbm %s3, %s5015
          %s5018 = sshll.u32 %s4990, 4
          %s5019 = int_to_ptr.vmem [resolvable:$true] %s5018
          %s5020 = sshll.u32 %s5016, 4
          %s5021 = int_to_ptr.hbm [resolvable:$true] %s5020
          %5023 = dma.vmem_to_hbm [thread:$0]  %s5019, 32, %s5021, %s4987
        $region36: #{tpu_custom_call.1} parent=27 // pred_fallthru
          _
      $region28: #{tpu_custom_call.1} parent=5 // pred_fallthru
        _
      %p5024 = scmp.le.s32.totalorder 2, %s16
      // Predicated region
      $region37: #{tpu_custom_call.1} parent=5 // pred_check
        %p5025 = pneg %p5024
      $region38: #{tpu_custom_call.1} parent=5 // pred_check_branch
        %5027 = sbr.rel (%p5025) target = $region40
      $region39: #{tpu_custom_call.1} parent=5 // pred_region
        %s5028 = ssub.s32 %s16, 2
        // Predicated region
        $region41: #{tpu_custom_call.1} parent=39 // pred_check
          %p5029 = pneg %p106
        $region42: #{tpu_custom_call.1} parent=39 // pred_check_branch
          %5031 = sbr.rel (%p5029) target = $region44
        $region43: #{tpu_custom_call.1} parent=39 // pred_region
          %s5032 = sand.u32 %s91, 1
          %s5033 = scalar_lea.sflag [#allocation3], %s5032
          %s5034 = sand.u32 %s91, 1
          %s5035 = smul.addr %s5034, 256
          %s5036 = scalar_lea.vmem [#allocation2], %s5035
          %5038 = dma.done %s5033, 4096
        $region44: #{tpu_custom_call.1} parent=39 // pred_fallthru
          _
        // Predicated region
        $region45: #{tpu_custom_call.1} parent=39 // pred_check
          %p5039 = pneg %p134
        $region46: #{tpu_custom_call.1} parent=39 // pred_check_branch
          %5041 = sbr.rel (%p5039) target = $region48
        $region47: #{tpu_custom_call.1} parent=39 // pred_region
          %s5042 = sand.u32 %s119, 1
          %s5043 = scalar_lea.sflag [#allocation5], %s5042
          %s5044 = sand.u32 %s119, 1
          %s5045 = smul.addr %s5044, 2
          %s5046 = scalar_lea.vmem [#allocation4], %s5045
          %5048 = dma.done %s5043, 32
        $region48: #{tpu_custom_call.1} parent=39 // pred_fallthru
          _
      $region40: #{tpu_custom_call.1} parent=5 // pred_fallthru
        _
    $region6: #{tpu_custom_call.1} parent=1 // loop_footer
      %s20 = sadd.s32 1, %s16
    $region7: #{tpu_custom_call.1} parent=1 // loop_footer_branch
      %15 = sbr.rel target = $region3
    $region8: #{tpu_custom_call.1} parent=1 // loop_exit
      _
    %5049 = vsyncpa [#allocation3], 1
    %s5050 = scalar_lea.sflag [#allocation3], 1
    %5051 = vsyncpa %s5050, 1
    %5052 = vsyncpa [#allocation5], 1
    %s5053 = scalar_lea.sflag [#allocation5], 1
    %5054 = vsyncpa %s5053, 1

</llo_original>
